<compile_context>
chip_gen: v6e
topology: v6e:2x2x1
jax: 0.10.0
libtpu: 0.0.40
codegen_flags: <defaults>
</compile_context>

<pallas_src>
import functools

import jax
import jax.numpy as jnp
import numpy as np
from jax.experimental import pallas as pl
from jax.experimental.pallas import tpu as pltpu


# ---------------------------------------------------------------------------
# In-kernel helpers
# ---------------------------------------------------------------------------
def _sigmoid(x):
    # logistic(x) == 0.5 * tanh(0.5 x) + 0.5 : single EUP op instead of exp + divide.
    return 0.5 * jnp.tanh(0.5 * x) + 0.5


# ---------------------------------------------------------------------------
# Host-built constant matrices (pooling / selection); depend only on the batch tile.
# ---------------------------------------------------------------------------
def _pool_rows(channels, size):
    """[channels*size/2, channels*size]: 0.5-banded row-pair averaging (per channel)."""
    half = size // 2
    m = np.zeros((channels * half, channels * size), np.float32)
    for c in range(channels):
        for i in range(half):
            m[c * half + i, c * size + 2 * i] = 0.5
            m[c * half + i, c * size + 2 * i + 1] = 0.5
    return m


def _pool_w1_shifted(bt):
    """[5, bt*32, bt*14]: width 2x-avg-pool of conv1 rows, pre-shifted by conv2's kw."""
    m = np.zeros((5, bt * 32, bt * 14), np.float32)
    for kw in range(5):
        for b in range(bt):
            for j in range(14):
                jj = j + kw
                if jj < 14:
                    m[kw, b * 32 + 2 * jj, b * 14 + j] = 0.5
                    m[kw, b * 32 + 2 * jj + 1, b * 14 + j] = 0.5
    return m


def _pool_w2_select(bt):
    """[5, bt*14, bt]: per-pw width 2x-avg-pool of conv2 rows + batch extraction."""
    m = np.zeros((5, bt * 14, bt), np.float32)
    for pw in range(5):
        for b in range(bt):
            m[pw, b * 14 + 2 * pw, b] = 0.5
            m[pw, b * 14 + 2 * pw + 1, b] = 0.5
    return m


# ---------------------------------------------------------------------------
# The fused LeNet kernel (one batch tile of BT images per grid step)
# ---------------------------------------------------------------------------
def _lenet_kernel(x5_ref, a1_ref, b1c_ref, ph1_ref, pw1_ref, b2m_ref, b2c_ref,
                  ph2_ref, psel_ref, w1p_ref, b1f_ref, w2t_ref, b2f_ref,
                  w3t_ref, b3f_ref, o_ref):
    f32 = jnp.float32

    # conv1 (5x5, pad=2) for all BT images at once: Toeplitz-over-height matmuls
    # against the 5 width-shifted input copies.  Rows = c*28+r, lanes = b*32+w.
    acc1 = jnp.dot(a1_ref[0], x5_ref[0], preferred_element_type=f32)
    for kw in range(1, 5):
        acc1 = acc1 + jnp.dot(a1_ref[kw], x5_ref[kw], preferred_element_type=f32)
    s1 = _sigmoid(acc1 + b1c_ref[...])                                  # [168, bt*32]

    # 2x2 avg-pool: height halving here, width halving folded into pw1 below.
    m1 = jnp.dot(ph1_ref[...], s1, preferred_element_type=f32)          # [84, bt*32]

    # conv2 (5x5, valid): per-kw width-pool+shift then channel/height contraction.
    # Rows = co*10+oh, lanes = b*14+ow (ow<10 valid).
    acc2 = None
    for kw in range(5):
        p1k = jnp.dot(m1, pw1_ref[kw], preferred_element_type=f32)      # [84, bt*14]
        term = jnp.dot(b2m_ref[kw], p1k, preferred_element_type=f32)    # [160, bt*14]
        acc2 = term if acc2 is None else acc2 + term
    s2 = _sigmoid(acc2 + b2c_ref[...])                                  # [160, bt*14]

    # 2x2 avg-pool (height half) of conv2 output.
    t2 = jnp.dot(ph2_ref[...], s2, preferred_element_type=f32)          # [80, bt*14]

    # Width-pool + flatten + fc1.  psel[pw] extracts the pw-th pooled column of every
    # image ([80, bt] chunk); the dv-style dot_general contracts the 80 feature rows
    # and moves the batch from lanes to sublanes.  fc1 columns were pre-permuted on
    # the host to the (pw, co, ph) feature order produced here.
    h = None
    for pw in range(5):
        chunk = jnp.dot(t2, psel_ref[pw], preferred_element_type=f32)   # [80, bt]
        term = jax.lax.dot_general(chunk, w1p_ref[pw],
                                   (((0,), (0,)), ((), ())),
                                   preferred_element_type=f32)          # [bt, 128]
        h = term if h is None else h + term
    h = _sigmoid(h + b1f_ref[...])                                                 # fc1
    h = _sigmoid(jnp.dot(h, w2t_ref[...], preferred_element_type=f32) + b2f_ref[...])  # fc2
    out = jnp.dot(h, w3t_ref[...], preferred_element_type=f32) + b3f_ref[...]          # fc3
    o_ref[...] = out.astype(o_ref.dtype)                                # [bt, Cpad]


# ---------------------------------------------------------------------------
# Wrapper: one pallas_call for the whole network
# ---------------------------------------------------------------------------
def lenet_forward(kp, x, num_classes, block_batch=8):
    """x: [B, 1, 28, 28] -> logits [B, num_classes]."""
    assert x.shape[1:] == (1, 28, 28), x.shape
    bt = block_batch                       # 8 works everywhere; 16 is fine on v6e/v7x
    assert bt % 4 == 0, "batch tile must keep bt*32 a multiple of 128"
    B = x.shape[0]
    bpad = ((B + bt - 1) // bt) * bt
    cpad = kp["w3t"].shape[1]

    xs = x.reshape(B, 28, 28)
    if bpad != B:
        xs = jnp.pad(xs, ((0, bpad - B), (0, 0), (0, 0)))
    # conv1 padding (2 each side) + 4 extra zero columns so the 5 width-shifted copies
    # are plain slices; layout (kw, h, b*32 + w) keeps the lanes batch-dense.
    xq = jnp.pad(xs, ((0, 0), (2, 2), (2, 6)))                          # [bpad, 32, 36]
    x5 = jnp.stack([xq[:, :, kw:kw + 32] for kw in range(5)], axis=0)   # [5, bpad, 32, 32]
    x5 = x5.transpose(0, 2, 1, 3).reshape(5, 32, bpad * 32)             # [5, 32, bpad*32]

    ph1 = jnp.asarray(_pool_rows(6, 28))                                # [84, 168]
    pw1 = jnp.asarray(_pool_w1_shifted(bt))                             # [5, bt*32, bt*14]
    ph2 = jnp.asarray(_pool_rows(16, 10))                               # [80, 160]
    psel = jnp.asarray(_pool_w2_select(bt))                             # [5, bt*14, bt]

    const2 = lambda i: (0, 0)
    const3 = lambda i: (0, 0, 0)
    out = pl.pallas_call(
        _lenet_kernel,
        out_shape=jax.ShapeDtypeStruct((bpad, cpad), jnp.float32),
        grid=(bpad // bt,),
        in_specs=[
            pl.BlockSpec((5, 32, bt * 32), lambda i: (0, 0, i)),   # x5 (batch-tiled)
            pl.BlockSpec((5, 168, 32), const3),                    # conv1 Toeplitz weights
            pl.BlockSpec((168, 1), const2),                        # conv1 bias (per row)
            pl.BlockSpec((84, 168), const2),                       # pool1 height matrix
            pl.BlockSpec((5, bt * 32, bt * 14), const3),           # pool1 width (+kw shift)
            pl.BlockSpec((5, 160, 84), const3),                    # conv2 Toeplitz weights
            pl.BlockSpec((160, 1), const2),                        # conv2 bias (per row)
            pl.BlockSpec((80, 160), const2),                       # pool2 height matrix
            pl.BlockSpec((5, bt * 14, bt), const3),                # pool2 width / batch sel
            pl.BlockSpec((5, 80, 128), const3),                    # fc1 weight (permuted)
            pl.BlockSpec((1, 128), const2),                        # fc1 bias
            pl.BlockSpec((128, 128), const2),                      # fc2 weight
            pl.BlockSpec((1, 128), const2),                        # fc2 bias
            pl.BlockSpec((128, cpad), const2),                     # fc3 weight
            pl.BlockSpec((1, cpad), const2),                       # fc3 bias
        ],
        out_specs=pl.BlockSpec((bt, cpad), lambda i: (i, 0)),      # lane-dense logits slab
        compiler_params=pltpu.CompilerParams(dimension_semantics=("parallel",)),
    )(x5, kp["a1"], kp["b1c"], ph1, pw1, kp["b2m"], kp["b2c"],
      ph2, psel, kp["w1p"], kp["b1f"], kp["w2t"], kp["b2f"], kp["w3t"], kp["b3f"])
    return out[:B, :num_classes]


# ---------------------------------------------------------------------------
# Parameters (torch-convention shapes) + one-time kernel-layout preparation
# ---------------------------------------------------------------------------
def init_params(key, num_classes):
    ks = jax.random.split(key, 10)

    def u(k, shape, fan_in):
        bound = 1.0 / jnp.sqrt(jnp.float32(fan_in))
        return jax.random.uniform(k, shape, jnp.float32, -bound, bound)

    return {
        "c1_w": u(ks[0], (6, 1, 5, 5), 1 * 25),
        "c1_b": u(ks[1], (6,), 1 * 25),
        "c2_w": u(ks[2], (16, 6, 5, 5), 6 * 25),
        "c2_b": u(ks[3], (16,), 6 * 25),
        "f1_w": u(ks[4], (120, 16 * 5 * 5), 16 * 5 * 5),
        "f1_b": u(ks[5], (120,), 16 * 5 * 5),
        "f2_w": u(ks[6], (84, 120), 120),
        "f2_b": u(ks[7], (84,), 120),
        "f3_w": u(ks[8], (num_classes, 84), 84),
        "f3_b": u(ks[9], (num_classes,), 84),
    }


def prepare_params(p, num_classes):
    """One-time re-layout of torch-convention params into kernel-native layouts."""
    w1 = np.asarray(p["c1_w"], np.float32).reshape(6, 5, 5)
    b1 = np.asarray(p["c1_b"], np.float32)
    w2 = np.asarray(p["c2_w"], np.float32)
    b2 = np.asarray(p["c2_b"], np.float32)
    f1w = np.asarray(p["f1_w"], np.float32)
    f2w = np.asarray(p["f2_w"], np.float32)
    f3w = np.asarray(p["f3_w"], np.float32)

    # conv1 as Toeplitz-over-height: a1[kw, c*28+r, h] = w1[c, h-r, kw], 0 <= h-r < 5.
    a1 = np.zeros((5, 6 * 28, 32), np.float32)
    for kw in range(5):
        for c in range(6):
            for r in range(28):
                for kh in range(5):
                    a1[kw, c * 28 + r, r + kh] = w1[c, kh, kw]

    # conv2: b2m[kw, co*10+oh, ci*14+h] = w2[co, ci, h-oh, kw], 0 <= h-oh < 5.
    b2m = np.zeros((5, 16 * 10, 6 * 14), np.float32)
    for kw in range(5):
        for co in range(16):
            for oh in range(10):
                for ci in range(6):
                    for kh in range(5):
                        b2m[kw, co * 10 + oh, ci * 14 + oh + kh] = w2[co, ci, kh, kw]

    # fc1 columns reordered to the kernel's (pw, co, ph) feature order, 128-padded.
    f1p = f1w.reshape(120, 16, 5, 5).transpose(3, 1, 2, 0).reshape(5, 80, 120)
    w1p = np.zeros((5, 80, 128), np.float32)
    w1p[:, :, :120] = f1p

    cpad = ((num_classes + 127) // 128) * 128
    w2t = np.zeros((128, 128), np.float32)
    w2t[:120, :84] = f2w.T
    w3t = np.zeros((128, cpad), np.float32)
    w3t[:84, :num_classes] = f3w.T

    def pad_row(v, n):
        out = np.zeros((1, n), np.float32)
        v = np.asarray(v, np.float32)
        out[0, :v.shape[0]] = v
        return out

    return {
        "a1": jnp.asarray(a1),
        "b1c": jnp.asarray(np.repeat(b1, 28).reshape(168, 1)),
        "b2m": jnp.asarray(b2m),
        "b2c": jnp.asarray(np.repeat(b2, 10).reshape(160, 1)),
        "w1p": jnp.asarray(w1p),
        "b1f": jnp.asarray(pad_row(p["f1_b"], 128)),
        "w2t": jnp.asarray(w2t),
        "b2f": jnp.asarray(pad_row(p["f2_b"], 128)),
        "w3t": jnp.asarray(w3t),
        "b3f": jnp.asarray(pad_row(p["f3_b"], cpad)),
    }


# ---------------------------------------------------------------------------
# Pure-JAX reference (mirrors the PyTorch module) for a correctness self-check
# ---------------------------------------------------------------------------
def _ref_forward(params, x):
    hp = jax.lax.Precision.HIGHEST
    dn = ("NCHW", "OIHW", "NCHW")
    B = x.shape[0]
    h = jax.lax.conv_general_dilated(x, params["c1_w"], (1, 1), ((2, 2), (2, 2)),
                                     dimension_numbers=dn, precision=hp)
    h = jax.nn.sigmoid(h + params["c1_b"].reshape(1, 6, 1, 1))
    h = h.reshape(B, 6, 14, 2, 14, 2).mean(axis=(3, 5))
    h = jax.lax.conv_general_dilated(h, params["c2_w"], (1, 1), "VALID",
                                     dimension_numbers=dn, precision=hp)
    h = jax.nn.sigmoid(h + params["c2_b"].reshape(1, 16, 1, 1))
    h = h.reshape(B, 16, 5, 2, 5, 2).mean(axis=(3, 5))
    h = h.reshape(B, 400)
    h = jax.nn.sigmoid(h @ params["f1_w"].T + params["f1_b"])
    h = jax.nn.sigmoid(h @ params["f2_w"].T + params["f2_b"])
    return h @ params["f3_w"].T + params["f3_b"]


if __name__ == "__main__":
    num_classes = 10
    key = jax.random.PRNGKey(0)
    pkey, xkey = jax.random.split(key)
    params = init_params(pkey, num_classes)
    kparams = prepare_params(params, num_classes)     # weight re-layouts happen once

    x = jax.random.normal(xkey, (2, 1, 28, 28), jnp.float32)

    fwd = jax.jit(functools.partial(lenet_forward, num_classes=num_classes))
    out = jax.block_until_ready(fwd(kparams, x))

    assert out.shape == (2, num_classes), out.shape
    assert bool(jnp.all(jnp.isfinite(out)))

    ref = _ref_forward(params, x)
    err = float(jnp.max(jnp.abs(out - ref)))
    assert err < 1e-2, f"mismatch vs reference: {err}"
    print("KERNEL_OK")
</pallas_src>

<mosaic_0001>
module attributes {stable_mosaic.version = 11 : i64} {
  func.func @_lenet_kernel(%arg0: i32, %arg1: memref<5x32x256xf32, #tpu.memory_space<vmem>>, %arg2: memref<5x168x32xf32, #tpu.memory_space<vmem>>, %arg3: memref<168x1xf32, #tpu.memory_space<vmem>>, %arg4: memref<84x168xf32, #tpu.memory_space<vmem>>, %arg5: memref<5x256x112xf32, #tpu.memory_space<vmem>>, %arg6: memref<5x160x84xf32, #tpu.memory_space<vmem>>, %arg7: memref<160x1xf32, #tpu.memory_space<vmem>>, %arg8: memref<80x160xf32, #tpu.memory_space<vmem>>, %arg9: memref<5x112x8xf32, #tpu.memory_space<vmem>>, %arg10: memref<5x80x128xf32, #tpu.memory_space<vmem>>, %arg11: memref<1x128xf32, #tpu.memory_space<vmem>>, %arg12: memref<128x128xf32, #tpu.memory_space<vmem>>, %arg13: memref<1x128xf32, #tpu.memory_space<vmem>>, %arg14: memref<128x128xf32, #tpu.memory_space<vmem>>, %arg15: memref<1x128xf32, #tpu.memory_space<vmem>>, %arg16: memref<8x128xf32, #tpu.memory_space<vmem>>) attributes {dimension_semantics = [#tpu.dimension_semantics<parallel>], iteration_bounds = array<i64: 1>, scalar_prefetch = 0 : i64, scratch_operands = 0 : i64, tpu.core_type = #tpu.core_type<tc>, window_params = [{transform_indices = @transform_0, window_bounds = array<i64: 5, 32, 256>}, {pipeline_mode = #tpu.pipeline_mode<synchronous>, transform_indices = @transform_1, window_bounds = array<i64: 5, 168, 32>}, {pipeline_mode = #tpu.pipeline_mode<synchronous>, transform_indices = @transform_2, window_bounds = array<i64: 168, 1>}, {pipeline_mode = #tpu.pipeline_mode<synchronous>, transform_indices = @transform_3, window_bounds = array<i64: 84, 168>}, {pipeline_mode = #tpu.pipeline_mode<synchronous>, transform_indices = @transform_4, window_bounds = array<i64: 5, 256, 112>}, {pipeline_mode = #tpu.pipeline_mode<synchronous>, transform_indices = @transform_5, window_bounds = array<i64: 5, 160, 84>}, {pipeline_mode = #tpu.pipeline_mode<synchronous>, transform_indices = @transform_6, window_bounds = array<i64: 160, 1>}, {pipeline_mode = #tpu.pipeline_mode<synchronous>, transform_indices = @transform_7, window_bounds = array<i64: 80, 160>}, {pipeline_mode = #tpu.pipeline_mode<synchronous>, transform_indices = @transform_8, window_bounds = array<i64: 5, 112, 8>}, {pipeline_mode = #tpu.pipeline_mode<synchronous>, transform_indices = @transform_9, window_bounds = array<i64: 5, 80, 128>}, {pipeline_mode = #tpu.pipeline_mode<synchronous>, transform_indices = @transform_10, window_bounds = array<i64: 1, 128>}, {pipeline_mode = #tpu.pipeline_mode<synchronous>, transform_indices = @transform_11, window_bounds = array<i64: 128, 128>}, {pipeline_mode = #tpu.pipeline_mode<synchronous>, transform_indices = @transform_12, window_bounds = array<i64: 1, 128>}, {pipeline_mode = #tpu.pipeline_mode<synchronous>, transform_indices = @transform_13, window_bounds = array<i64: 128, 128>}, {pipeline_mode = #tpu.pipeline_mode<synchronous>, transform_indices = @transform_14, window_bounds = array<i64: 1, 128>}, {transform_indices = @transform_15, window_bounds = array<i64: 8, 128>}]} {
    %c0 = arith.constant 0 : index
    %c0_0 = arith.constant 0 : index
    %c0_1 = arith.constant 0 : index
    %0 = vector.load %arg2[%c0, %c0_0, %c0_1] : memref<5x168x32xf32, #tpu.memory_space<vmem>>, vector<1x168x32xf32>
    %1 = vector.shape_cast %0 : vector<1x168x32xf32> to vector<168x32xf32>
    %c0_2 = arith.constant 0 : index
    %c0_3 = arith.constant 0 : index
    %c0_4 = arith.constant 0 : index
    %2 = vector.load %arg1[%c0_2, %c0_3, %c0_4] : memref<5x32x256xf32, #tpu.memory_space<vmem>>, vector<1x32x256xf32>
    %3 = vector.shape_cast %2 : vector<1x32x256xf32> to vector<32x256xf32>
    %cst = arith.constant dense<0.000000e+00> : vector<168x256xf32>
    %4 = tpu.matmul %1, %3, %cst {dimension_numbers = #tpu.dot_dimension_numbers<[1], [0], [0], [1], [0, 0, 1, 1], [], []>} : vector<168x32xf32>, vector<32x256xf32>, vector<168x256xf32> -> vector<168x256xf32>
    %c1 = arith.constant 1 : index
    %c0_5 = arith.constant 0 : index
    %c0_6 = arith.constant 0 : index
    %5 = vector.load %arg2[%c1, %c0_5, %c0_6] : memref<5x168x32xf32, #tpu.memory_space<vmem>>, vector<1x168x32xf32>
    %6 = vector.shape_cast %5 : vector<1x168x32xf32> to vector<168x32xf32>
    %c1_7 = arith.constant 1 : index
    %c0_8 = arith.constant 0 : index
    %c0_9 = arith.constant 0 : index
    %7 = vector.load %arg1[%c1_7, %c0_8, %c0_9] : memref<5x32x256xf32, #tpu.memory_space<vmem>>, vector<1x32x256xf32>
    %8 = vector.shape_cast %7 : vector<1x32x256xf32> to vector<32x256xf32>
    %cst_10 = arith.constant dense<0.000000e+00> : vector<168x256xf32>
    %9 = tpu.matmul %6, %8, %cst_10 {dimension_numbers = #tpu.dot_dimension_numbers<[1], [0], [0], [1], [0, 0, 1, 1], [], []>} : vector<168x32xf32>, vector<32x256xf32>, vector<168x256xf32> -> vector<168x256xf32>
    %10 = arith.addf %4, %9 : vector<168x256xf32>
    %c2 = arith.constant 2 : index
    %c0_11 = arith.constant 0 : index
    %c0_12 = arith.constant 0 : index
    %11 = vector.load %arg2[%c2, %c0_11, %c0_12] : memref<5x168x32xf32, #tpu.memory_space<vmem>>, vector<1x168x32xf32>
    %12 = vector.shape_cast %11 : vector<1x168x32xf32> to vector<168x32xf32>
    %c2_13 = arith.constant 2 : index
    %c0_14 = arith.constant 0 : index
    %c0_15 = arith.constant 0 : index
    %13 = vector.load %arg1[%c2_13, %c0_14, %c0_15] : memref<5x32x256xf32, #tpu.memory_space<vmem>>, vector<1x32x256xf32>
    %14 = vector.shape_cast %13 : vector<1x32x256xf32> to vector<32x256xf32>
    %cst_16 = arith.constant dense<0.000000e+00> : vector<168x256xf32>
    %15 = tpu.matmul %12, %14, %cst_16 {dimension_numbers = #tpu.dot_dimension_numbers<[1], [0], [0], [1], [0, 0, 1, 1], [], []>} : vector<168x32xf32>, vector<32x256xf32>, vector<168x256xf32> -> vector<168x256xf32>
    %16 = arith.addf %10, %15 : vector<168x256xf32>
    %c3 = arith.constant 3 : index
    %c0_17 = arith.constant 0 : index
    %c0_18 = arith.constant 0 : index
    %17 = vector.load %arg2[%c3, %c0_17, %c0_18] : memref<5x168x32xf32, #tpu.memory_space<vmem>>, vector<1x168x32xf32>
    %18 = vector.shape_cast %17 : vector<1x168x32xf32> to vector<168x32xf32>
    %c3_19 = arith.constant 3 : index
    %c0_20 = arith.constant 0 : index
    %c0_21 = arith.constant 0 : index
    %19 = vector.load %arg1[%c3_19, %c0_20, %c0_21] : memref<5x32x256xf32, #tpu.memory_space<vmem>>, vector<1x32x256xf32>
    %20 = vector.shape_cast %19 : vector<1x32x256xf32> to vector<32x256xf32>
    %cst_22 = arith.constant dense<0.000000e+00> : vector<168x256xf32>
    %21 = tpu.matmul %18, %20, %cst_22 {dimension_numbers = #tpu.dot_dimension_numbers<[1], [0], [0], [1], [0, 0, 1, 1], [], []>} : vector<168x32xf32>, vector<32x256xf32>, vector<168x256xf32> -> vector<168x256xf32>
    %22 = arith.addf %16, %21 : vector<168x256xf32>
    %c4 = arith.constant 4 : index
    %c0_23 = arith.constant 0 : index
    %c0_24 = arith.constant 0 : index
    %23 = vector.load %arg2[%c4, %c0_23, %c0_24] : memref<5x168x32xf32, #tpu.memory_space<vmem>>, vector<1x168x32xf32>
    %24 = vector.shape_cast %23 : vector<1x168x32xf32> to vector<168x32xf32>
    %c4_25 = arith.constant 4 : index
    %c0_26 = arith.constant 0 : index
    %c0_27 = arith.constant 0 : index
    %25 = vector.load %arg1[%c4_25, %c0_26, %c0_27] : memref<5x32x256xf32, #tpu.memory_space<vmem>>, vector<1x32x256xf32>
    %26 = vector.shape_cast %25 : vector<1x32x256xf32> to vector<32x256xf32>
    %cst_28 = arith.constant dense<0.000000e+00> : vector<168x256xf32>
    %27 = tpu.matmul %24, %26, %cst_28 {dimension_numbers = #tpu.dot_dimension_numbers<[1], [0], [0], [1], [0, 0, 1, 1], [], []>} : vector<168x32xf32>, vector<32x256xf32>, vector<168x256xf32> -> vector<168x256xf32>
    %28 = arith.addf %22, %27 : vector<168x256xf32>
    %c0_29 = arith.constant 0 : index
    %c0_30 = arith.constant 0 : index
    %29 = vector.load %arg3[%c0_29, %c0_30] : memref<168x1xf32, #tpu.memory_space<vmem>>, vector<168x1xf32>
    %30 = vector.broadcast %29 : vector<168x1xf32> to vector<168x256xf32>
    %31 = arith.addf %28, %30 : vector<168x256xf32>
    %cst_31 = arith.constant 5.000000e-01 : f32
    %32 = vector.broadcast %cst_31 : f32 to vector<168x256xf32>
    %33 = arith.mulf %32, %31 : vector<168x256xf32>
    %34 = math.tanh %33 : vector<168x256xf32>
    %cst_32 = arith.constant 5.000000e-01 : f32
    %35 = vector.broadcast %cst_32 : f32 to vector<168x256xf32>
    %36 = arith.mulf %35, %34 : vector<168x256xf32>
    %cst_33 = arith.constant 5.000000e-01 : f32
    %37 = vector.broadcast %cst_33 : f32 to vector<168x256xf32>
    %38 = arith.addf %36, %37 : vector<168x256xf32>
    %c0_34 = arith.constant 0 : index
    %c0_35 = arith.constant 0 : index
    %39 = vector.load %arg4[%c0_34, %c0_35] : memref<84x168xf32, #tpu.memory_space<vmem>>, vector<84x168xf32>
    %cst_36 = arith.constant dense<0.000000e+00> : vector<84x256xf32>
    %40 = tpu.matmul %39, %38, %cst_36 {dimension_numbers = #tpu.dot_dimension_numbers<[1], [0], [0], [1], [0, 0, 1, 1], [], []>} : vector<84x168xf32>, vector<168x256xf32>, vector<84x256xf32> -> vector<84x256xf32>
    %c0_37 = arith.constant 0 : index
    %c0_38 = arith.constant 0 : index
    %c0_39 = arith.constant 0 : index
    %41 = vector.load %arg5[%c0_37, %c0_38, %c0_39] : memref<5x256x112xf32, #tpu.memory_space<vmem>>, vector<1x256x112xf32>
    %42 = vector.shape_cast %41 : vector<1x256x112xf32> to vector<256x112xf32>
    %cst_40 = arith.constant dense<0.000000e+00> : vector<84x112xf32>
    %43 = tpu.matmul %40, %42, %cst_40 {dimension_numbers = #tpu.dot_dimension_numbers<[1], [0], [0], [1], [0, 0, 1, 1], [], []>} : vector<84x256xf32>, vector<256x112xf32>, vector<84x112xf32> -> vector<84x112xf32>
    %c0_41 = arith.constant 0 : index
    %c0_42 = arith.constant 0 : index
    %c0_43 = arith.constant 0 : index
    %44 = vector.load %arg6[%c0_41, %c0_42, %c0_43] : memref<5x160x84xf32, #tpu.memory_space<vmem>>, vector<1x160x84xf32>
    %45 = vector.shape_cast %44 : vector<1x160x84xf32> to vector<160x84xf32>
    %cst_44 = arith.constant dense<0.000000e+00> : vector<160x112xf32>
    %46 = tpu.matmul %45, %43, %cst_44 {dimension_numbers = #tpu.dot_dimension_numbers<[1], [0], [0], [1], [0, 0, 1, 1], [], []>} : vector<160x84xf32>, vector<84x112xf32>, vector<160x112xf32> -> vector<160x112xf32>
    %c1_45 = arith.constant 1 : index
    %c0_46 = arith.constant 0 : index
    %c0_47 = arith.constant 0 : index
    %47 = vector.load %arg5[%c1_45, %c0_46, %c0_47] : memref<5x256x112xf32, #tpu.memory_space<vmem>>, vector<1x256x112xf32>
    %48 = vector.shape_cast %47 : vector<1x256x112xf32> to vector<256x112xf32>
    %cst_48 = arith.constant dense<0.000000e+00> : vector<84x112xf32>
    %49 = tpu.matmul %40, %48, %cst_48 {dimension_numbers = #tpu.dot_dimension_numbers<[1], [0], [0], [1], [0, 0, 1, 1], [], []>} : vector<84x256xf32>, vector<256x112xf32>, vector<84x112xf32> -> vector<84x112xf32>
    %c1_49 = arith.constant 1 : index
    %c0_50 = arith.constant 0 : index
    %c0_51 = arith.constant 0 : index
    %50 = vector.load %arg6[%c1_49, %c0_50, %c0_51] : memref<5x160x84xf32, #tpu.memory_space<vmem>>, vector<1x160x84xf32>
    %51 = vector.shape_cast %50 : vector<1x160x84xf32> to vector<160x84xf32>
    %cst_52 = arith.constant dense<0.000000e+00> : vector<160x112xf32>
    %52 = tpu.matmul %51, %49, %cst_52 {dimension_numbers = #tpu.dot_dimension_numbers<[1], [0], [0], [1], [0, 0, 1, 1], [], []>} : vector<160x84xf32>, vector<84x112xf32>, vector<160x112xf32> -> vector<160x112xf32>
    %53 = arith.addf %46, %52 : vector<160x112xf32>
    %c2_53 = arith.constant 2 : index
    %c0_54 = arith.constant 0 : index
    %c0_55 = arith.constant 0 : index
    %54 = vector.load %arg5[%c2_53, %c0_54, %c0_55] : memref<5x256x112xf32, #tpu.memory_space<vmem>>, vector<1x256x112xf32>
    %55 = vector.shape_cast %54 : vector<1x256x112xf32> to vector<256x112xf32>
    %cst_56 = arith.constant dense<0.000000e+00> : vector<84x112xf32>
    %56 = tpu.matmul %40, %55, %cst_56 {dimension_numbers = #tpu.dot_dimension_numbers<[1], [0], [0], [1], [0, 0, 1, 1], [], []>} : vector<84x256xf32>, vector<256x112xf32>, vector<84x112xf32> -> vector<84x112xf32>
    %c2_57 = arith.constant 2 : index
    %c0_58 = arith.constant 0 : index
    %c0_59 = arith.constant 0 : index
    %57 = vector.load %arg6[%c2_57, %c0_58, %c0_59] : memref<5x160x84xf32, #tpu.memory_space<vmem>>, vector<1x160x84xf32>
    %58 = vector.shape_cast %57 : vector<1x160x84xf32> to vector<160x84xf32>
    %cst_60 = arith.constant dense<0.000000e+00> : vector<160x112xf32>
    %59 = tpu.matmul %58, %56, %cst_60 {dimension_numbers = #tpu.dot_dimension_numbers<[1], [0], [0], [1], [0, 0, 1, 1], [], []>} : vector<160x84xf32>, vector<84x112xf32>, vector<160x112xf32> -> vector<160x112xf32>
    %60 = arith.addf %53, %59 : vector<160x112xf32>
    %c3_61 = arith.constant 3 : index
    %c0_62 = arith.constant 0 : index
    %c0_63 = arith.constant 0 : index
    %61 = vector.load %arg5[%c3_61, %c0_62, %c0_63] : memref<5x256x112xf32, #tpu.memory_space<vmem>>, vector<1x256x112xf32>
    %62 = vector.shape_cast %61 : vector<1x256x112xf32> to vector<256x112xf32>
    %cst_64 = arith.constant dense<0.000000e+00> : vector<84x112xf32>
    %63 = tpu.matmul %40, %62, %cst_64 {dimension_numbers = #tpu.dot_dimension_numbers<[1], [0], [0], [1], [0, 0, 1, 1], [], []>} : vector<84x256xf32>, vector<256x112xf32>, vector<84x112xf32> -> vector<84x112xf32>
    %c3_65 = arith.constant 3 : index
    %c0_66 = arith.constant 0 : index
    %c0_67 = arith.constant 0 : index
    %64 = vector.load %arg6[%c3_65, %c0_66, %c0_67] : memref<5x160x84xf32, #tpu.memory_space<vmem>>, vector<1x160x84xf32>
    %65 = vector.shape_cast %64 : vector<1x160x84xf32> to vector<160x84xf32>
    %cst_68 = arith.constant dense<0.000000e+00> : vector<160x112xf32>
    %66 = tpu.matmul %65, %63, %cst_68 {dimension_numbers = #tpu.dot_dimension_numbers<[1], [0], [0], [1], [0, 0, 1, 1], [], []>} : vector<160x84xf32>, vector<84x112xf32>, vector<160x112xf32> -> vector<160x112xf32>
    %67 = arith.addf %60, %66 : vector<160x112xf32>
    %c4_69 = arith.constant 4 : index
    %c0_70 = arith.constant 0 : index
    %c0_71 = arith.constant 0 : index
    %68 = vector.load %arg5[%c4_69, %c0_70, %c0_71] : memref<5x256x112xf32, #tpu.memory_space<vmem>>, vector<1x256x112xf32>
    %69 = vector.shape_cast %68 : vector<1x256x112xf32> to vector<256x112xf32>
    %cst_72 = arith.constant dense<0.000000e+00> : vector<84x112xf32>
    %70 = tpu.matmul %40, %69, %cst_72 {dimension_numbers = #tpu.dot_dimension_numbers<[1], [0], [0], [1], [0, 0, 1, 1], [], []>} : vector<84x256xf32>, vector<256x112xf32>, vector<84x112xf32> -> vector<84x112xf32>
    %c4_73 = arith.constant 4 : index
    %c0_74 = arith.constant 0 : index
    %c0_75 = arith.constant 0 : index
    %71 = vector.load %arg6[%c4_73, %c0_74, %c0_75] : memref<5x160x84xf32, #tpu.memory_space<vmem>>, vector<1x160x84xf32>
    %72 = vector.shape_cast %71 : vector<1x160x84xf32> to vector<160x84xf32>
    %cst_76 = arith.constant dense<0.000000e+00> : vector<160x112xf32>
    %73 = tpu.matmul %72, %70, %cst_76 {dimension_numbers = #tpu.dot_dimension_numbers<[1], [0], [0], [1], [0, 0, 1, 1], [], []>} : vector<160x84xf32>, vector<84x112xf32>, vector<160x112xf32> -> vector<160x112xf32>
    %74 = arith.addf %67, %73 : vector<160x112xf32>
    %c0_77 = arith.constant 0 : index
    %c0_78 = arith.constant 0 : index
    %75 = vector.load %arg7[%c0_77, %c0_78] : memref<160x1xf32, #tpu.memory_space<vmem>>, vector<160x1xf32>
    %76 = vector.broadcast %75 : vector<160x1xf32> to vector<160x112xf32>
    %77 = arith.addf %74, %76 : vector<160x112xf32>
    %cst_79 = arith.constant 5.000000e-01 : f32
    %78 = vector.broadcast %cst_79 : f32 to vector<160x112xf32>
    %79 = arith.mulf %78, %77 : vector<160x112xf32>
    %80 = math.tanh %79 : vector<160x112xf32>
    %cst_80 = arith.constant 5.000000e-01 : f32
    %81 = vector.broadcast %cst_80 : f32 to vector<160x112xf32>
    %82 = arith.mulf %81, %80 : vector<160x112xf32>
    %cst_81 = arith.constant 5.000000e-01 : f32
    %83 = vector.broadcast %cst_81 : f32 to vector<160x112xf32>
    %84 = arith.addf %82, %83 : vector<160x112xf32>
    %c0_82 = arith.constant 0 : index
    %c0_83 = arith.constant 0 : index
    %85 = vector.load %arg8[%c0_82, %c0_83] : memref<80x160xf32, #tpu.memory_space<vmem>>, vector<80x160xf32>
    %cst_84 = arith.constant dense<0.000000e+00> : vector<80x112xf32>
    %86 = tpu.matmul %85, %84, %cst_84 {dimension_numbers = #tpu.dot_dimension_numbers<[1], [0], [0], [1], [0, 0, 1, 1], [], []>} : vector<80x160xf32>, vector<160x112xf32>, vector<80x112xf32> -> vector<80x112xf32>
    %c0_85 = arith.constant 0 : index
    %c0_86 = arith.constant 0 : index
    %c0_87 = arith.constant 0 : index
    %87 = vector.load %arg9[%c0_85, %c0_86, %c0_87] : memref<5x112x8xf32, #tpu.memory_space<vmem>>, vector<1x112x8xf32>
    %88 = vector.shape_cast %87 : vector<1x112x8xf32> to vector<112x8xf32>
    %cst_88 = arith.constant dense<0.000000e+00> : vector<80x8xf32>
    %89 = tpu.matmul %86, %88, %cst_88 {dimension_numbers = #tpu.dot_dimension_numbers<[1], [0], [0], [1], [0, 0, 1, 1], [], []>} : vector<80x112xf32>, vector<112x8xf32>, vector<80x8xf32> -> vector<80x8xf32>
    %c0_89 = arith.constant 0 : index
    %c0_90 = arith.constant 0 : index
    %c0_91 = arith.constant 0 : index
    %90 = vector.load %arg10[%c0_89, %c0_90, %c0_91] : memref<5x80x128xf32, #tpu.memory_space<vmem>>, vector<1x80x128xf32>
    %91 = vector.shape_cast %90 : vector<1x80x128xf32> to vector<80x128xf32>
    %cst_92 = arith.constant dense<0.000000e+00> : vector<8x128xf32>
    %92 = tpu.matmul %89, %91, %cst_92 {dimension_numbers = #tpu.dot_dimension_numbers<[0], [0], [1], [1], [0, 1, 1, 1], [], []>} : vector<80x8xf32>, vector<80x128xf32>, vector<8x128xf32> -> vector<8x128xf32>
    %c1_93 = arith.constant 1 : index
    %c0_94 = arith.constant 0 : index
    %c0_95 = arith.constant 0 : index
    %93 = vector.load %arg9[%c1_93, %c0_94, %c0_95] : memref<5x112x8xf32, #tpu.memory_space<vmem>>, vector<1x112x8xf32>
    %94 = vector.shape_cast %93 : vector<1x112x8xf32> to vector<112x8xf32>
    %cst_96 = arith.constant dense<0.000000e+00> : vector<80x8xf32>
    %95 = tpu.matmul %86, %94, %cst_96 {dimension_numbers = #tpu.dot_dimension_numbers<[1], [0], [0], [1], [0, 0, 1, 1], [], []>} : vector<80x112xf32>, vector<112x8xf32>, vector<80x8xf32> -> vector<80x8xf32>
    %c1_97 = arith.constant 1 : index
    %c0_98 = arith.constant 0 : index
    %c0_99 = arith.constant 0 : index
    %96 = vector.load %arg10[%c1_97, %c0_98, %c0_99] : memref<5x80x128xf32, #tpu.memory_space<vmem>>, vector<1x80x128xf32>
    %97 = vector.shape_cast %96 : vector<1x80x128xf32> to vector<80x128xf32>
    %cst_100 = arith.constant dense<0.000000e+00> : vector<8x128xf32>
    %98 = tpu.matmul %95, %97, %cst_100 {dimension_numbers = #tpu.dot_dimension_numbers<[0], [0], [1], [1], [0, 1, 1, 1], [], []>} : vector<80x8xf32>, vector<80x128xf32>, vector<8x128xf32> -> vector<8x128xf32>
    %99 = arith.addf %92, %98 : vector<8x128xf32>
    %c2_101 = arith.constant 2 : index
    %c0_102 = arith.constant 0 : index
    %c0_103 = arith.constant 0 : index
    %100 = vector.load %arg9[%c2_101, %c0_102, %c0_103] : memref<5x112x8xf32, #tpu.memory_space<vmem>>, vector<1x112x8xf32>
    %101 = vector.shape_cast %100 : vector<1x112x8xf32> to vector<112x8xf32>
    %cst_104 = arith.constant dense<0.000000e+00> : vector<80x8xf32>
    %102 = tpu.matmul %86, %101, %cst_104 {dimension_numbers = #tpu.dot_dimension_numbers<[1], [0], [0], [1], [0, 0, 1, 1], [], []>} : vector<80x112xf32>, vector<112x8xf32>, vector<80x8xf32> -> vector<80x8xf32>
    %c2_105 = arith.constant 2 : index
    %c0_106 = arith.constant 0 : index
    %c0_107 = arith.constant 0 : index
    %103 = vector.load %arg10[%c2_105, %c0_106, %c0_107] : memref<5x80x128xf32, #tpu.memory_space<vmem>>, vector<1x80x128xf32>
    %104 = vector.shape_cast %103 : vector<1x80x128xf32> to vector<80x128xf32>
    %cst_108 = arith.constant dense<0.000000e+00> : vector<8x128xf32>
    %105 = tpu.matmul %102, %104, %cst_108 {dimension_numbers = #tpu.dot_dimension_numbers<[0], [0], [1], [1], [0, 1, 1, 1], [], []>} : vector<80x8xf32>, vector<80x128xf32>, vector<8x128xf32> -> vector<8x128xf32>
    %106 = arith.addf %99, %105 : vector<8x128xf32>
    %c3_109 = arith.constant 3 : index
    %c0_110 = arith.constant 0 : index
    %c0_111 = arith.constant 0 : index
    %107 = vector.load %arg9[%c3_109, %c0_110, %c0_111] : memref<5x112x8xf32, #tpu.memory_space<vmem>>, vector<1x112x8xf32>
    %108 = vector.shape_cast %107 : vector<1x112x8xf32> to vector<112x8xf32>
    %cst_112 = arith.constant dense<0.000000e+00> : vector<80x8xf32>
    %109 = tpu.matmul %86, %108, %cst_112 {dimension_numbers = #tpu.dot_dimension_numbers<[1], [0], [0], [1], [0, 0, 1, 1], [], []>} : vector<80x112xf32>, vector<112x8xf32>, vector<80x8xf32> -> vector<80x8xf32>
    %c3_113 = arith.constant 3 : index
    %c0_114 = arith.constant 0 : index
    %c0_115 = arith.constant 0 : index
    %110 = vector.load %arg10[%c3_113, %c0_114, %c0_115] : memref<5x80x128xf32, #tpu.memory_space<vmem>>, vector<1x80x128xf32>
    %111 = vector.shape_cast %110 : vector<1x80x128xf32> to vector<80x128xf32>
    %cst_116 = arith.constant dense<0.000000e+00> : vector<8x128xf32>
    %112 = tpu.matmul %109, %111, %cst_116 {dimension_numbers = #tpu.dot_dimension_numbers<[0], [0], [1], [1], [0, 1, 1, 1], [], []>} : vector<80x8xf32>, vector<80x128xf32>, vector<8x128xf32> -> vector<8x128xf32>
    %113 = arith.addf %106, %112 : vector<8x128xf32>
    %c4_117 = arith.constant 4 : index
    %c0_118 = arith.constant 0 : index
    %c0_119 = arith.constant 0 : index
    %114 = vector.load %arg9[%c4_117, %c0_118, %c0_119] : memref<5x112x8xf32, #tpu.memory_space<vmem>>, vector<1x112x8xf32>
    %115 = vector.shape_cast %114 : vector<1x112x8xf32> to vector<112x8xf32>
    %cst_120 = arith.constant dense<0.000000e+00> : vector<80x8xf32>
    %116 = tpu.matmul %86, %115, %cst_120 {dimension_numbers = #tpu.dot_dimension_numbers<[1], [0], [0], [1], [0, 0, 1, 1], [], []>} : vector<80x112xf32>, vector<112x8xf32>, vector<80x8xf32> -> vector<80x8xf32>
    %c4_121 = arith.constant 4 : index
    %c0_122 = arith.constant 0 : index
    %c0_123 = arith.constant 0 : index
    %117 = vector.load %arg10[%c4_121, %c0_122, %c0_123] : memref<5x80x128xf32, #tpu.memory_space<vmem>>, vector<1x80x128xf32>
    %118 = vector.shape_cast %117 : vector<1x80x128xf32> to vector<80x128xf32>
    %cst_124 = arith.constant dense<0.000000e+00> : vector<8x128xf32>
    %119 = tpu.matmul %116, %118, %cst_124 {dimension_numbers = #tpu.dot_dimension_numbers<[0], [0], [1], [1], [0, 1, 1, 1], [], []>} : vector<80x8xf32>, vector<80x128xf32>, vector<8x128xf32> -> vector<8x128xf32>
    %120 = arith.addf %113, %119 : vector<8x128xf32>
    %c0_125 = arith.constant 0 : index
    %c0_126 = arith.constant 0 : index
    %121 = vector.load %arg11[%c0_125, %c0_126] : memref<1x128xf32, #tpu.memory_space<vmem>>, vector<1x128xf32>
    %122 = vector.broadcast %121 : vector<1x128xf32> to vector<8x128xf32>
    %123 = arith.addf %120, %122 : vector<8x128xf32>
    %cst_127 = arith.constant 5.000000e-01 : f32
    %124 = vector.broadcast %cst_127 : f32 to vector<8x128xf32>
    %125 = arith.mulf %124, %123 : vector<8x128xf32>
    %126 = math.tanh %125 : vector<8x128xf32>
    %cst_128 = arith.constant 5.000000e-01 : f32
    %127 = vector.broadcast %cst_128 : f32 to vector<8x128xf32>
    %128 = arith.mulf %127, %126 : vector<8x128xf32>
    %cst_129 = arith.constant 5.000000e-01 : f32
    %129 = vector.broadcast %cst_129 : f32 to vector<8x128xf32>
    %130 = arith.addf %128, %129 : vector<8x128xf32>
    %c0_130 = arith.constant 0 : index
    %c0_131 = arith.constant 0 : index
    %131 = vector.load %arg12[%c0_130, %c0_131] : memref<128x128xf32, #tpu.memory_space<vmem>>, vector<128x128xf32>
    %cst_132 = arith.constant dense<0.000000e+00> : vector<8x128xf32>
    %132 = tpu.matmul %130, %131, %cst_132 {dimension_numbers = #tpu.dot_dimension_numbers<[1], [0], [0], [1], [0, 0, 1, 1], [], []>} : vector<8x128xf32>, vector<128x128xf32>, vector<8x128xf32> -> vector<8x128xf32>
    %c0_133 = arith.constant 0 : index
    %c0_134 = arith.constant 0 : index
    %133 = vector.load %arg13[%c0_133, %c0_134] : memref<1x128xf32, #tpu.memory_space<vmem>>, vector<1x128xf32>
    %134 = vector.broadcast %133 : vector<1x128xf32> to vector<8x128xf32>
    %135 = arith.addf %132, %134 : vector<8x128xf32>
    %cst_135 = arith.constant 5.000000e-01 : f32
    %136 = vector.broadcast %cst_135 : f32 to vector<8x128xf32>
    %137 = arith.mulf %136, %135 : vector<8x128xf32>
    %138 = math.tanh %137 : vector<8x128xf32>
    %cst_136 = arith.constant 5.000000e-01 : f32
    %139 = vector.broadcast %cst_136 : f32 to vector<8x128xf32>
    %140 = arith.mulf %139, %138 : vector<8x128xf32>
    %cst_137 = arith.constant 5.000000e-01 : f32
    %141 = vector.broadcast %cst_137 : f32 to vector<8x128xf32>
    %142 = arith.addf %140, %141 : vector<8x128xf32>
    %c0_138 = arith.constant 0 : index
    %c0_139 = arith.constant 0 : index
    %143 = vector.load %arg14[%c0_138, %c0_139] : memref<128x128xf32, #tpu.memory_space<vmem>>, vector<128x128xf32>
    %cst_140 = arith.constant dense<0.000000e+00> : vector<8x128xf32>
    %144 = tpu.matmul %142, %143, %cst_140 {dimension_numbers = #tpu.dot_dimension_numbers<[1], [0], [0], [1], [0, 0, 1, 1], [], []>} : vector<8x128xf32>, vector<128x128xf32>, vector<8x128xf32> -> vector<8x128xf32>
    %c0_141 = arith.constant 0 : index
    %c0_142 = arith.constant 0 : index
    %145 = vector.load %arg15[%c0_141, %c0_142] : memref<1x128xf32, #tpu.memory_space<vmem>>, vector<1x128xf32>
    %146 = vector.broadcast %145 : vector<1x128xf32> to vector<8x128xf32>
    %147 = arith.addf %144, %146 : vector<8x128xf32>
    %c0_143 = arith.constant 0 : index
    %c0_144 = arith.constant 0 : index
    %148 = vector.load %arg16[%c0_143, %c0_144] : memref<8x128xf32, #tpu.memory_space<vmem>>, vector<8x128xf32>
    tpu.vector_store %arg16[%c0_143, %c0_144], %147 {strides = array<i32>} : memref<8x128xf32, #tpu.memory_space<vmem>>, vector<8x128xf32>,
    return
  }
  func.func @transform_0(%arg0: i32) -> (i32, i32, i32) {
    %c0_i32 = arith.constant 0 : i32
    %c0_i32_0 = arith.constant 0 : i32
    %c0_i32_1 = arith.constant 0 : i32
    return %c0_i32, %c0_i32_0, %arg0 : i32, i32, i32
  }
  func.func @transform_1(%arg0: i32) -> (i32, i32, i32) {
    %c0_i32 = arith.constant 0 : i32
    %c0_i32_0 = arith.constant 0 : i32
    %c0_i32_1 = arith.constant 0 : i32
    %c0_i32_2 = arith.constant 0 : i32
    return %c0_i32, %c0_i32_0, %c0_i32_1 : i32, i32, i32
  }
  func.func @transform_2(%arg0: i32) -> (i32, i32) {
    %c0_i32 = arith.constant 0 : i32
    %c0_i32_0 = arith.constant 0 : i32
    %c0_i32_1 = arith.constant 0 : i32
    return %c0_i32, %c0_i32_0 : i32, i32
  }
  func.func @transform_3(%arg0: i32) -> (i32, i32) {
    %c0_i32 = arith.constant 0 : i32
    %c0_i32_0 = arith.constant 0 : i32
    %c0_i32_1 = arith.constant 0 : i32
    return %c0_i32, %c0_i32_0 : i32, i32
  }
  func.func @transform_4(%arg0: i32) -> (i32, i32, i32) {
    %c0_i32 = arith.constant 0 : i32
    %c0_i32_0 = arith.constant 0 : i32
    %c0_i32_1 = arith.constant 0 : i32
    %c0_i32_2 = arith.constant 0 : i32
    return %c0_i32, %c0_i32_0, %c0_i32_1 : i32, i32, i32
  }
  func.func @transform_5(%arg0: i32) -> (i32, i32, i32) {
    %c0_i32 = arith.constant 0 : i32
    %c0_i32_0 = arith.constant 0 : i32
    %c0_i32_1 = arith.constant 0 : i32
    %c0_i32_2 = arith.constant 0 : i32
    return %c0_i32, %c0_i32_0, %c0_i32_1 : i32, i32, i32
  }
  func.func @transform_6(%arg0: i32) -> (i32, i32) {
    %c0_i32 = arith.constant 0 : i32
    %c0_i32_0 = arith.constant 0 : i32
    %c0_i32_1 = arith.constant 0 : i32
    return %c0_i32, %c0_i32_0 : i32, i32
  }
  func.func @transform_7(%arg0: i32) -> (i32, i32) {
    %c0_i32 = arith.constant 0 : i32
    %c0_i32_0 = arith.constant 0 : i32
    %c0_i32_1 = arith.constant 0 : i32
    return %c0_i32, %c0_i32_0 : i32, i32
  }
  func.func @transform_8(%arg0: i32) -> (i32, i32, i32) {
    %c0_i32 = arith.constant 0 : i32
    %c0_i32_0 = arith.constant 0 : i32
    %c0_i32_1 = arith.constant 0 : i32
    %c0_i32_2 = arith.constant 0 : i32
    return %c0_i32, %c0_i32_0, %c0_i32_1 : i32, i32, i32
  }
  func.func @transform_9(%arg0: i32) -> (i32, i32, i32) {
    %c0_i32 = arith.constant 0 : i32
    %c0_i32_0 = arith.constant 0 : i32
    %c0_i32_1 = arith.constant 0 : i32
    %c0_i32_2 = arith.constant 0 : i32
    return %c0_i32, %c0_i32_0, %c0_i32_1 : i32, i32, i32
  }
  func.func @transform_10(%arg0: i32) -> (i32, i32) {
    %c0_i32 = arith.constant 0 : i32
    %c0_i32_0 = arith.constant 0 : i32
    %c0_i32_1 = arith.constant 0 : i32
    return %c0_i32, %c0_i32_0 : i32, i32
  }
  func.func @transform_11(%arg0: i32) -> (i32, i32) {
    %c0_i32 = arith.constant 0 : i32
    %c0_i32_0 = arith.constant 0 : i32
    %c0_i32_1 = arith.constant 0 : i32
    return %c0_i32, %c0_i32_0 : i32, i32
  }
  func.func @transform_12(%arg0: i32) -> (i32, i32) {
    %c0_i32 = arith.constant 0 : i32
    %c0_i32_0 = arith.constant 0 : i32
    %c0_i32_1 = arith.constant 0 : i32
    return %c0_i32, %c0_i32_0 : i32, i32
  }
  func.func @transform_13(%arg0: i32) -> (i32, i32) {
    %c0_i32 = arith.constant 0 : i32
    %c0_i32_0 = arith.constant 0 : i32
    %c0_i32_1 = arith.constant 0 : i32
    return %c0_i32, %c0_i32_0 : i32, i32
  }
  func.func @transform_14(%arg0: i32) -> (i32, i32) {
    %c0_i32 = arith.constant 0 : i32
    %c0_i32_0 = arith.constant 0 : i32
    %c0_i32_1 = arith.constant 0 : i32
    return %c0_i32, %c0_i32_0 : i32, i32
  }
  func.func @transform_15(%arg0: i32) -> (i32, i32) {
    %c0_i32 = arith.constant 0 : i32
    %c0_i32_0 = arith.constant 0 : i32
    return %arg0, %c0_i32 : i32, i32
  }
}

</mosaic_0001>

<llo_original>
// kernel: lenet_forward.1
$region0: #{lenet_forward.1}
  #allocation0 [shape = 'u32[]', space=smem, size = 0x4, offset = 0x4, fixed_abs, tag = 'smem constant byte address 0x4 - core index']
  #allocation1 [shape = 'u32[144,128]{1,0:T(1,128)}', space=vmem, size = 0x12000, scoped, tag = 'internal scratch']
  %s0 = inlined_call_operand.vmem [shape: f32[5,32,256], index: 0, kind: input, shape index: {}]
  %s1 = inlined_call_operand.vmem [shape: f32[5,168,32], index: 1, kind: input, shape index: {}]
  %s2 = inlined_call_operand.vmem [shape: f32[168,1], index: 2, kind: input, shape index: {}]
  %s3 = inlined_call_operand.vmem [shape: f32[84,168], index: 3, kind: input, shape index: {}]
  %s4 = inlined_call_operand.vmem [shape: f32[5,256,112], index: 4, kind: input, shape index: {}]
  %s5 = inlined_call_operand.vmem [shape: f32[5,160,84], index: 5, kind: input, shape index: {}]
  %s6 = inlined_call_operand.vmem [shape: f32[160,1], index: 6, kind: input, shape index: {}]
  %s7 = inlined_call_operand.vmem [shape: f32[80,160], index: 7, kind: input, shape index: {}]
  %s8 = inlined_call_operand.vmem [shape: f32[5,112,8], index: 8, kind: input, shape index: {}]
  %s9 = inlined_call_operand.vmem [shape: f32[5,80,128], index: 9, kind: input, shape index: {}]
  %s10 = inlined_call_operand.vmem [shape: f32[1,128], index: 10, kind: input, shape index: {}]
  %s11 = inlined_call_operand.vmem [shape: f32[128,128], index: 11, kind: input, shape index: {}]
  %s12 = inlined_call_operand.vmem [shape: f32[1,128], index: 12, kind: input, shape index: {}]
  %s13 = inlined_call_operand.vmem [shape: f32[128,128], index: 13, kind: input, shape index: {}]
  %s14 = inlined_call_operand.vmem [shape: f32[1,128], index: 14, kind: input, shape index: {}]
  %s15 = inlined_call_operand.vmem [shape: f32[8,128], index: 15, kind: output, shape index: {}]
  %s16 = sld [smem:[#allocation0]]
  $region70: #{lenet_forward.1} parent=0
    _
  %s18 = ssub.s32 1, %s16
  %s19 = scalar_select 0, %s18, %s16
  // Predicated region
  $region2: #{lenet_forward.1} parent=0 // pred_check
    _
  $region3: #{lenet_forward.1} parent=0 // pred_check_branch
    %21 = sbr.rel (0) target = $region5
  $region4: #{lenet_forward.1} parent=0 // pred_region
    _
  $region5: #{lenet_forward.1} parent=0 // pred_fallthru
    _
  // Predicated region
  $region6: #{lenet_forward.1} parent=0 // pred_check
    _
  $region7: #{lenet_forward.1} parent=0 // pred_check_branch
    %23 = sbr.rel (0) target = $region9
  $region8: #{lenet_forward.1} parent=0 // pred_region
    _
  $region9: #{lenet_forward.1} parent=0 // pred_fallthru
    _
  // Predicated region
  $region10: #{lenet_forward.1} parent=0 // pred_check
    _
  $region11: #{lenet_forward.1} parent=0 // pred_check_branch
    %25 = sbr.rel (0) target = $region13
  $region12: #{lenet_forward.1} parent=0 // pred_region
    _
  $region13: #{lenet_forward.1} parent=0 // pred_fallthru
    _
  // Predicated region
  $region14: #{lenet_forward.1} parent=0 // pred_check
    _
  $region15: #{lenet_forward.1} parent=0 // pred_check_branch
    %27 = sbr.rel (0) target = $region17
  $region16: #{lenet_forward.1} parent=0 // pred_region
    _
  $region17: #{lenet_forward.1} parent=0 // pred_fallthru
    _
  // Predicated region
  $region18: #{lenet_forward.1} parent=0 // pred_check
    _
  $region19: #{lenet_forward.1} parent=0 // pred_check_branch
    %29 = sbr.rel (0) target = $region21
  $region20: #{lenet_forward.1} parent=0 // pred_region
    _
  $region21: #{lenet_forward.1} parent=0 // pred_fallthru
    _
  // Predicated region
  $region22: #{lenet_forward.1} parent=0 // pred_check
    _
  $region23: #{lenet_forward.1} parent=0 // pred_check_branch
    %31 = sbr.rel (0) target = $region25
  $region24: #{lenet_forward.1} parent=0 // pred_region
    _
  $region25: #{lenet_forward.1} parent=0 // pred_fallthru
    _
  // Predicated region
  $region26: #{lenet_forward.1} parent=0 // pred_check
    _
  $region27: #{lenet_forward.1} parent=0 // pred_check_branch
    %33 = sbr.rel (0) target = $region29
  $region28: #{lenet_forward.1} parent=0 // pred_region
    _
  $region29: #{lenet_forward.1} parent=0 // pred_fallthru
    _
  // Predicated region
  $region30: #{lenet_forward.1} parent=0 // pred_check
    _
  $region31: #{lenet_forward.1} parent=0 // pred_check_branch
    %35 = sbr.rel (0) target = $region33
  $region32: #{lenet_forward.1} parent=0 // pred_region
    _
  $region33: #{lenet_forward.1} parent=0 // pred_fallthru
    _
  // Predicated region
  $region34: #{lenet_forward.1} parent=0 // pred_check
    _
  $region35: #{lenet_forward.1} parent=0 // pred_check_branch
    %37 = sbr.rel (0) target = $region37
  $region36: #{lenet_forward.1} parent=0 // pred_region
    _
  $region37: #{lenet_forward.1} parent=0 // pred_fallthru
    _
  // Predicated region
  $region38: #{lenet_forward.1} parent=0 // pred_check
    _
  $region39: #{lenet_forward.1} parent=0 // pred_check_branch
    %39 = sbr.rel (0) target = $region41
  $region40: #{lenet_forward.1} parent=0 // pred_region
    _
  $region41: #{lenet_forward.1} parent=0 // pred_fallthru
    _
  // Predicated region
  $region42: #{lenet_forward.1} parent=0 // pred_check
    _
  $region43: #{lenet_forward.1} parent=0 // pred_check_branch
    %41 = sbr.rel (0) target = $region45
  $region44: #{lenet_forward.1} parent=0 // pred_region
    _
  $region45: #{lenet_forward.1} parent=0 // pred_fallthru
    _
  // Predicated region
  $region46: #{lenet_forward.1} parent=0 // pred_check
    _
  $region47: #{lenet_forward.1} parent=0 // pred_check_branch
    %43 = sbr.rel (0) target = $region49
  $region48: #{lenet_forward.1} parent=0 // pred_region
    _
  $region49: #{lenet_forward.1} parent=0 // pred_fallthru
    _
  // Predicated region
  $region50: #{lenet_forward.1} parent=0 // pred_check
    _
  $region51: #{lenet_forward.1} parent=0 // pred_check_branch
    %45 = sbr.rel (0) target = $region53
  $region52: #{lenet_forward.1} parent=0 // pred_region
    _
  $region53: #{lenet_forward.1} parent=0 // pred_fallthru
    _
  // Predicated region
  $region54: #{lenet_forward.1} parent=0 // pred_check
    _
  $region55: #{lenet_forward.1} parent=0 // pred_check_branch
    %47 = sbr.rel (0) target = $region57
  $region56: #{lenet_forward.1} parent=0 // pred_region
    _
  $region57: #{lenet_forward.1} parent=0 // pred_fallthru
    _
  // Predicated region
  $region58: #{lenet_forward.1} parent=0 // pred_check
    _
  $region59: #{lenet_forward.1} parent=0 // pred_check_branch
    %49 = sbr.rel (0) target = $region61
  $region60: #{lenet_forward.1} parent=0 // pred_region
    _
  $region61: #{lenet_forward.1} parent=0 // pred_fallthru
    _
  %v50 = vld [vmem:[%s1] sm:$0xff]
  %v51 = vld [vmem:[%s1 + $0x8] sm:$0xff]
  %v52 = vld [vmem:[%s1 + $0x10] sm:$0xff]
  %v53 = vld [vmem:[%s1 + $0x18] sm:$0xff]
  %v54 = vld [vmem:[%s1 + $0x20] sm:$0xff]
  %v55 = vld [vmem:[%s1 + $0x28] sm:$0xff]
  %v56 = vld [vmem:[%s1 + $0x30] sm:$0xff]
  %v57 = vld [vmem:[%s1 + $0x38] sm:$0xff]
  %v58 = vld [vmem:[%s1 + $0x40] sm:$0xff]
  %v59 = vld [vmem:[%s1 + $0x48] sm:$0xff]
  %v60 = vld [vmem:[%s1 + $0x50] sm:$0xff]
  %v61 = vld [vmem:[%s1 + $0x58] sm:$0xff]
  %v62 = vld [vmem:[%s1 + $0x60] sm:$0xff]
  %v63 = vld [vmem:[%s1 + $0x68] sm:$0xff]
  %v64 = vld [vmem:[%s1 + $0x70] sm:$0xff]
  %v65 = vld [vmem:[%s1 + $0x78] sm:$0xff]
  %v66 = vld [vmem:[%s1 + $0x80] sm:$0xff]
  %v67 = vld [vmem:[%s1 + $0x88] sm:$0xff]
  %v68 = vld [vmem:[%s1 + $0x90] sm:$0xff]
  %v69 = vld [vmem:[%s1 + $0x98] sm:$0xff]
  %v70 = vld [vmem:[%s1 + $0xa0] sm:$0xff]
  %v71 = vld [vmem:[%s0] sm:$0xff]
  %v72 = vld [vmem:[%s0 + $0x8] sm:$0xff]
  %v73 = vld [vmem:[%s0 + $0x10] sm:$0xff]
  %v74 = vld [vmem:[%s0 + $0x18] sm:$0xff]
  %v75 = vld [vmem:[%s0 + $0x20] sm:$0xff]
  %v76 = vld [vmem:[%s0 + $0x28] sm:$0xff]
  %v77 = vld [vmem:[%s0 + $0x30] sm:$0xff]
  %v78 = vld [vmem:[%s0 + $0x38] sm:$0xff]
  %s79 = scalar_lea.vmem %s1, 168
  %v80 = vld [vmem:[%s79] sm:$0xff]
  %v81 = vld [vmem:[%s79 + $0x8] sm:$0xff]
  %v82 = vld [vmem:[%s79 + $0x10] sm:$0xff]
  %v83 = vld [vmem:[%s79 + $0x18] sm:$0xff]
  %v84 = vld [vmem:[%s79 + $0x20] sm:$0xff]
  %v85 = vld [vmem:[%s79 + $0x28] sm:$0xff]
  %v86 = vld [vmem:[%s79 + $0x30] sm:$0xff]
  %v87 = vld [vmem:[%s79 + $0x38] sm:$0xff]
  %v88 = vld [vmem:[%s79 + $0x40] sm:$0xff]
  %v89 = vld [vmem:[%s79 + $0x48] sm:$0xff]
  %v90 = vld [vmem:[%s79 + $0x50] sm:$0xff]
  %v91 = vld [vmem:[%s79 + $0x58] sm:$0xff]
  %v92 = vld [vmem:[%s79 + $0x60] sm:$0xff]
  %v93 = vld [vmem:[%s79 + $0x68] sm:$0xff]
  %v94 = vld [vmem:[%s79 + $0x70] sm:$0xff]
  %v95 = vld [vmem:[%s79 + $0x78] sm:$0xff]
  %v96 = vld [vmem:[%s79 + $0x80] sm:$0xff]
  %v97 = vld [vmem:[%s79 + $0x88] sm:$0xff]
  %v98 = vld [vmem:[%s79 + $0x90] sm:$0xff]
  %v99 = vld [vmem:[%s79 + $0x98] sm:$0xff]
  %v100 = vld [vmem:[%s79 + $0xa0] sm:$0xff]
  %s101 = scalar_lea.vmem %s0, 64
  %v102 = vld [vmem:[%s101] sm:$0xff]
  %v103 = vld [vmem:[%s101 + $0x8] sm:$0xff]
  %v104 = vld [vmem:[%s101 + $0x10] sm:$0xff]
  %v105 = vld [vmem:[%s101 + $0x18] sm:$0xff]
  %v106 = vld [vmem:[%s101 + $0x20] sm:$0xff]
  %v107 = vld [vmem:[%s101 + $0x28] sm:$0xff]
  %v108 = vld [vmem:[%s101 + $0x30] sm:$0xff]
  %v109 = vld [vmem:[%s101 + $0x38] sm:$0xff]
  %vm110 = vcmask 261120
  %v112 = vsel %vm110, %v80, 0
  %v115 = vsel %vm110, %v81, 0
  %v118 = vsel %vm110, %v82, 0
  %v121 = vsel %vm110, %v83, 0
  %v124 = vsel %vm110, %v84, 0
  %v127 = vsel %vm110, %v85, 0
  %v130 = vsel %vm110, %v86, 0
  %v133 = vsel %vm110, %v87, 0
  %v136 = vsel %vm110, %v88, 0
  %v139 = vsel %vm110, %v89, 0
  %v142 = vsel %vm110, %v90, 0
  %v145 = vsel %vm110, %v91, 0
  %v148 = vsel %vm110, %v92, 0
  %v151 = vsel %vm110, %v93, 0
  %v154 = vsel %vm110, %v94, 0
  %v157 = vsel %vm110, %v95, 0
  %v160 = vsel %vm110, %v96, 0
  %v163 = vsel %vm110, %v97, 0
  %v166 = vsel %vm110, %v98, 0
  %v169 = vsel %vm110, %v99, 0
  %v172 = vsel %vm110, %v100, 0
  %174 = vmatprep.subr.mxu0 0.0
  %175 = vmatpush1.msra.mxu0 0.0
  %176 = vmatprep.subr.mxu0 0.0
  %177 = vmatpush1.msra.mxu0 0.0
  %178 = vmatprep.subr.mxu0 0.0
  %179 = vmatpush1.msra.mxu0 0.0
  %180 = vmatprep.subr.mxu0 0.0
  %181 = vmatpush1.msra.mxu0 0.0
  %182 = vmatprep.subr.mxu0 0.0
  %183 = vmatpush1.msra.mxu0 0.0
  %184 = vmatprep.subr.mxu0 0.0
  %185 = vmatpush1.msra.mxu0 0.0
  %186 = vmatprep.subr.mxu0 0.0
  %187 = vmatpush1.msra.mxu0 0.0
  %188 = vmatprep.subr.mxu0 0.0
  %189 = vmatpush1.msra.mxu0 0.0
  %190 = vmatprep.subr.mxu0 0.0
  %191 = vmatpush1.msra.mxu0 0.0
  %192 = vmatprep.subr.mxu0 0.0
  %193 = vmatpush1.msra.mxu0 0.0
  %194 = vmatprep.subr.mxu0 0.0
  %195 = vmatpush1.msra.mxu0 0.0
  %196 = vmatprep.subr.mxu0 0.0
  %197 = vmatpush1.msra.mxu0 0.0
  %198 = vmatprep.subr.mxu0 %v109
  %199 = vmatpush1.msra.mxu0 %v108
  %200 = vmatprep.subr.mxu0 %v107
  %201 = vmatpush1.msra.mxu0 %v106
  %202 = vmatprep.subr.mxu0 %v105
  %203 = vmatpush1.msra.mxu0 %v104
  %204 = vmatprep.subr.mxu0 %v103
  %205 = vmatpush1.msra.mxu0 %v102
  %206 = vmatprep.subr.mxu0 0.0
  %207 = vmatpush2.msra.mxu0 0.0
  %208 = vmatprep.subr.mxu0 0.0
  %209 = vmatpush2.msra.mxu0 0.0
  %210 = vmatprep.subr.mxu0 0.0
  %211 = vmatpush2.msra.mxu0 0.0
  %212 = vmatprep.subr.mxu0 0.0
  %213 = vmatpush2.msra.mxu0 0.0
  %214 = vmatprep.subr.mxu0 0.0
  %215 = vmatpush2.msra.mxu0 0.0
  %216 = vmatprep.subr.mxu0 0.0
  %217 = vmatpush2.msra.mxu0 0.0
  %218 = vmatprep.subr.mxu0 0.0
  %219 = vmatpush2.msra.mxu0 0.0
  %220 = vmatprep.subr.mxu0 0.0
  %221 = vmatpush2.msra.mxu0 0.0
  %222 = vmatprep.subr.mxu0 0.0
  %223 = vmatpush2.msra.mxu0 0.0
  %224 = vmatprep.subr.mxu0 0.0
  %225 = vmatpush2.msra.mxu0 0.0
  %226 = vmatprep.subr.mxu0 0.0
  %227 = vmatpush2.msra.mxu0 0.0
  %228 = vmatprep.subr.mxu0 0.0
  %229 = vmatpush2.msra.mxu0 0.0
  %230 = vmatprep.subr.mxu0 0.0
  %231 = vmatpush2.msra.mxu0 0.0
  %232 = vmatprep.subr.mxu0 0.0
  %233 = vmatpush2.msra.mxu0 0.0
  %234 = vmatprep.subr.mxu0 0.0
  %235 = vmatpush2.msra.mxu0 0.0
  %236 = vmatprep.subr.mxu0 0.0
  %237 = vmatpush2.msra.mxu0 0.0
  %238 = vmatprep.mubr.f32.mxu0 0.0
  %239 = vmatmul.mubr.f32.gmra.mxu0 %v112
  %v240 = vpop.f32.mrf.mxu0
  %v241 = vadd.f32 0.0, %v240
  %v242 = vpop.f32.mrf.mxu0
  %v243 = vadd.f32 0.0, %v242
  %244 = vmatprep.mubr.f32.mxu0 0.0
  %245 = vmatmul.mubr.f32.gmra.mxu0 %v115
  %v246 = vpop.f32.mrf.mxu0
  %v247 = vadd.f32 0.0, %v246
  %v248 = vpop.f32.mrf.mxu0
  %v249 = vadd.f32 0.0, %v248
  %250 = vmatprep.mubr.f32.mxu0 0.0
  %251 = vmatmul.mubr.f32.gmra.mxu0 %v118
  %v252 = vpop.f32.mrf.mxu0
  %v253 = vadd.f32 0.0, %v252
  %v254 = vpop.f32.mrf.mxu0
  %v255 = vadd.f32 0.0, %v254
  %256 = vmatprep.mubr.f32.mxu0 0.0
  %257 = vmatmul.mubr.f32.gmra.mxu0 %v121
  %v258 = vpop.f32.mrf.mxu0
  %v259 = vadd.f32 0.0, %v258
  %v260 = vpop.f32.mrf.mxu0
  %v261 = vadd.f32 0.0, %v260
  %262 = vmatprep.mubr.f32.mxu0 0.0
  %263 = vmatmul.mubr.f32.gmra.mxu0 %v124
  %v264 = vpop.f32.mrf.mxu0
  %v265 = vadd.f32 0.0, %v264
  %v266 = vpop.f32.mrf.mxu0
  %v267 = vadd.f32 0.0, %v266
  %268 = vmatprep.mubr.f32.mxu0 0.0
  %269 = vmatmul.mubr.f32.gmra.mxu0 %v127
  %v270 = vpop.f32.mrf.mxu0
  %v271 = vadd.f32 0.0, %v270
  %v272 = vpop.f32.mrf.mxu0
  %v273 = vadd.f32 0.0, %v272
  %274 = vmatprep.mubr.f32.mxu0 0.0
  %275 = vmatmul.mubr.f32.gmra.mxu0 %v130
  %v276 = vpop.f32.mrf.mxu0
  %v277 = vadd.f32 0.0, %v276
  %v278 = vpop.f32.mrf.mxu0
  %v279 = vadd.f32 0.0, %v278
  %280 = vmatprep.mubr.f32.mxu0 0.0
  %281 = vmatmul.mubr.f32.gmra.mxu0 %v133
  %v282 = vpop.f32.mrf.mxu0
  %v283 = vadd.f32 0.0, %v282
  %v284 = vpop.f32.mrf.mxu0
  %v285 = vadd.f32 0.0, %v284
  %286 = vmatprep.mubr.f32.mxu0 0.0
  %287 = vmatmul.mubr.f32.gmra.mxu0 %v136
  %v288 = vpop.f32.mrf.mxu0
  %v289 = vadd.f32 0.0, %v288
  %v290 = vpop.f32.mrf.mxu0
  %v291 = vadd.f32 0.0, %v290
  %292 = vmatprep.mubr.f32.mxu0 0.0
  %293 = vmatmul.mubr.f32.gmra.mxu0 %v139
  %v294 = vpop.f32.mrf.mxu0
  %v295 = vadd.f32 0.0, %v294
  %v296 = vpop.f32.mrf.mxu0
  %v297 = vadd.f32 0.0, %v296
  %298 = vmatprep.mubr.f32.mxu0 0.0
  %299 = vmatmul.mubr.f32.gmra.mxu0 %v142
  %v300 = vpop.f32.mrf.mxu0
  %v301 = vadd.f32 0.0, %v300
  %v302 = vpop.f32.mrf.mxu0
  %v303 = vadd.f32 0.0, %v302
  %304 = vmatprep.mubr.f32.mxu0 0.0
  %305 = vmatmul.mubr.f32.gmra.mxu0 %v145
  %v306 = vpop.f32.mrf.mxu0
  %v307 = vadd.f32 0.0, %v306
  %v308 = vpop.f32.mrf.mxu0
  %v309 = vadd.f32 0.0, %v308
  %310 = vmatprep.mubr.f32.mxu0 0.0
  %311 = vmatmul.mubr.f32.gmra.mxu0 %v148
  %v312 = vpop.f32.mrf.mxu0
  %v313 = vadd.f32 0.0, %v312
  %v314 = vpop.f32.mrf.mxu0
  %v315 = vadd.f32 0.0, %v314
  %316 = vmatprep.mubr.f32.mxu0 0.0
  %317 = vmatmul.mubr.f32.gmra.mxu0 %v151
  %v318 = vpop.f32.mrf.mxu0
  %v319 = vadd.f32 0.0, %v318
  %v320 = vpop.f32.mrf.mxu0
  %v321 = vadd.f32 0.0, %v320
  %322 = vmatprep.mubr.f32.mxu0 0.0
  %323 = vmatmul.mubr.f32.gmra.mxu0 %v154
  %v324 = vpop.f32.mrf.mxu0
  %v325 = vadd.f32 0.0, %v324
  %v326 = vpop.f32.mrf.mxu0
  %v327 = vadd.f32 0.0, %v326
  %328 = vmatprep.mubr.f32.mxu0 0.0
  %329 = vmatmul.mubr.f32.gmra.mxu0 %v157
  %v330 = vpop.f32.mrf.mxu0
  %v331 = vadd.f32 0.0, %v330
  %v332 = vpop.f32.mrf.mxu0
  %v333 = vadd.f32 0.0, %v332
  %334 = vmatprep.mubr.f32.mxu0 0.0
  %335 = vmatmul.mubr.f32.gmra.mxu0 %v160
  %v336 = vpop.f32.mrf.mxu0
  %v337 = vadd.f32 0.0, %v336
  %v338 = vpop.f32.mrf.mxu0
  %v339 = vadd.f32 0.0, %v338
  %340 = vmatprep.mubr.f32.mxu0 0.0
  %341 = vmatmul.mubr.f32.gmra.mxu0 %v163
  %v342 = vpop.f32.mrf.mxu0
  %v343 = vadd.f32 0.0, %v342
  %v344 = vpop.f32.mrf.mxu0
  %v345 = vadd.f32 0.0, %v344
  %346 = vmatprep.mubr.f32.mxu0 0.0
  %347 = vmatmul.mubr.f32.gmra.mxu0 %v166
  %v348 = vpop.f32.mrf.mxu0
  %v349 = vadd.f32 0.0, %v348
  %v350 = vpop.f32.mrf.mxu0
  %v351 = vadd.f32 0.0, %v350
  %352 = vmatprep.mubr.f32.mxu0 0.0
  %353 = vmatmul.mubr.f32.gmra.mxu0 %v169
  %v354 = vpop.f32.mrf.mxu0
  %v355 = vadd.f32 0.0, %v354
  %v356 = vpop.f32.mrf.mxu0
  %v357 = vadd.f32 0.0, %v356
  %358 = vmatprep.mubr.f32.mxu0 0.0
  %359 = vmatmul.mubr.f32.gmra.mxu0 %v172
  %v360 = vpop.f32.mrf.mxu0
  %v361 = vadd.f32 0.0, %v360
  %v362 = vpop.f32.mrf.mxu0
  %v363 = vadd.f32 0.0, %v362
  %364 = vdwg.mxu0
  %v366 = vsel %vm110, %v50, 0
  %v369 = vsel %vm110, %v51, 0
  %v372 = vsel %vm110, %v52, 0
  %v375 = vsel %vm110, %v53, 0
  %v378 = vsel %vm110, %v54, 0
  %v381 = vsel %vm110, %v55, 0
  %v384 = vsel %vm110, %v56, 0
  %v387 = vsel %vm110, %v57, 0
  %v390 = vsel %vm110, %v58, 0
  %v393 = vsel %vm110, %v59, 0
  %v396 = vsel %vm110, %v60, 0
  %v399 = vsel %vm110, %v61, 0
  %v402 = vsel %vm110, %v62, 0
  %v405 = vsel %vm110, %v63, 0
  %v408 = vsel %vm110, %v64, 0
  %v411 = vsel %vm110, %v65, 0
  %v414 = vsel %vm110, %v66, 0
  %v417 = vsel %vm110, %v67, 0
  %v420 = vsel %vm110, %v68, 0
  %v423 = vsel %vm110, %v69, 0
  %v426 = vsel %vm110, %v70, 0
  %428 = vmatprep.subr.mxu0 0.0
  %429 = vmatpush1.msra.mxu0 0.0
  %430 = vmatprep.subr.mxu0 0.0
  %431 = vmatpush1.msra.mxu0 0.0
  %432 = vmatprep.subr.mxu0 0.0
  %433 = vmatpush1.msra.mxu0 0.0
  %434 = vmatprep.subr.mxu0 0.0
  %435 = vmatpush1.msra.mxu0 0.0
  %436 = vmatprep.subr.mxu0 0.0
  %437 = vmatpush1.msra.mxu0 0.0
  %438 = vmatprep.subr.mxu0 0.0
  %439 = vmatpush1.msra.mxu0 0.0
  %440 = vmatprep.subr.mxu0 0.0
  %441 = vmatpush1.msra.mxu0 0.0
  %442 = vmatprep.subr.mxu0 0.0
  %443 = vmatpush1.msra.mxu0 0.0
  %444 = vmatprep.subr.mxu0 0.0
  %445 = vmatpush1.msra.mxu0 0.0
  %446 = vmatprep.subr.mxu0 0.0
  %447 = vmatpush1.msra.mxu0 0.0
  %448 = vmatprep.subr.mxu0 0.0
  %449 = vmatpush1.msra.mxu0 0.0
  %450 = vmatprep.subr.mxu0 0.0
  %451 = vmatpush1.msra.mxu0 0.0
  %452 = vmatprep.subr.mxu0 %v78
  %453 = vmatpush1.msra.mxu0 %v77
  %454 = vmatprep.subr.mxu0 %v76
  %455 = vmatpush1.msra.mxu0 %v75
  %456 = vmatprep.subr.mxu0 %v74
  %457 = vmatpush1.msra.mxu0 %v73
  %458 = vmatprep.subr.mxu0 %v72
  %459 = vmatpush1.msra.mxu0 %v71
  %460 = vmatprep.subr.mxu0 0.0
  %461 = vmatpush2.msra.mxu0 0.0
  %462 = vmatprep.subr.mxu0 0.0
  %463 = vmatpush2.msra.mxu0 0.0
  %464 = vmatprep.subr.mxu0 0.0
  %465 = vmatpush2.msra.mxu0 0.0
  %466 = vmatprep.subr.mxu0 0.0
  %467 = vmatpush2.msra.mxu0 0.0
  %468 = vmatprep.subr.mxu0 0.0
  %469 = vmatpush2.msra.mxu0 0.0
  %470 = vmatprep.subr.mxu0 0.0
  %471 = vmatpush2.msra.mxu0 0.0
  %472 = vmatprep.subr.mxu0 0.0
  %473 = vmatpush2.msra.mxu0 0.0
  %474 = vmatprep.subr.mxu0 0.0
  %475 = vmatpush2.msra.mxu0 0.0
  %476 = vmatprep.subr.mxu0 0.0
  %477 = vmatpush2.msra.mxu0 0.0
  %478 = vmatprep.subr.mxu0 0.0
  %479 = vmatpush2.msra.mxu0 0.0
  %480 = vmatprep.subr.mxu0 0.0
  %481 = vmatpush2.msra.mxu0 0.0
  %482 = vmatprep.subr.mxu0 0.0
  %483 = vmatpush2.msra.mxu0 0.0
  %484 = vmatprep.subr.mxu0 0.0
  %485 = vmatpush2.msra.mxu0 0.0
  %486 = vmatprep.subr.mxu0 0.0
  %487 = vmatpush2.msra.mxu0 0.0
  %488 = vmatprep.subr.mxu0 0.0
  %489 = vmatpush2.msra.mxu0 0.0
  %490 = vmatprep.subr.mxu0 0.0
  %491 = vmatpush2.msra.mxu0 0.0
  %492 = vmatprep.mubr.f32.mxu0 0.0
  %493 = vmatmul.mubr.f32.gmra.mxu0 %v366
  %v494 = vpop.f32.mrf.mxu0
  %v495 = vadd.f32 %v241, %v494
  %v496 = vpop.f32.mrf.mxu0
  %v497 = vadd.f32 %v243, %v496
  %498 = vmatprep.mubr.f32.mxu0 0.0
  %499 = vmatmul.mubr.f32.gmra.mxu0 %v369
  %v500 = vpop.f32.mrf.mxu0
  %v501 = vadd.f32 %v247, %v500
  %v502 = vpop.f32.mrf.mxu0
  %v503 = vadd.f32 %v249, %v502
  %504 = vmatprep.mubr.f32.mxu0 0.0
  %505 = vmatmul.mubr.f32.gmra.mxu0 %v372
  %v506 = vpop.f32.mrf.mxu0
  %v507 = vadd.f32 %v253, %v506
  %v508 = vpop.f32.mrf.mxu0
  %v509 = vadd.f32 %v255, %v508
  %510 = vmatprep.mubr.f32.mxu0 0.0
  %511 = vmatmul.mubr.f32.gmra.mxu0 %v375
  %v512 = vpop.f32.mrf.mxu0
  %v513 = vadd.f32 %v259, %v512
  %v514 = vpop.f32.mrf.mxu0
  %v515 = vadd.f32 %v261, %v514
  %516 = vmatprep.mubr.f32.mxu0 0.0
  %517 = vmatmul.mubr.f32.gmra.mxu0 %v378
  %v518 = vpop.f32.mrf.mxu0
  %v519 = vadd.f32 %v265, %v518
  %v520 = vpop.f32.mrf.mxu0
  %v521 = vadd.f32 %v267, %v520
  %522 = vmatprep.mubr.f32.mxu0 0.0
  %523 = vmatmul.mubr.f32.gmra.mxu0 %v381
  %v524 = vpop.f32.mrf.mxu0
  %v525 = vadd.f32 %v271, %v524
  %v526 = vpop.f32.mrf.mxu0
  %v527 = vadd.f32 %v273, %v526
  %528 = vmatprep.mubr.f32.mxu0 0.0
  %529 = vmatmul.mubr.f32.gmra.mxu0 %v384
  %v530 = vpop.f32.mrf.mxu0
  %v531 = vadd.f32 %v277, %v530
  %v532 = vpop.f32.mrf.mxu0
  %v533 = vadd.f32 %v279, %v532
  %534 = vmatprep.mubr.f32.mxu0 0.0
  %535 = vmatmul.mubr.f32.gmra.mxu0 %v387
  %v536 = vpop.f32.mrf.mxu0
  %v537 = vadd.f32 %v283, %v536
  %v538 = vpop.f32.mrf.mxu0
  %v539 = vadd.f32 %v285, %v538
  %540 = vmatprep.mubr.f32.mxu0 0.0
  %541 = vmatmul.mubr.f32.gmra.mxu0 %v390
  %v542 = vpop.f32.mrf.mxu0
  %v543 = vadd.f32 %v289, %v542
  %v544 = vpop.f32.mrf.mxu0
  %v545 = vadd.f32 %v291, %v544
  %546 = vmatprep.mubr.f32.mxu0 0.0
  %547 = vmatmul.mubr.f32.gmra.mxu0 %v393
  %v548 = vpop.f32.mrf.mxu0
  %v549 = vadd.f32 %v295, %v548
  %v550 = vpop.f32.mrf.mxu0
  %v551 = vadd.f32 %v297, %v550
  %552 = vmatprep.mubr.f32.mxu0 0.0
  %553 = vmatmul.mubr.f32.gmra.mxu0 %v396
  %v554 = vpop.f32.mrf.mxu0
  %v555 = vadd.f32 %v301, %v554
  %v556 = vpop.f32.mrf.mxu0
  %v557 = vadd.f32 %v303, %v556
  %558 = vmatprep.mubr.f32.mxu0 0.0
  %559 = vmatmul.mubr.f32.gmra.mxu0 %v399
  %v560 = vpop.f32.mrf.mxu0
  %v561 = vadd.f32 %v307, %v560
  %v562 = vpop.f32.mrf.mxu0
  %v563 = vadd.f32 %v309, %v562
  %564 = vmatprep.mubr.f32.mxu0 0.0
  %565 = vmatmul.mubr.f32.gmra.mxu0 %v402
  %v566 = vpop.f32.mrf.mxu0
  %v567 = vadd.f32 %v313, %v566
  %v568 = vpop.f32.mrf.mxu0
  %v569 = vadd.f32 %v315, %v568
  %570 = vmatprep.mubr.f32.mxu0 0.0
  %571 = vmatmul.mubr.f32.gmra.mxu0 %v405
  %v572 = vpop.f32.mrf.mxu0
  %v573 = vadd.f32 %v319, %v572
  %v574 = vpop.f32.mrf.mxu0
  %v575 = vadd.f32 %v321, %v574
  %576 = vmatprep.mubr.f32.mxu0 0.0
  %577 = vmatmul.mubr.f32.gmra.mxu0 %v408
  %v578 = vpop.f32.mrf.mxu0
  %v579 = vadd.f32 %v325, %v578
  %v580 = vpop.f32.mrf.mxu0
  %v581 = vadd.f32 %v327, %v580
  %582 = vmatprep.mubr.f32.mxu0 0.0
  %583 = vmatmul.mubr.f32.gmra.mxu0 %v411
  %v584 = vpop.f32.mrf.mxu0
  %v585 = vadd.f32 %v331, %v584
  %v586 = vpop.f32.mrf.mxu0
  %v587 = vadd.f32 %v333, %v586
  %588 = vmatprep.mubr.f32.mxu0 0.0
  %589 = vmatmul.mubr.f32.gmra.mxu0 %v414
  %v590 = vpop.f32.mrf.mxu0
  %v591 = vadd.f32 %v337, %v590
  %v592 = vpop.f32.mrf.mxu0
  %v593 = vadd.f32 %v339, %v592
  %594 = vmatprep.mubr.f32.mxu0 0.0
  %595 = vmatmul.mubr.f32.gmra.mxu0 %v417
  %v596 = vpop.f32.mrf.mxu0
  %v597 = vadd.f32 %v343, %v596
  %v598 = vpop.f32.mrf.mxu0
  %v599 = vadd.f32 %v345, %v598
  %600 = vmatprep.mubr.f32.mxu0 0.0
  %601 = vmatmul.mubr.f32.gmra.mxu0 %v420
  %v602 = vpop.f32.mrf.mxu0
  %v603 = vadd.f32 %v349, %v602
  %v604 = vpop.f32.mrf.mxu0
  %v605 = vadd.f32 %v351, %v604
  %606 = vmatprep.mubr.f32.mxu0 0.0
  %607 = vmatmul.mubr.f32.gmra.mxu0 %v423
  %v608 = vpop.f32.mrf.mxu0
  %v609 = vadd.f32 %v355, %v608
  %v610 = vpop.f32.mrf.mxu0
  %v611 = vadd.f32 %v357, %v610
  %612 = vmatprep.mubr.f32.mxu0 0.0
  %613 = vmatmul.mubr.f32.gmra.mxu0 %v426
  %v614 = vpop.f32.mrf.mxu0
  %v615 = vadd.f32 %v361, %v614
  %v616 = vpop.f32.mrf.mxu0
  %v617 = vadd.f32 %v363, %v616
  %618 = vdwg.mxu0
  %s619 = scalar_lea.vmem %s1, 336
  %v620 = vld [vmem:[%s619] sm:$0xff]
  %v621 = vld [vmem:[%s619 + $0x8] sm:$0xff]
  %v622 = vld [vmem:[%s619 + $0x10] sm:$0xff]
  %v623 = vld [vmem:[%s619 + $0x18] sm:$0xff]
  %v624 = vld [vmem:[%s619 + $0x20] sm:$0xff]
  %v625 = vld [vmem:[%s619 + $0x28] sm:$0xff]
  %v626 = vld [vmem:[%s619 + $0x30] sm:$0xff]
  %v627 = vld [vmem:[%s619 + $0x38] sm:$0xff]
  %v628 = vld [vmem:[%s619 + $0x40] sm:$0xff]
  %v629 = vld [vmem:[%s619 + $0x48] sm:$0xff]
  %v630 = vld [vmem:[%s619 + $0x50] sm:$0xff]
  %v631 = vld [vmem:[%s619 + $0x58] sm:$0xff]
  %v632 = vld [vmem:[%s619 + $0x60] sm:$0xff]
  %v633 = vld [vmem:[%s619 + $0x68] sm:$0xff]
  %v634 = vld [vmem:[%s619 + $0x70] sm:$0xff]
  %v635 = vld [vmem:[%s619 + $0x78] sm:$0xff]
  %v636 = vld [vmem:[%s619 + $0x80] sm:$0xff]
  %v637 = vld [vmem:[%s619 + $0x88] sm:$0xff]
  %v638 = vld [vmem:[%s619 + $0x90] sm:$0xff]
  %v639 = vld [vmem:[%s619 + $0x98] sm:$0xff]
  %v640 = vld [vmem:[%s619 + $0xa0] sm:$0xff]
  %s641 = scalar_lea.vmem %s0, 128
  %v642 = vld [vmem:[%s641] sm:$0xff]
  %v643 = vld [vmem:[%s641 + $0x8] sm:$0xff]
  %v644 = vld [vmem:[%s641 + $0x10] sm:$0xff]
  %v645 = vld [vmem:[%s641 + $0x18] sm:$0xff]
  %v646 = vld [vmem:[%s641 + $0x20] sm:$0xff]
  %v647 = vld [vmem:[%s641 + $0x28] sm:$0xff]
  %v648 = vld [vmem:[%s641 + $0x30] sm:$0xff]
  %v649 = vld [vmem:[%s641 + $0x38] sm:$0xff]
  %v651 = vsel %vm110, %v620, 0
  %v654 = vsel %vm110, %v621, 0
  %v657 = vsel %vm110, %v622, 0
  %v660 = vsel %vm110, %v623, 0
  %v663 = vsel %vm110, %v624, 0
  %v666 = vsel %vm110, %v625, 0
  %v669 = vsel %vm110, %v626, 0
  %v672 = vsel %vm110, %v627, 0
  %v675 = vsel %vm110, %v628, 0
  %v678 = vsel %vm110, %v629, 0
  %v681 = vsel %vm110, %v630, 0
  %v684 = vsel %vm110, %v631, 0
  %v687 = vsel %vm110, %v632, 0
  %v690 = vsel %vm110, %v633, 0
  %v693 = vsel %vm110, %v634, 0
  %v696 = vsel %vm110, %v635, 0
  %v699 = vsel %vm110, %v636, 0
  %v702 = vsel %vm110, %v637, 0
  %v705 = vsel %vm110, %v638, 0
  %v708 = vsel %vm110, %v639, 0
  %v711 = vsel %vm110, %v640, 0
  %713 = vmatprep.subr.mxu0 0.0
  %714 = vmatpush1.msra.mxu0 0.0
  %715 = vmatprep.subr.mxu0 0.0
  %716 = vmatpush1.msra.mxu0 0.0
  %717 = vmatprep.subr.mxu0 0.0
  %718 = vmatpush1.msra.mxu0 0.0
  %719 = vmatprep.subr.mxu0 0.0
  %720 = vmatpush1.msra.mxu0 0.0
  %721 = vmatprep.subr.mxu0 0.0
  %722 = vmatpush1.msra.mxu0 0.0
  %723 = vmatprep.subr.mxu0 0.0
  %724 = vmatpush1.msra.mxu0 0.0
  %725 = vmatprep.subr.mxu0 0.0
  %726 = vmatpush1.msra.mxu0 0.0
  %727 = vmatprep.subr.mxu0 0.0
  %728 = vmatpush1.msra.mxu0 0.0
  %729 = vmatprep.subr.mxu0 0.0
  %730 = vmatpush1.msra.mxu0 0.0
  %731 = vmatprep.subr.mxu0 0.0
  %732 = vmatpush1.msra.mxu0 0.0
  %733 = vmatprep.subr.mxu0 0.0
  %734 = vmatpush1.msra.mxu0 0.0
  %735 = vmatprep.subr.mxu0 0.0
  %736 = vmatpush1.msra.mxu0 0.0
  %737 = vmatprep.subr.mxu0 %v649
  %738 = vmatpush1.msra.mxu0 %v648
  %739 = vmatprep.subr.mxu0 %v647
  %740 = vmatpush1.msra.mxu0 %v646
  %741 = vmatprep.subr.mxu0 %v645
  %742 = vmatpush1.msra.mxu0 %v644
  %743 = vmatprep.subr.mxu0 %v643
  %744 = vmatpush1.msra.mxu0 %v642
  %745 = vmatprep.subr.mxu0 0.0
  %746 = vmatpush2.msra.mxu0 0.0
  %747 = vmatprep.subr.mxu0 0.0
  %748 = vmatpush2.msra.mxu0 0.0
  %749 = vmatprep.subr.mxu0 0.0
  %750 = vmatpush2.msra.mxu0 0.0
  %751 = vmatprep.subr.mxu0 0.0
  %752 = vmatpush2.msra.mxu0 0.0
  %753 = vmatprep.subr.mxu0 0.0
  %754 = vmatpush2.msra.mxu0 0.0
  %755 = vmatprep.subr.mxu0 0.0
  %756 = vmatpush2.msra.mxu0 0.0
  %757 = vmatprep.subr.mxu0 0.0
  %758 = vmatpush2.msra.mxu0 0.0
  %759 = vmatprep.subr.mxu0 0.0
  %760 = vmatpush2.msra.mxu0 0.0
  %761 = vmatprep.subr.mxu0 0.0
  %762 = vmatpush2.msra.mxu0 0.0
  %763 = vmatprep.subr.mxu0 0.0
  %764 = vmatpush2.msra.mxu0 0.0
  %765 = vmatprep.subr.mxu0 0.0
  %766 = vmatpush2.msra.mxu0 0.0
  %767 = vmatprep.subr.mxu0 0.0
  %768 = vmatpush2.msra.mxu0 0.0
  %769 = vmatprep.subr.mxu0 0.0
  %770 = vmatpush2.msra.mxu0 0.0
  %771 = vmatprep.subr.mxu0 0.0
  %772 = vmatpush2.msra.mxu0 0.0
  %773 = vmatprep.subr.mxu0 0.0
  %774 = vmatpush2.msra.mxu0 0.0
  %775 = vmatprep.subr.mxu0 0.0
  %776 = vmatpush2.msra.mxu0 0.0
  %777 = vmatprep.mubr.f32.mxu0 0.0
  %778 = vmatmul.mubr.f32.gmra.mxu0 %v651
  %v779 = vpop.f32.mrf.mxu0
  %v780 = vadd.f32 0.0, %v779
  %v781 = vpop.f32.mrf.mxu0
  %v782 = vadd.f32 0.0, %v781
  %783 = vmatprep.mubr.f32.mxu0 0.0
  %784 = vmatmul.mubr.f32.gmra.mxu0 %v654
  %v785 = vpop.f32.mrf.mxu0
  %v786 = vadd.f32 0.0, %v785
  %v787 = vpop.f32.mrf.mxu0
  %v788 = vadd.f32 0.0, %v787
  %789 = vmatprep.mubr.f32.mxu0 0.0
  %790 = vmatmul.mubr.f32.gmra.mxu0 %v657
  %v791 = vpop.f32.mrf.mxu0
  %v792 = vadd.f32 0.0, %v791
  %v793 = vpop.f32.mrf.mxu0
  %v794 = vadd.f32 0.0, %v793
  %795 = vmatprep.mubr.f32.mxu0 0.0
  %796 = vmatmul.mubr.f32.gmra.mxu0 %v660
  %v797 = vpop.f32.mrf.mxu0
  %v798 = vadd.f32 0.0, %v797
  %v799 = vpop.f32.mrf.mxu0
  %v800 = vadd.f32 0.0, %v799
  %801 = vmatprep.mubr.f32.mxu0 0.0
  %802 = vmatmul.mubr.f32.gmra.mxu0 %v663
  %v803 = vpop.f32.mrf.mxu0
  %v804 = vadd.f32 0.0, %v803
  %v805 = vpop.f32.mrf.mxu0
  %v806 = vadd.f32 0.0, %v805
  %807 = vmatprep.mubr.f32.mxu0 0.0
  %808 = vmatmul.mubr.f32.gmra.mxu0 %v666
  %v809 = vpop.f32.mrf.mxu0
  %v810 = vadd.f32 0.0, %v809
  %v811 = vpop.f32.mrf.mxu0
  %v812 = vadd.f32 0.0, %v811
  %813 = vmatprep.mubr.f32.mxu0 0.0
  %814 = vmatmul.mubr.f32.gmra.mxu0 %v669
  %v815 = vpop.f32.mrf.mxu0
  %v816 = vadd.f32 0.0, %v815
  %v817 = vpop.f32.mrf.mxu0
  %v818 = vadd.f32 0.0, %v817
  %819 = vmatprep.mubr.f32.mxu0 0.0
  %820 = vmatmul.mubr.f32.gmra.mxu0 %v672
  %v821 = vpop.f32.mrf.mxu0
  %v822 = vadd.f32 0.0, %v821
  %v823 = vpop.f32.mrf.mxu0
  %v824 = vadd.f32 0.0, %v823
  %825 = vmatprep.mubr.f32.mxu0 0.0
  %826 = vmatmul.mubr.f32.gmra.mxu0 %v675
  %v827 = vpop.f32.mrf.mxu0
  %v828 = vadd.f32 0.0, %v827
  %v829 = vpop.f32.mrf.mxu0
  %v830 = vadd.f32 0.0, %v829
  %831 = vmatprep.mubr.f32.mxu0 0.0
  %832 = vmatmul.mubr.f32.gmra.mxu0 %v678
  %v833 = vpop.f32.mrf.mxu0
  %v834 = vadd.f32 0.0, %v833
  %v835 = vpop.f32.mrf.mxu0
  %v836 = vadd.f32 0.0, %v835
  %837 = vmatprep.mubr.f32.mxu0 0.0
  %838 = vmatmul.mubr.f32.gmra.mxu0 %v681
  %v839 = vpop.f32.mrf.mxu0
  %v840 = vadd.f32 0.0, %v839
  %v841 = vpop.f32.mrf.mxu0
  %v842 = vadd.f32 0.0, %v841
  %843 = vmatprep.mubr.f32.mxu0 0.0
  %844 = vmatmul.mubr.f32.gmra.mxu0 %v684
  %v845 = vpop.f32.mrf.mxu0
  %v846 = vadd.f32 0.0, %v845
  %v847 = vpop.f32.mrf.mxu0
  %v848 = vadd.f32 0.0, %v847
  %849 = vmatprep.mubr.f32.mxu0 0.0
  %850 = vmatmul.mubr.f32.gmra.mxu0 %v687
  %v851 = vpop.f32.mrf.mxu0
  %v852 = vadd.f32 0.0, %v851
  %v853 = vpop.f32.mrf.mxu0
  %v854 = vadd.f32 0.0, %v853
  %855 = vmatprep.mubr.f32.mxu0 0.0
  %856 = vmatmul.mubr.f32.gmra.mxu0 %v690
  %v857 = vpop.f32.mrf.mxu0
  %v858 = vadd.f32 0.0, %v857
  %v859 = vpop.f32.mrf.mxu0
  %v860 = vadd.f32 0.0, %v859
  %861 = vmatprep.mubr.f32.mxu0 0.0
  %862 = vmatmul.mubr.f32.gmra.mxu0 %v693
  %v863 = vpop.f32.mrf.mxu0
  %v864 = vadd.f32 0.0, %v863
  %v865 = vpop.f32.mrf.mxu0
  %v866 = vadd.f32 0.0, %v865
  %867 = vmatprep.mubr.f32.mxu0 0.0
  %868 = vmatmul.mubr.f32.gmra.mxu0 %v696
  %v869 = vpop.f32.mrf.mxu0
  %v870 = vadd.f32 0.0, %v869
  %v871 = vpop.f32.mrf.mxu0
  %v872 = vadd.f32 0.0, %v871
  %873 = vmatprep.mubr.f32.mxu0 0.0
  %874 = vmatmul.mubr.f32.gmra.mxu0 %v699
  %v875 = vpop.f32.mrf.mxu0
  %v876 = vadd.f32 0.0, %v875
  %v877 = vpop.f32.mrf.mxu0
  %v878 = vadd.f32 0.0, %v877
  %879 = vmatprep.mubr.f32.mxu0 0.0
  %880 = vmatmul.mubr.f32.gmra.mxu0 %v702
  %v881 = vpop.f32.mrf.mxu0
  %v882 = vadd.f32 0.0, %v881
  %v883 = vpop.f32.mrf.mxu0
  %v884 = vadd.f32 0.0, %v883
  %885 = vmatprep.mubr.f32.mxu0 0.0
  %886 = vmatmul.mubr.f32.gmra.mxu0 %v705
  %v887 = vpop.f32.mrf.mxu0
  %v888 = vadd.f32 0.0, %v887
  %v889 = vpop.f32.mrf.mxu0
  %v890 = vadd.f32 0.0, %v889
  %891 = vmatprep.mubr.f32.mxu0 0.0
  %892 = vmatmul.mubr.f32.gmra.mxu0 %v708
  %v893 = vpop.f32.mrf.mxu0
  %v894 = vadd.f32 0.0, %v893
  %v895 = vpop.f32.mrf.mxu0
  %v896 = vadd.f32 0.0, %v895
  %897 = vmatprep.mubr.f32.mxu0 0.0
  %898 = vmatmul.mubr.f32.gmra.mxu0 %v711
  %v899 = vpop.f32.mrf.mxu0
  %v900 = vadd.f32 0.0, %v899
  %v901 = vpop.f32.mrf.mxu0
  %v902 = vadd.f32 0.0, %v901
  %903 = vdwg.mxu0
  %v904 = vadd.f32 %v495, %v780
  %v905 = vadd.f32 %v497, %v782
  %v906 = vadd.f32 %v501, %v786
  %v907 = vadd.f32 %v503, %v788
  %v908 = vadd.f32 %v507, %v792
  %v909 = vadd.f32 %v509, %v794
  %v910 = vadd.f32 %v513, %v798
  %v911 = vadd.f32 %v515, %v800
  %v912 = vadd.f32 %v519, %v804
  %v913 = vadd.f32 %v521, %v806
  %v914 = vadd.f32 %v525, %v810
  %v915 = vadd.f32 %v527, %v812
  %v916 = vadd.f32 %v531, %v816
  %v917 = vadd.f32 %v533, %v818
  %v918 = vadd.f32 %v537, %v822
  %v919 = vadd.f32 %v539, %v824
  %v920 = vadd.f32 %v543, %v828
  %v921 = vadd.f32 %v545, %v830
  %v922 = vadd.f32 %v549, %v834
  %v923 = vadd.f32 %v551, %v836
  %v924 = vadd.f32 %v555, %v840
  %v925 = vadd.f32 %v557, %v842
  %v926 = vadd.f32 %v561, %v846
  %v927 = vadd.f32 %v563, %v848
  %v928 = vadd.f32 %v567, %v852
  %v929 = vadd.f32 %v569, %v854
  %v930 = vadd.f32 %v573, %v858
  %v931 = vadd.f32 %v575, %v860
  %v932 = vadd.f32 %v579, %v864
  %v933 = vadd.f32 %v581, %v866
  %v934 = vadd.f32 %v585, %v870
  %v935 = vadd.f32 %v587, %v872
  %v936 = vadd.f32 %v591, %v876
  %v937 = vadd.f32 %v593, %v878
  %v938 = vadd.f32 %v597, %v882
  %v939 = vadd.f32 %v599, %v884
  %v940 = vadd.f32 %v603, %v888
  %v941 = vadd.f32 %v605, %v890
  %v942 = vadd.f32 %v609, %v894
  %v943 = vadd.f32 %v611, %v896
  %v944 = vadd.f32 %v615, %v900
  %v945 = vadd.f32 %v617, %v902
  %s946 = scalar_lea.vmem %s1, 504
  %v947 = vld [vmem:[%s946] sm:$0xff]
  %v948 = vld [vmem:[%s946 + $0x8] sm:$0xff]
  %v949 = vld [vmem:[%s946 + $0x10] sm:$0xff]
  %v950 = vld [vmem:[%s946 + $0x18] sm:$0xff]
  %v951 = vld [vmem:[%s946 + $0x20] sm:$0xff]
  %v952 = vld [vmem:[%s946 + $0x28] sm:$0xff]
  %v953 = vld [vmem:[%s946 + $0x30] sm:$0xff]
  %v954 = vld [vmem:[%s946 + $0x38] sm:$0xff]
  %v955 = vld [vmem:[%s946 + $0x40] sm:$0xff]
  %v956 = vld [vmem:[%s946 + $0x48] sm:$0xff]
  %v957 = vld [vmem:[%s946 + $0x50] sm:$0xff]
  %v958 = vld [vmem:[%s946 + $0x58] sm:$0xff]
  %v959 = vld [vmem:[%s946 + $0x60] sm:$0xff]
  %v960 = vld [vmem:[%s946 + $0x68] sm:$0xff]
  %v961 = vld [vmem:[%s946 + $0x70] sm:$0xff]
  %v962 = vld [vmem:[%s946 + $0x78] sm:$0xff]
  %v963 = vld [vmem:[%s946 + $0x80] sm:$0xff]
  %v964 = vld [vmem:[%s946 + $0x88] sm:$0xff]
  %v965 = vld [vmem:[%s946 + $0x90] sm:$0xff]
  %v966 = vld [vmem:[%s946 + $0x98] sm:$0xff]
  %v967 = vld [vmem:[%s946 + $0xa0] sm:$0xff]
  %s968 = scalar_lea.vmem %s0, 192
  %v969 = vld [vmem:[%s968] sm:$0xff]
  %v970 = vld [vmem:[%s968 + $0x8] sm:$0xff]
  %v971 = vld [vmem:[%s968 + $0x10] sm:$0xff]
  %v972 = vld [vmem:[%s968 + $0x18] sm:$0xff]
  %v973 = vld [vmem:[%s968 + $0x20] sm:$0xff]
  %v974 = vld [vmem:[%s968 + $0x28] sm:$0xff]
  %v975 = vld [vmem:[%s968 + $0x30] sm:$0xff]
  %v976 = vld [vmem:[%s968 + $0x38] sm:$0xff]
  %v978 = vsel %vm110, %v947, 0
  %v981 = vsel %vm110, %v948, 0
  %v984 = vsel %vm110, %v949, 0
  %v987 = vsel %vm110, %v950, 0
  %v990 = vsel %vm110, %v951, 0
  %v993 = vsel %vm110, %v952, 0
  %v996 = vsel %vm110, %v953, 0
  %v999 = vsel %vm110, %v954, 0
  %v1002 = vsel %vm110, %v955, 0
  %v1005 = vsel %vm110, %v956, 0
  %v1008 = vsel %vm110, %v957, 0
  %v1011 = vsel %vm110, %v958, 0
  %v1014 = vsel %vm110, %v959, 0
  %v1017 = vsel %vm110, %v960, 0
  %v1020 = vsel %vm110, %v961, 0
  %v1023 = vsel %vm110, %v962, 0
  %v1026 = vsel %vm110, %v963, 0
  %v1029 = vsel %vm110, %v964, 0
  %v1032 = vsel %vm110, %v965, 0
  %v1035 = vsel %vm110, %v966, 0
  %v1038 = vsel %vm110, %v967, 0
  %1040 = vmatprep.subr.mxu0 0.0
  %1041 = vmatpush1.msra.mxu0 0.0
  %1042 = vmatprep.subr.mxu0 0.0
  %1043 = vmatpush1.msra.mxu0 0.0
  %1044 = vmatprep.subr.mxu0 0.0
  %1045 = vmatpush1.msra.mxu0 0.0
  %1046 = vmatprep.subr.mxu0 0.0
  %1047 = vmatpush1.msra.mxu0 0.0
  %1048 = vmatprep.subr.mxu0 0.0
  %1049 = vmatpush1.msra.mxu0 0.0
  %1050 = vmatprep.subr.mxu0 0.0
  %1051 = vmatpush1.msra.mxu0 0.0
  %1052 = vmatprep.subr.mxu0 0.0
  %1053 = vmatpush1.msra.mxu0 0.0
  %1054 = vmatprep.subr.mxu0 0.0
  %1055 = vmatpush1.msra.mxu0 0.0
  %1056 = vmatprep.subr.mxu0 0.0
  %1057 = vmatpush1.msra.mxu0 0.0
  %1058 = vmatprep.subr.mxu0 0.0
  %1059 = vmatpush1.msra.mxu0 0.0
  %1060 = vmatprep.subr.mxu0 0.0
  %1061 = vmatpush1.msra.mxu0 0.0
  %1062 = vmatprep.subr.mxu0 0.0
  %1063 = vmatpush1.msra.mxu0 0.0
  %1064 = vmatprep.subr.mxu0 %v976
  %1065 = vmatpush1.msra.mxu0 %v975
  %1066 = vmatprep.subr.mxu0 %v974
  %1067 = vmatpush1.msra.mxu0 %v973
  %1068 = vmatprep.subr.mxu0 %v972
  %1069 = vmatpush1.msra.mxu0 %v971
  %1070 = vmatprep.subr.mxu0 %v970
  %1071 = vmatpush1.msra.mxu0 %v969
  %1072 = vmatprep.subr.mxu0 0.0
  %1073 = vmatpush2.msra.mxu0 0.0
  %1074 = vmatprep.subr.mxu0 0.0
  %1075 = vmatpush2.msra.mxu0 0.0
  %1076 = vmatprep.subr.mxu0 0.0
  %1077 = vmatpush2.msra.mxu0 0.0
  %1078 = vmatprep.subr.mxu0 0.0
  %1079 = vmatpush2.msra.mxu0 0.0
  %1080 = vmatprep.subr.mxu0 0.0
  %1081 = vmatpush2.msra.mxu0 0.0
  %1082 = vmatprep.subr.mxu0 0.0
  %1083 = vmatpush2.msra.mxu0 0.0
  %1084 = vmatprep.subr.mxu0 0.0
  %1085 = vmatpush2.msra.mxu0 0.0
  %1086 = vmatprep.subr.mxu0 0.0
  %1087 = vmatpush2.msra.mxu0 0.0
  %1088 = vmatprep.subr.mxu0 0.0
  %1089 = vmatpush2.msra.mxu0 0.0
  %1090 = vmatprep.subr.mxu0 0.0
  %1091 = vmatpush2.msra.mxu0 0.0
  %1092 = vmatprep.subr.mxu0 0.0
  %1093 = vmatpush2.msra.mxu0 0.0
  %1094 = vmatprep.subr.mxu0 0.0
  %1095 = vmatpush2.msra.mxu0 0.0
  %1096 = vmatprep.subr.mxu0 0.0
  %1097 = vmatpush2.msra.mxu0 0.0
  %1098 = vmatprep.subr.mxu0 0.0
  %1099 = vmatpush2.msra.mxu0 0.0
  %1100 = vmatprep.subr.mxu0 0.0
  %1101 = vmatpush2.msra.mxu0 0.0
  %1102 = vmatprep.subr.mxu0 0.0
  %1103 = vmatpush2.msra.mxu0 0.0
  %1104 = vmatprep.mubr.f32.mxu0 0.0
  %1105 = vmatmul.mubr.f32.gmra.mxu0 %v978
  %v1106 = vpop.f32.mrf.mxu0
  %v1107 = vadd.f32 0.0, %v1106
  %v1108 = vpop.f32.mrf.mxu0
  %v1109 = vadd.f32 0.0, %v1108
  %1110 = vmatprep.mubr.f32.mxu0 0.0
  %1111 = vmatmul.mubr.f32.gmra.mxu0 %v981
  %v1112 = vpop.f32.mrf.mxu0
  %v1113 = vadd.f32 0.0, %v1112
  %v1114 = vpop.f32.mrf.mxu0
  %v1115 = vadd.f32 0.0, %v1114
  %1116 = vmatprep.mubr.f32.mxu0 0.0
  %1117 = vmatmul.mubr.f32.gmra.mxu0 %v984
  %v1118 = vpop.f32.mrf.mxu0
  %v1119 = vadd.f32 0.0, %v1118
  %v1120 = vpop.f32.mrf.mxu0
  %v1121 = vadd.f32 0.0, %v1120
  %1122 = vmatprep.mubr.f32.mxu0 0.0
  %1123 = vmatmul.mubr.f32.gmra.mxu0 %v987
  %v1124 = vpop.f32.mrf.mxu0
  %v1125 = vadd.f32 0.0, %v1124
  %v1126 = vpop.f32.mrf.mxu0
  %v1127 = vadd.f32 0.0, %v1126
  %1128 = vmatprep.mubr.f32.mxu0 0.0
  %1129 = vmatmul.mubr.f32.gmra.mxu0 %v990
  %v1130 = vpop.f32.mrf.mxu0
  %v1131 = vadd.f32 0.0, %v1130
  %v1132 = vpop.f32.mrf.mxu0
  %v1133 = vadd.f32 0.0, %v1132
  %1134 = vmatprep.mubr.f32.mxu0 0.0
  %1135 = vmatmul.mubr.f32.gmra.mxu0 %v993
  %v1136 = vpop.f32.mrf.mxu0
  %v1137 = vadd.f32 0.0, %v1136
  %v1138 = vpop.f32.mrf.mxu0
  %v1139 = vadd.f32 0.0, %v1138
  %1140 = vmatprep.mubr.f32.mxu0 0.0
  %1141 = vmatmul.mubr.f32.gmra.mxu0 %v996
  %v1142 = vpop.f32.mrf.mxu0
  %v1143 = vadd.f32 0.0, %v1142
  %v1144 = vpop.f32.mrf.mxu0
  %v1145 = vadd.f32 0.0, %v1144
  %1146 = vmatprep.mubr.f32.mxu0 0.0
  %1147 = vmatmul.mubr.f32.gmra.mxu0 %v999
  %v1148 = vpop.f32.mrf.mxu0
  %v1149 = vadd.f32 0.0, %v1148
  %v1150 = vpop.f32.mrf.mxu0
  %v1151 = vadd.f32 0.0, %v1150
  %1152 = vmatprep.mubr.f32.mxu0 0.0
  %1153 = vmatmul.mubr.f32.gmra.mxu0 %v1002
  %v1154 = vpop.f32.mrf.mxu0
  %v1155 = vadd.f32 0.0, %v1154
  %v1156 = vpop.f32.mrf.mxu0
  %v1157 = vadd.f32 0.0, %v1156
  %1158 = vmatprep.mubr.f32.mxu0 0.0
  %1159 = vmatmul.mubr.f32.gmra.mxu0 %v1005
  %v1160 = vpop.f32.mrf.mxu0
  %v1161 = vadd.f32 0.0, %v1160
  %v1162 = vpop.f32.mrf.mxu0
  %v1163 = vadd.f32 0.0, %v1162
  %1164 = vmatprep.mubr.f32.mxu0 0.0
  %1165 = vmatmul.mubr.f32.gmra.mxu0 %v1008
  %v1166 = vpop.f32.mrf.mxu0
  %v1167 = vadd.f32 0.0, %v1166
  %v1168 = vpop.f32.mrf.mxu0
  %v1169 = vadd.f32 0.0, %v1168
  %1170 = vmatprep.mubr.f32.mxu0 0.0
  %1171 = vmatmul.mubr.f32.gmra.mxu0 %v1011
  %v1172 = vpop.f32.mrf.mxu0
  %v1173 = vadd.f32 0.0, %v1172
  %v1174 = vpop.f32.mrf.mxu0
  %v1175 = vadd.f32 0.0, %v1174
  %1176 = vmatprep.mubr.f32.mxu0 0.0
  %1177 = vmatmul.mubr.f32.gmra.mxu0 %v1014
  %v1178 = vpop.f32.mrf.mxu0
  %v1179 = vadd.f32 0.0, %v1178
  %v1180 = vpop.f32.mrf.mxu0
  %v1181 = vadd.f32 0.0, %v1180
  %1182 = vmatprep.mubr.f32.mxu0 0.0
  %1183 = vmatmul.mubr.f32.gmra.mxu0 %v1017
  %v1184 = vpop.f32.mrf.mxu0
  %v1185 = vadd.f32 0.0, %v1184
  %v1186 = vpop.f32.mrf.mxu0
  %v1187 = vadd.f32 0.0, %v1186
  %1188 = vmatprep.mubr.f32.mxu0 0.0
  %1189 = vmatmul.mubr.f32.gmra.mxu0 %v1020
  %v1190 = vpop.f32.mrf.mxu0
  %v1191 = vadd.f32 0.0, %v1190
  %v1192 = vpop.f32.mrf.mxu0
  %v1193 = vadd.f32 0.0, %v1192
  %1194 = vmatprep.mubr.f32.mxu0 0.0
  %1195 = vmatmul.mubr.f32.gmra.mxu0 %v1023
  %v1196 = vpop.f32.mrf.mxu0
  %v1197 = vadd.f32 0.0, %v1196
  %v1198 = vpop.f32.mrf.mxu0
  %v1199 = vadd.f32 0.0, %v1198
  %1200 = vmatprep.mubr.f32.mxu0 0.0
  %1201 = vmatmul.mubr.f32.gmra.mxu0 %v1026
  %v1202 = vpop.f32.mrf.mxu0
  %v1203 = vadd.f32 0.0, %v1202
  %v1204 = vpop.f32.mrf.mxu0
  %v1205 = vadd.f32 0.0, %v1204
  %1206 = vmatprep.mubr.f32.mxu0 0.0
  %1207 = vmatmul.mubr.f32.gmra.mxu0 %v1029
  %v1208 = vpop.f32.mrf.mxu0
  %v1209 = vadd.f32 0.0, %v1208
  %v1210 = vpop.f32.mrf.mxu0
  %v1211 = vadd.f32 0.0, %v1210
  %1212 = vmatprep.mubr.f32.mxu0 0.0
  %1213 = vmatmul.mubr.f32.gmra.mxu0 %v1032
  %v1214 = vpop.f32.mrf.mxu0
  %v1215 = vadd.f32 0.0, %v1214
  %v1216 = vpop.f32.mrf.mxu0
  %v1217 = vadd.f32 0.0, %v1216
  %1218 = vmatprep.mubr.f32.mxu0 0.0
  %1219 = vmatmul.mubr.f32.gmra.mxu0 %v1035
  %v1220 = vpop.f32.mrf.mxu0
  %v1221 = vadd.f32 0.0, %v1220
  %v1222 = vpop.f32.mrf.mxu0
  %v1223 = vadd.f32 0.0, %v1222
  %1224 = vmatprep.mubr.f32.mxu0 0.0
  %1225 = vmatmul.mubr.f32.gmra.mxu0 %v1038
  %v1226 = vpop.f32.mrf.mxu0
  %v1227 = vadd.f32 0.0, %v1226
  %v1228 = vpop.f32.mrf.mxu0
  %v1229 = vadd.f32 0.0, %v1228
  %1230 = vdwg.mxu0
  %v1231 = vadd.f32 %v904, %v1107
  %v1232 = vadd.f32 %v905, %v1109
  %v1233 = vadd.f32 %v906, %v1113
  %v1234 = vadd.f32 %v907, %v1115
  %v1235 = vadd.f32 %v908, %v1119
  %v1236 = vadd.f32 %v909, %v1121
  %v1237 = vadd.f32 %v910, %v1125
  %v1238 = vadd.f32 %v911, %v1127
  %v1239 = vadd.f32 %v912, %v1131
  %v1240 = vadd.f32 %v913, %v1133
  %v1241 = vadd.f32 %v914, %v1137
  %v1242 = vadd.f32 %v915, %v1139
  %v1243 = vadd.f32 %v916, %v1143
  %v1244 = vadd.f32 %v917, %v1145
  %v1245 = vadd.f32 %v918, %v1149
  %v1246 = vadd.f32 %v919, %v1151
  %v1247 = vadd.f32 %v920, %v1155
  %v1248 = vadd.f32 %v921, %v1157
  %v1249 = vadd.f32 %v922, %v1161
  %v1250 = vadd.f32 %v923, %v1163
  %v1251 = vadd.f32 %v924, %v1167
  %v1252 = vadd.f32 %v925, %v1169
  %v1253 = vadd.f32 %v926, %v1173
  %v1254 = vadd.f32 %v927, %v1175
  %v1255 = vadd.f32 %v928, %v1179
  %v1256 = vadd.f32 %v929, %v1181
  %v1257 = vadd.f32 %v930, %v1185
  %v1258 = vadd.f32 %v931, %v1187
  %v1259 = vadd.f32 %v932, %v1191
  %v1260 = vadd.f32 %v933, %v1193
  %v1261 = vadd.f32 %v934, %v1197
  %v1262 = vadd.f32 %v935, %v1199
  %v1263 = vadd.f32 %v936, %v1203
  %v1264 = vadd.f32 %v937, %v1205
  %v1265 = vadd.f32 %v938, %v1209
  %v1266 = vadd.f32 %v939, %v1211
  %v1267 = vadd.f32 %v940, %v1215
  %v1268 = vadd.f32 %v941, %v1217
  %v1269 = vadd.f32 %v942, %v1221
  %v1270 = vadd.f32 %v943, %v1223
  %v1271 = vadd.f32 %v944, %v1227
  %v1272 = vadd.f32 %v945, %v1229
  %s1273 = scalar_lea.vmem %s1, 672
  %v1274 = vld [vmem:[%s1273] sm:$0xff]
  %v1275 = vld [vmem:[%s1273 + $0x8] sm:$0xff]
  %v1276 = vld [vmem:[%s1273 + $0x10] sm:$0xff]
  %v1277 = vld [vmem:[%s1273 + $0x18] sm:$0xff]
  %v1278 = vld [vmem:[%s1273 + $0x20] sm:$0xff]
  %v1279 = vld [vmem:[%s1273 + $0x28] sm:$0xff]
  %v1280 = vld [vmem:[%s1273 + $0x30] sm:$0xff]
  %v1281 = vld [vmem:[%s1273 + $0x38] sm:$0xff]
  %v1282 = vld [vmem:[%s1273 + $0x40] sm:$0xff]
  %v1283 = vld [vmem:[%s1273 + $0x48] sm:$0xff]
  %v1284 = vld [vmem:[%s1273 + $0x50] sm:$0xff]
  %v1285 = vld [vmem:[%s1273 + $0x58] sm:$0xff]
  %v1286 = vld [vmem:[%s1273 + $0x60] sm:$0xff]
  %v1287 = vld [vmem:[%s1273 + $0x68] sm:$0xff]
  %v1288 = vld [vmem:[%s1273 + $0x70] sm:$0xff]
  %v1289 = vld [vmem:[%s1273 + $0x78] sm:$0xff]
  %v1290 = vld [vmem:[%s1273 + $0x80] sm:$0xff]
  %v1291 = vld [vmem:[%s1273 + $0x88] sm:$0xff]
  %v1292 = vld [vmem:[%s1273 + $0x90] sm:$0xff]
  %v1293 = vld [vmem:[%s1273 + $0x98] sm:$0xff]
  %v1294 = vld [vmem:[%s1273 + $0xa0] sm:$0xff]
  %s1295 = scalar_lea.vmem %s0, 256
  %v1296 = vld [vmem:[%s1295] sm:$0xff]
  %v1297 = vld [vmem:[%s1295 + $0x8] sm:$0xff]
  %v1298 = vld [vmem:[%s1295 + $0x10] sm:$0xff]
  %v1299 = vld [vmem:[%s1295 + $0x18] sm:$0xff]
  %v1300 = vld [vmem:[%s1295 + $0x20] sm:$0xff]
  %v1301 = vld [vmem:[%s1295 + $0x28] sm:$0xff]
  %v1302 = vld [vmem:[%s1295 + $0x30] sm:$0xff]
  %v1303 = vld [vmem:[%s1295 + $0x38] sm:$0xff]
  %v1305 = vsel %vm110, %v1274, 0
  %v1308 = vsel %vm110, %v1275, 0
  %v1311 = vsel %vm110, %v1276, 0
  %v1314 = vsel %vm110, %v1277, 0
  %v1317 = vsel %vm110, %v1278, 0
  %v1320 = vsel %vm110, %v1279, 0
  %v1323 = vsel %vm110, %v1280, 0
  %v1326 = vsel %vm110, %v1281, 0
  %v1329 = vsel %vm110, %v1282, 0
  %v1332 = vsel %vm110, %v1283, 0
  %v1335 = vsel %vm110, %v1284, 0
  %v1338 = vsel %vm110, %v1285, 0
  %v1341 = vsel %vm110, %v1286, 0
  %v1344 = vsel %vm110, %v1287, 0
  %v1347 = vsel %vm110, %v1288, 0
  %v1350 = vsel %vm110, %v1289, 0
  %v1353 = vsel %vm110, %v1290, 0
  %v1356 = vsel %vm110, %v1291, 0
  %v1359 = vsel %vm110, %v1292, 0
  %v1362 = vsel %vm110, %v1293, 0
  %v1365 = vsel %vm110, %v1294, 0
  %1367 = vmatprep.subr.mxu0 0.0
  %1368 = vmatpush1.msra.mxu0 0.0
  %1369 = vmatprep.subr.mxu0 0.0
  %1370 = vmatpush1.msra.mxu0 0.0
  %1371 = vmatprep.subr.mxu0 0.0
  %1372 = vmatpush1.msra.mxu0 0.0
  %1373 = vmatprep.subr.mxu0 0.0
  %1374 = vmatpush1.msra.mxu0 0.0
  %1375 = vmatprep.subr.mxu0 0.0
  %1376 = vmatpush1.msra.mxu0 0.0
  %1377 = vmatprep.subr.mxu0 0.0
  %1378 = vmatpush1.msra.mxu0 0.0
  %1379 = vmatprep.subr.mxu0 0.0
  %1380 = vmatpush1.msra.mxu0 0.0
  %1381 = vmatprep.subr.mxu0 0.0
  %1382 = vmatpush1.msra.mxu0 0.0
  %1383 = vmatprep.subr.mxu0 0.0
  %1384 = vmatpush1.msra.mxu0 0.0
  %1385 = vmatprep.subr.mxu0 0.0
  %1386 = vmatpush1.msra.mxu0 0.0
  %1387 = vmatprep.subr.mxu0 0.0
  %1388 = vmatpush1.msra.mxu0 0.0
  %1389 = vmatprep.subr.mxu0 0.0
  %1390 = vmatpush1.msra.mxu0 0.0
  %1391 = vmatprep.subr.mxu0 %v1303
  %1392 = vmatpush1.msra.mxu0 %v1302
  %1393 = vmatprep.subr.mxu0 %v1301
  %1394 = vmatpush1.msra.mxu0 %v1300
  %1395 = vmatprep.subr.mxu0 %v1299
  %1396 = vmatpush1.msra.mxu0 %v1298
  %1397 = vmatprep.subr.mxu0 %v1297
  %1398 = vmatpush1.msra.mxu0 %v1296
  %1399 = vmatprep.subr.mxu0 0.0
  %1400 = vmatpush2.msra.mxu0 0.0
  %1401 = vmatprep.subr.mxu0 0.0
  %1402 = vmatpush2.msra.mxu0 0.0
  %1403 = vmatprep.subr.mxu0 0.0
  %1404 = vmatpush2.msra.mxu0 0.0
  %1405 = vmatprep.subr.mxu0 0.0
  %1406 = vmatpush2.msra.mxu0 0.0
  %1407 = vmatprep.subr.mxu0 0.0
  %1408 = vmatpush2.msra.mxu0 0.0
  %1409 = vmatprep.subr.mxu0 0.0
  %1410 = vmatpush2.msra.mxu0 0.0
  %1411 = vmatprep.subr.mxu0 0.0
  %1412 = vmatpush2.msra.mxu0 0.0
  %1413 = vmatprep.subr.mxu0 0.0
  %1414 = vmatpush2.msra.mxu0 0.0
  %1415 = vmatprep.subr.mxu0 0.0
  %1416 = vmatpush2.msra.mxu0 0.0
  %1417 = vmatprep.subr.mxu0 0.0
  %1418 = vmatpush2.msra.mxu0 0.0
  %1419 = vmatprep.subr.mxu0 0.0
  %1420 = vmatpush2.msra.mxu0 0.0
  %1421 = vmatprep.subr.mxu0 0.0
  %1422 = vmatpush2.msra.mxu0 0.0
  %1423 = vmatprep.subr.mxu0 0.0
  %1424 = vmatpush2.msra.mxu0 0.0
  %1425 = vmatprep.subr.mxu0 0.0
  %1426 = vmatpush2.msra.mxu0 0.0
  %1427 = vmatprep.subr.mxu0 0.0
  %1428 = vmatpush2.msra.mxu0 0.0
  %1429 = vmatprep.subr.mxu0 0.0
  %1430 = vmatpush2.msra.mxu0 0.0
  %1431 = vmatprep.mubr.f32.mxu0 0.0
  %1432 = vmatmul.mubr.f32.gmra.mxu0 %v1305
  %v1433 = vpop.f32.mrf.mxu0
  %v1434 = vadd.f32 0.0, %v1433
  %v1435 = vpop.f32.mrf.mxu0
  %v1436 = vadd.f32 0.0, %v1435
  %1437 = vmatprep.mubr.f32.mxu0 0.0
  %1438 = vmatmul.mubr.f32.gmra.mxu0 %v1308
  %v1439 = vpop.f32.mrf.mxu0
  %v1440 = vadd.f32 0.0, %v1439
  %v1441 = vpop.f32.mrf.mxu0
  %v1442 = vadd.f32 0.0, %v1441
  %1443 = vmatprep.mubr.f32.mxu0 0.0
  %1444 = vmatmul.mubr.f32.gmra.mxu0 %v1311
  %v1445 = vpop.f32.mrf.mxu0
  %v1446 = vadd.f32 0.0, %v1445
  %v1447 = vpop.f32.mrf.mxu0
  %v1448 = vadd.f32 0.0, %v1447
  %1449 = vmatprep.mubr.f32.mxu0 0.0
  %1450 = vmatmul.mubr.f32.gmra.mxu0 %v1314
  %v1451 = vpop.f32.mrf.mxu0
  %v1452 = vadd.f32 0.0, %v1451
  %v1453 = vpop.f32.mrf.mxu0
  %v1454 = vadd.f32 0.0, %v1453
  %1455 = vmatprep.mubr.f32.mxu0 0.0
  %1456 = vmatmul.mubr.f32.gmra.mxu0 %v1317
  %v1457 = vpop.f32.mrf.mxu0
  %v1458 = vadd.f32 0.0, %v1457
  %v1459 = vpop.f32.mrf.mxu0
  %v1460 = vadd.f32 0.0, %v1459
  %1461 = vmatprep.mubr.f32.mxu0 0.0
  %1462 = vmatmul.mubr.f32.gmra.mxu0 %v1320
  %v1463 = vpop.f32.mrf.mxu0
  %v1464 = vadd.f32 0.0, %v1463
  %v1465 = vpop.f32.mrf.mxu0
  %v1466 = vadd.f32 0.0, %v1465
  %1467 = vmatprep.mubr.f32.mxu0 0.0
  %1468 = vmatmul.mubr.f32.gmra.mxu0 %v1323
  %v1469 = vpop.f32.mrf.mxu0
  %v1470 = vadd.f32 0.0, %v1469
  %v1471 = vpop.f32.mrf.mxu0
  %v1472 = vadd.f32 0.0, %v1471
  %1473 = vmatprep.mubr.f32.mxu0 0.0
  %1474 = vmatmul.mubr.f32.gmra.mxu0 %v1326
  %v1475 = vpop.f32.mrf.mxu0
  %v1476 = vadd.f32 0.0, %v1475
  %v1477 = vpop.f32.mrf.mxu0
  %v1478 = vadd.f32 0.0, %v1477
  %1479 = vmatprep.mubr.f32.mxu0 0.0
  %1480 = vmatmul.mubr.f32.gmra.mxu0 %v1329
  %v1481 = vpop.f32.mrf.mxu0
  %v1482 = vadd.f32 0.0, %v1481
  %v1483 = vpop.f32.mrf.mxu0
  %v1484 = vadd.f32 0.0, %v1483
  %1485 = vmatprep.mubr.f32.mxu0 0.0
  %1486 = vmatmul.mubr.f32.gmra.mxu0 %v1332
  %v1487 = vpop.f32.mrf.mxu0
  %v1488 = vadd.f32 0.0, %v1487
  %v1489 = vpop.f32.mrf.mxu0
  %v1490 = vadd.f32 0.0, %v1489
  %1491 = vmatprep.mubr.f32.mxu0 0.0
  %1492 = vmatmul.mubr.f32.gmra.mxu0 %v1335
  %v1493 = vpop.f32.mrf.mxu0
  %v1494 = vadd.f32 0.0, %v1493
  %v1495 = vpop.f32.mrf.mxu0
  %v1496 = vadd.f32 0.0, %v1495
  %1497 = vmatprep.mubr.f32.mxu0 0.0
  %1498 = vmatmul.mubr.f32.gmra.mxu0 %v1338
  %v1499 = vpop.f32.mrf.mxu0
  %v1500 = vadd.f32 0.0, %v1499
  %v1501 = vpop.f32.mrf.mxu0
  %v1502 = vadd.f32 0.0, %v1501
  %1503 = vmatprep.mubr.f32.mxu0 0.0
  %1504 = vmatmul.mubr.f32.gmra.mxu0 %v1341
  %v1505 = vpop.f32.mrf.mxu0
  %v1506 = vadd.f32 0.0, %v1505
  %v1507 = vpop.f32.mrf.mxu0
  %v1508 = vadd.f32 0.0, %v1507
  %1509 = vmatprep.mubr.f32.mxu0 0.0
  %1510 = vmatmul.mubr.f32.gmra.mxu0 %v1344
  %v1511 = vpop.f32.mrf.mxu0
  %v1512 = vadd.f32 0.0, %v1511
  %v1513 = vpop.f32.mrf.mxu0
  %v1514 = vadd.f32 0.0, %v1513
  %1515 = vmatprep.mubr.f32.mxu0 0.0
  %1516 = vmatmul.mubr.f32.gmra.mxu0 %v1347
  %v1517 = vpop.f32.mrf.mxu0
  %v1518 = vadd.f32 0.0, %v1517
  %v1519 = vpop.f32.mrf.mxu0
  %v1520 = vadd.f32 0.0, %v1519
  %1521 = vmatprep.mubr.f32.mxu0 0.0
  %1522 = vmatmul.mubr.f32.gmra.mxu0 %v1350
  %v1523 = vpop.f32.mrf.mxu0
  %v1524 = vadd.f32 0.0, %v1523
  %v1525 = vpop.f32.mrf.mxu0
  %v1526 = vadd.f32 0.0, %v1525
  %1527 = vmatprep.mubr.f32.mxu0 0.0
  %1528 = vmatmul.mubr.f32.gmra.mxu0 %v1353
  %v1529 = vpop.f32.mrf.mxu0
  %v1530 = vadd.f32 0.0, %v1529
  %v1531 = vpop.f32.mrf.mxu0
  %v1532 = vadd.f32 0.0, %v1531
  %1533 = vmatprep.mubr.f32.mxu0 0.0
  %1534 = vmatmul.mubr.f32.gmra.mxu0 %v1356
  %v1535 = vpop.f32.mrf.mxu0
  %v1536 = vadd.f32 0.0, %v1535
  %v1537 = vpop.f32.mrf.mxu0
  %v1538 = vadd.f32 0.0, %v1537
  %1539 = vmatprep.mubr.f32.mxu0 0.0
  %1540 = vmatmul.mubr.f32.gmra.mxu0 %v1359
  %v1541 = vpop.f32.mrf.mxu0
  %v1542 = vadd.f32 0.0, %v1541
  %v1543 = vpop.f32.mrf.mxu0
  %v1544 = vadd.f32 0.0, %v1543
  %1545 = vmatprep.mubr.f32.mxu0 0.0
  %1546 = vmatmul.mubr.f32.gmra.mxu0 %v1362
  %v1547 = vpop.f32.mrf.mxu0
  %v1548 = vadd.f32 0.0, %v1547
  %v1549 = vpop.f32.mrf.mxu0
  %v1550 = vadd.f32 0.0, %v1549
  %1551 = vmatprep.mubr.f32.mxu0 0.0
  %1552 = vmatmul.mubr.f32.gmra.mxu0 %v1365
  %v1553 = vpop.f32.mrf.mxu0
  %v1554 = vadd.f32 0.0, %v1553
  %v1555 = vpop.f32.mrf.mxu0
  %v1556 = vadd.f32 0.0, %v1555
  %1557 = vdwg.mxu0
  %v1558 = vadd.f32 %v1231, %v1434
  %v1559 = vadd.f32 %v1232, %v1436
  %v1560 = vadd.f32 %v1233, %v1440
  %v1561 = vadd.f32 %v1234, %v1442
  %v1562 = vadd.f32 %v1235, %v1446
  %v1563 = vadd.f32 %v1236, %v1448
  %v1564 = vadd.f32 %v1237, %v1452
  %v1565 = vadd.f32 %v1238, %v1454
  %v1566 = vadd.f32 %v1239, %v1458
  %v1567 = vadd.f32 %v1240, %v1460
  %v1568 = vadd.f32 %v1241, %v1464
  %v1569 = vadd.f32 %v1242, %v1466
  %v1570 = vadd.f32 %v1243, %v1470
  %v1571 = vadd.f32 %v1244, %v1472
  %v1572 = vadd.f32 %v1245, %v1476
  %v1573 = vadd.f32 %v1246, %v1478
  %v1574 = vadd.f32 %v1247, %v1482
  %v1575 = vadd.f32 %v1248, %v1484
  %v1576 = vadd.f32 %v1249, %v1488
  %v1577 = vadd.f32 %v1250, %v1490
  %v1578 = vadd.f32 %v1251, %v1494
  %v1579 = vadd.f32 %v1252, %v1496
  %v1580 = vadd.f32 %v1253, %v1500
  %v1581 = vadd.f32 %v1254, %v1502
  %v1582 = vadd.f32 %v1255, %v1506
  %v1583 = vadd.f32 %v1256, %v1508
  %v1584 = vadd.f32 %v1257, %v1512
  %v1585 = vadd.f32 %v1258, %v1514
  %v1586 = vadd.f32 %v1259, %v1518
  %v1587 = vadd.f32 %v1260, %v1520
  %v1588 = vadd.f32 %v1261, %v1524
  %v1589 = vadd.f32 %v1262, %v1526
  %v1590 = vadd.f32 %v1263, %v1530
  %v1591 = vadd.f32 %v1264, %v1532
  %v1592 = vadd.f32 %v1265, %v1536
  %v1593 = vadd.f32 %v1266, %v1538
  %v1594 = vadd.f32 %v1267, %v1542
  %v1595 = vadd.f32 %v1268, %v1544
  %v1596 = vadd.f32 %v1269, %v1548
  %v1597 = vadd.f32 %v1270, %v1550
  %v1598 = vadd.f32 %v1271, %v1554
  %v1599 = vadd.f32 %v1272, %v1556
  %v1600 = vld [vmem:[%s2] sm:$0xff]
  %v1601 = vld [vmem:[%s2 + $0x8] sm:$0xff]
  %v1602 = vld [vmem:[%s2 + $0x10] sm:$0xff]
  %v1603 = vld [vmem:[%s2 + $0x18] sm:$0xff]
  %v1604 = vld [vmem:[%s2 + $0x20] sm:$0xff]
  %v1605 = vld [vmem:[%s2 + $0x28] sm:$0xff]
  %v1606 = vld [vmem:[%s2 + $0x30] sm:$0xff]
  %v1607 = vld [vmem:[%s2 + $0x38] sm:$0xff]
  %v1608 = vld [vmem:[%s2 + $0x40] sm:$0xff]
  %v1609 = vld [vmem:[%s2 + $0x48] sm:$0xff]
  %v1610 = vld [vmem:[%s2 + $0x50] sm:$0xff]
  %v1611 = vld [vmem:[%s2 + $0x58] sm:$0xff]
  %v1612 = vld [vmem:[%s2 + $0x60] sm:$0xff]
  %v1613 = vld [vmem:[%s2 + $0x68] sm:$0xff]
  %v1614 = vld [vmem:[%s2 + $0x70] sm:$0xff]
  %v1615 = vld [vmem:[%s2 + $0x78] sm:$0xff]
  %v1616 = vld [vmem:[%s2 + $0x80] sm:$0xff]
  %v1617 = vld [vmem:[%s2 + $0x88] sm:$0xff]
  %v1618 = vld [vmem:[%s2 + $0x90] sm:$0xff]
  %v1619 = vld [vmem:[%s2 + $0x98] sm:$0xff]
  %v1620 = vld [vmem:[%s2 + $0xa0] sm:$0xff]
  %1622 = vset.pattern.permute.xlu0 0
  %1623 = vperm.xlu0 %1622, %v1600
  %v1624 = vpop.permute.xlu0 %1623
  %1627 = vset.pattern.permute.xlu0 0
  %1628 = vperm.xlu0 %1627, %v1601
  %v1629 = vpop.permute.xlu0 %1628
  %1632 = vset.pattern.permute.xlu0 0
  %1633 = vperm.xlu0 %1632, %v1602
  %v1634 = vpop.permute.xlu0 %1633
  %1637 = vset.pattern.permute.xlu0 0
  %1638 = vperm.xlu0 %1637, %v1603
  %v1639 = vpop.permute.xlu0 %1638
  %1642 = vset.pattern.permute.xlu0 0
  %1643 = vperm.xlu0 %1642, %v1604
  %v1644 = vpop.permute.xlu0 %1643
  %1647 = vset.pattern.permute.xlu0 0
  %1648 = vperm.xlu0 %1647, %v1605
  %v1649 = vpop.permute.xlu0 %1648
  %1652 = vset.pattern.permute.xlu0 0
  %1653 = vperm.xlu0 %1652, %v1606
  %v1654 = vpop.permute.xlu0 %1653
  %1657 = vset.pattern.permute.xlu0 0
  %1658 = vperm.xlu0 %1657, %v1607
  %v1659 = vpop.permute.xlu0 %1658
  %1662 = vset.pattern.permute.xlu0 0
  %1663 = vperm.xlu0 %1662, %v1608
  %v1664 = vpop.permute.xlu0 %1663
  %1667 = vset.pattern.permute.xlu0 0
  %1668 = vperm.xlu0 %1667, %v1609
  %v1669 = vpop.permute.xlu0 %1668
  %1672 = vset.pattern.permute.xlu0 0
  %1673 = vperm.xlu0 %1672, %v1610
  %v1674 = vpop.permute.xlu0 %1673
  %1677 = vset.pattern.permute.xlu0 0
  %1678 = vperm.xlu0 %1677, %v1611
  %v1679 = vpop.permute.xlu0 %1678
  %1682 = vset.pattern.permute.xlu0 0
  %1683 = vperm.xlu0 %1682, %v1612
  %v1684 = vpop.permute.xlu0 %1683
  %1687 = vset.pattern.permute.xlu0 0
  %1688 = vperm.xlu0 %1687, %v1613
  %v1689 = vpop.permute.xlu0 %1688
  %1692 = vset.pattern.permute.xlu0 0
  %1693 = vperm.xlu0 %1692, %v1614
  %v1694 = vpop.permute.xlu0 %1693
  %1697 = vset.pattern.permute.xlu0 0
  %1698 = vperm.xlu0 %1697, %v1615
  %v1699 = vpop.permute.xlu0 %1698
  %1702 = vset.pattern.permute.xlu0 0
  %1703 = vperm.xlu0 %1702, %v1616
  %v1704 = vpop.permute.xlu0 %1703
  %1707 = vset.pattern.permute.xlu0 0
  %1708 = vperm.xlu0 %1707, %v1617
  %v1709 = vpop.permute.xlu0 %1708
  %1712 = vset.pattern.permute.xlu0 0
  %1713 = vperm.xlu0 %1712, %v1618
  %v1714 = vpop.permute.xlu0 %1713
  %1717 = vset.pattern.permute.xlu0 0
  %1718 = vperm.xlu0 %1717, %v1619
  %v1719 = vpop.permute.xlu0 %1718
  %1722 = vset.pattern.permute.xlu0 0
  %1723 = vperm.xlu0 %1722, %v1620
  %v1724 = vpop.permute.xlu0 %1723
  %v1726 = vadd.f32 %v1558, %v1624
  %v1727 = vadd.f32 %v1559, %v1624
  %v1728 = vadd.f32 %v1560, %v1629
  %v1729 = vadd.f32 %v1561, %v1629
  %v1730 = vadd.f32 %v1562, %v1634
  %v1731 = vadd.f32 %v1563, %v1634
  %v1732 = vadd.f32 %v1564, %v1639
  %v1733 = vadd.f32 %v1565, %v1639
  %v1734 = vadd.f32 %v1566, %v1644
  %v1735 = vadd.f32 %v1567, %v1644
  %v1736 = vadd.f32 %v1568, %v1649
  %v1737 = vadd.f32 %v1569, %v1649
  %v1738 = vadd.f32 %v1570, %v1654
  %v1739 = vadd.f32 %v1571, %v1654
  %v1740 = vadd.f32 %v1572, %v1659
  %v1741 = vadd.f32 %v1573, %v1659
  %v1742 = vadd.f32 %v1574, %v1664
  %v1743 = vadd.f32 %v1575, %v1664
  %v1744 = vadd.f32 %v1576, %v1669
  %v1745 = vadd.f32 %v1577, %v1669
  %v1746 = vadd.f32 %v1578, %v1674
  %v1747 = vadd.f32 %v1579, %v1674
  %v1748 = vadd.f32 %v1580, %v1679
  %v1749 = vadd.f32 %v1581, %v1679
  %v1750 = vadd.f32 %v1582, %v1684
  %v1751 = vadd.f32 %v1583, %v1684
  %v1752 = vadd.f32 %v1584, %v1689
  %v1753 = vadd.f32 %v1585, %v1689
  %v1754 = vadd.f32 %v1586, %v1694
  %v1755 = vadd.f32 %v1587, %v1694
  %v1756 = vadd.f32 %v1588, %v1699
  %v1757 = vadd.f32 %v1589, %v1699
  %v1758 = vadd.f32 %v1590, %v1704
  %v1759 = vadd.f32 %v1591, %v1704
  %v1760 = vadd.f32 %v1592, %v1709
  %v1761 = vadd.f32 %v1593, %v1709
  %v1762 = vadd.f32 %v1594, %v1714
  %v1763 = vadd.f32 %v1595, %v1714
  %v1764 = vadd.f32 %v1596, %v1719
  %v1765 = vadd.f32 %v1597, %v1719
  %v1766 = vadd.f32 %v1598, %v1724
  %v1767 = vadd.f32 %v1599, %v1724
  %v1768 = vmul.f32 %v1726, 0.5
  %v1769 = vmul.f32 %v1727, 0.5
  %v1770 = vmul.f32 %v1728, 0.5
  %v1771 = vmul.f32 %v1729, 0.5
  %v1772 = vmul.f32 %v1730, 0.5
  %v1773 = vmul.f32 %v1731, 0.5
  %v1774 = vmul.f32 %v1732, 0.5
  %v1775 = vmul.f32 %v1733, 0.5
  %v1776 = vmul.f32 %v1734, 0.5
  %v1777 = vmul.f32 %v1735, 0.5
  %v1778 = vmul.f32 %v1736, 0.5
  %v1779 = vmul.f32 %v1737, 0.5
  %v1780 = vmul.f32 %v1738, 0.5
  %v1781 = vmul.f32 %v1739, 0.5
  %v1782 = vmul.f32 %v1740, 0.5
  %v1783 = vmul.f32 %v1741, 0.5
  %v1784 = vmul.f32 %v1742, 0.5
  %v1785 = vmul.f32 %v1743, 0.5
  %v1786 = vmul.f32 %v1744, 0.5
  %v1787 = vmul.f32 %v1745, 0.5
  %v1788 = vmul.f32 %v1746, 0.5
  %v1789 = vmul.f32 %v1747, 0.5
  %v1790 = vmul.f32 %v1748, 0.5
  %v1791 = vmul.f32 %v1749, 0.5
  %v1792 = vmul.f32 %v1750, 0.5
  %v1793 = vmul.f32 %v1751, 0.5
  %v1794 = vmul.f32 %v1752, 0.5
  %v1795 = vmul.f32 %v1753, 0.5
  %v1796 = vmul.f32 %v1754, 0.5
  %v1797 = vmul.f32 %v1755, 0.5
  %v1798 = vmul.f32 %v1756, 0.5
  %v1799 = vmul.f32 %v1757, 0.5
  %v1800 = vmul.f32 %v1758, 0.5
  %v1801 = vmul.f32 %v1759, 0.5
  %v1802 = vmul.f32 %v1760, 0.5
  %v1803 = vmul.f32 %v1761, 0.5
  %v1804 = vmul.f32 %v1762, 0.5
  %v1805 = vmul.f32 %v1763, 0.5
  %v1806 = vmul.f32 %v1764, 0.5
  %v1807 = vmul.f32 %v1765, 0.5
  %v1808 = vmul.f32 %v1766, 0.5
  %v1809 = vmul.f32 %v1767, 0.5
  %v1810 = vtanh.pop %v1768
  %v1811 = vtanh.pop %v1769
  %v1812 = vtanh.pop %v1770
  %v1813 = vtanh.pop %v1771
  %v1814 = vtanh.pop %v1772
  %v1815 = vtanh.pop %v1773
  %v1816 = vtanh.pop %v1774
  %v1817 = vtanh.pop %v1775
  %v1818 = vtanh.pop %v1776
  %v1819 = vtanh.pop %v1777
  %v1820 = vtanh.pop %v1778
  %v1821 = vtanh.pop %v1779
  %v1822 = vtanh.pop %v1780
  %v1823 = vtanh.pop %v1781
  %v1824 = vtanh.pop %v1782
  %v1825 = vtanh.pop %v1783
  %v1826 = vtanh.pop %v1784
  %v1827 = vtanh.pop %v1785
  %v1828 = vtanh.pop %v1786
  %v1829 = vtanh.pop %v1787
  %v1830 = vtanh.pop %v1788
  %v1831 = vtanh.pop %v1789
  %v1832 = vtanh.pop %v1790
  %v1833 = vtanh.pop %v1791
  %v1834 = vtanh.pop %v1792
  %v1835 = vtanh.pop %v1793
  %v1836 = vtanh.pop %v1794
  %v1837 = vtanh.pop %v1795
  %v1838 = vtanh.pop %v1796
  %v1839 = vtanh.pop %v1797
  %v1840 = vtanh.pop %v1798
  %v1841 = vtanh.pop %v1799
  %v1842 = vtanh.pop %v1800
  %v1843 = vtanh.pop %v1801
  %v1844 = vtanh.pop %v1802
  %v1845 = vtanh.pop %v1803
  %v1846 = vtanh.pop %v1804
  %v1847 = vtanh.pop %v1805
  %v1848 = vtanh.pop %v1806
  %v1849 = vtanh.pop %v1807
  %v1850 = vtanh.pop %v1808
  %v1851 = vtanh.pop %v1809
  %v1852 = vmul.f32 %v1810, 0.5
  %v1853 = vmul.f32 %v1811, 0.5
  %v1854 = vmul.f32 %v1812, 0.5
  %v1855 = vmul.f32 %v1813, 0.5
  %v1856 = vmul.f32 %v1814, 0.5
  %v1857 = vmul.f32 %v1815, 0.5
  %v1858 = vmul.f32 %v1816, 0.5
  %v1859 = vmul.f32 %v1817, 0.5
  %v1860 = vmul.f32 %v1818, 0.5
  %v1861 = vmul.f32 %v1819, 0.5
  %v1862 = vmul.f32 %v1820, 0.5
  %v1863 = vmul.f32 %v1821, 0.5
  %v1864 = vmul.f32 %v1822, 0.5
  %v1865 = vmul.f32 %v1823, 0.5
  %v1866 = vmul.f32 %v1824, 0.5
  %v1867 = vmul.f32 %v1825, 0.5
  %v1868 = vmul.f32 %v1826, 0.5
  %v1869 = vmul.f32 %v1827, 0.5
  %v1870 = vmul.f32 %v1828, 0.5
  %v1871 = vmul.f32 %v1829, 0.5
  %v1872 = vmul.f32 %v1830, 0.5
  %v1873 = vmul.f32 %v1831, 0.5
  %v1874 = vmul.f32 %v1832, 0.5
  %v1875 = vmul.f32 %v1833, 0.5
  %v1876 = vmul.f32 %v1834, 0.5
  %v1877 = vmul.f32 %v1835, 0.5
  %v1878 = vmul.f32 %v1836, 0.5
  %v1879 = vmul.f32 %v1837, 0.5
  %v1880 = vmul.f32 %v1838, 0.5
  %v1881 = vmul.f32 %v1839, 0.5
  %v1882 = vmul.f32 %v1840, 0.5
  %v1883 = vmul.f32 %v1841, 0.5
  %v1884 = vmul.f32 %v1842, 0.5
  %v1885 = vmul.f32 %v1843, 0.5
  %v1886 = vmul.f32 %v1844, 0.5
  %v1887 = vmul.f32 %v1845, 0.5
  %v1888 = vmul.f32 %v1846, 0.5
  %v1889 = vmul.f32 %v1847, 0.5
  %v1890 = vmul.f32 %v1848, 0.5
  %v1891 = vmul.f32 %v1849, 0.5
  %v1892 = vmul.f32 %v1850, 0.5
  %v1893 = vmul.f32 %v1851, 0.5
  %v1894 = vadd.f32 %v1852, 0.5
  %v1895 = vadd.f32 %v1853, 0.5
  %v1896 = vadd.f32 %v1854, 0.5
  %v1897 = vadd.f32 %v1855, 0.5
  %v1898 = vadd.f32 %v1856, 0.5
  %v1899 = vadd.f32 %v1857, 0.5
  %v1900 = vadd.f32 %v1858, 0.5
  %v1901 = vadd.f32 %v1859, 0.5
  %v1902 = vadd.f32 %v1860, 0.5
  %v1903 = vadd.f32 %v1861, 0.5
  %v1904 = vadd.f32 %v1862, 0.5
  %v1905 = vadd.f32 %v1863, 0.5
  %v1906 = vadd.f32 %v1864, 0.5
  %v1907 = vadd.f32 %v1865, 0.5
  %v1908 = vadd.f32 %v1866, 0.5
  %v1909 = vadd.f32 %v1867, 0.5
  %v1910 = vadd.f32 %v1868, 0.5
  %v1911 = vadd.f32 %v1869, 0.5
  %v1912 = vadd.f32 %v1870, 0.5
  %v1913 = vadd.f32 %v1871, 0.5
  %v1914 = vadd.f32 %v1872, 0.5
  %v1915 = vadd.f32 %v1873, 0.5
  %v1916 = vadd.f32 %v1874, 0.5
  %v1917 = vadd.f32 %v1875, 0.5
  %v1918 = vadd.f32 %v1876, 0.5
  %v1919 = vadd.f32 %v1877, 0.5
  %v1920 = vadd.f32 %v1878, 0.5
  %v1921 = vadd.f32 %v1879, 0.5
  %v1922 = vadd.f32 %v1880, 0.5
  %v1923 = vadd.f32 %v1881, 0.5
  %v1924 = vadd.f32 %v1882, 0.5
  %v1925 = vadd.f32 %v1883, 0.5
  %v1926 = vadd.f32 %v1884, 0.5
  %v1927 = vadd.f32 %v1885, 0.5
  %v1928 = vadd.f32 %v1886, 0.5
  %v1929 = vadd.f32 %v1887, 0.5
  %v1930 = vadd.f32 %v1888, 0.5
  %v1931 = vadd.f32 %v1889, 0.5
  %v1932 = vadd.f32 %v1890, 0.5
  %v1933 = vadd.f32 %v1891, 0.5
  %v1934 = vadd.f32 %v1892, 0.5
  %v1935 = vadd.f32 %v1893, 0.5
  %v1936 = vld [vmem:[%s3] sm:$0xff]
  %v1937 = vld [vmem:[%s3 + $0x8] sm:$0xff]
  %v1938 = vld [vmem:[%s3 + $0x10] sm:$0xff]
  %v1939 = vld [vmem:[%s3 + $0x18] sm:$0xff]
  %v1940 = vld [vmem:[%s3 + $0x20] sm:$0xff]
  %v1941 = vld [vmem:[%s3 + $0x28] sm:$0xff]
  %v1942 = vld [vmem:[%s3 + $0x30] sm:$0xff]
  %v1943 = vld [vmem:[%s3 + $0x38] sm:$0xff]
  %v1944 = vld [vmem:[%s3 + $0x40] sm:$0xff]
  %v1945 = vld [vmem:[%s3 + $0x48] sm:$0xff]
  %v1946 = vld [vmem:[%s3 + $0x50] sm:$0xff]
  %v1947 = vld [vmem:[%s3 + $0x58] sm:$0xff]
  %v1948 = vld [vmem:[%s3 + $0x60] sm:$0xff]
  %v1949 = vld [vmem:[%s3 + $0x68] sm:$0xff]
  %v1950 = vld [vmem:[%s3 + $0x70] sm:$0xff]
  %v1951 = vld [vmem:[%s3 + $0x78] sm:$0xff]
  %v1952 = vld [vmem:[%s3 + $0x80] sm:$0xff]
  %v1953 = vld [vmem:[%s3 + $0x88] sm:$0xff]
  %v1954 = vld [vmem:[%s3 + $0x90] sm:$0xff]
  %v1955 = vld [vmem:[%s3 + $0x98] sm:$0xff]
  %v1956 = vld [vmem:[%s3 + $0xa0] sm:$0xf]
  %v1957 = vld [vmem:[%s3 + $0xa8] sm:$0xf]
  %vm1958 = vcmask 326656
  %v1960 = vsel %vm1958, %v1937, 0
  %v1963 = vsel %vm1958, %v1939, 0
  %v1966 = vsel %vm1958, %v1941, 0
  %v1969 = vsel %vm1958, %v1943, 0
  %v1972 = vsel %vm1958, %v1945, 0
  %v1975 = vsel %vm1958, %v1947, 0
  %v1978 = vsel %vm1958, %v1949, 0
  %v1981 = vsel %vm1958, %v1951, 0
  %v1984 = vsel %vm1958, %v1953, 0
  %v1987 = vsel %vm1958, %v1955, 0
  %v1990 = vsel %vm1958, %v1957, 0
  %1992 = vmatprep.subr.mxu0 %v1925
  %1993 = vmatpush1.msra.mxu0 %v1924
  %1994 = vmatprep.subr.mxu0 %v1923
  %1995 = vmatpush1.msra.mxu0 %v1922
  %1996 = vmatprep.subr.mxu0 %v1921
  %1997 = vmatpush1.msra.mxu0 %v1920
  %1998 = vmatprep.subr.mxu0 %v1919
  %1999 = vmatpush1.msra.mxu0 %v1918
  %2000 = vmatprep.subr.mxu0 %v1917
  %2001 = vmatpush1.msra.mxu0 %v1916
  %2002 = vmatprep.subr.mxu0 %v1915
  %2003 = vmatpush1.msra.mxu0 %v1914
  %2004 = vmatprep.subr.mxu0 %v1913
  %2005 = vmatpush1.msra.mxu0 %v1912
  %2006 = vmatprep.subr.mxu0 %v1911
  %2007 = vmatpush1.msra.mxu0 %v1910
  %2008 = vmatprep.subr.mxu0 %v1909
  %2009 = vmatpush1.msra.mxu0 %v1908
  %2010 = vmatprep.subr.mxu0 %v1907
  %2011 = vmatpush1.msra.mxu0 %v1906
  %2012 = vmatprep.subr.mxu0 %v1905
  %2013 = vmatpush1.msra.mxu0 %v1904
  %2014 = vmatprep.subr.mxu0 %v1903
  %2015 = vmatpush1.msra.mxu0 %v1902
  %2016 = vmatprep.subr.mxu0 %v1901
  %2017 = vmatpush1.msra.mxu0 %v1900
  %2018 = vmatprep.subr.mxu0 %v1899
  %2019 = vmatpush1.msra.mxu0 %v1898
  %2020 = vmatprep.subr.mxu0 %v1897
  %2021 = vmatpush1.msra.mxu0 %v1896
  %2022 = vmatprep.subr.mxu0 %v1895
  %2023 = vmatpush1.msra.mxu0 %v1894
  %2024 = vmatprep.subr.mxu0 0.0
  %2025 = vmatpush2.msra.mxu0 0.0
  %2026 = vmatprep.subr.mxu0 0.0
  %2027 = vmatpush2.msra.mxu0 0.0
  %2028 = vmatprep.subr.mxu0 0.0
  %2029 = vmatpush2.msra.mxu0 0.0
  %2030 = vmatprep.subr.mxu0 0.0
  %2031 = vmatpush2.msra.mxu0 0.0
  %2032 = vmatprep.subr.mxu0 0.0
  %2033 = vmatpush2.msra.mxu0 0.0
  %2034 = vmatprep.subr.mxu0 0.0
  %2035 = vmatpush2.msra.mxu0 0.0
  %2036 = vmatprep.subr.mxu0 0.0
  %2037 = vmatpush2.msra.mxu0 0.0
  %2038 = vmatprep.subr.mxu0 0.0
  %2039 = vmatpush2.msra.mxu0 0.0
  %2040 = vmatprep.subr.mxu0 0.0
  %2041 = vmatpush2.msra.mxu0 0.0
  %2042 = vmatprep.subr.mxu0 0.0
  %2043 = vmatpush2.msra.mxu0 0.0
  %2044 = vmatprep.subr.mxu0 0.0
  %2045 = vmatpush2.msra.mxu0 0.0
  %2046 = vmatprep.subr.mxu0 %v1935
  %2047 = vmatpush2.msra.mxu0 %v1934
  %2048 = vmatprep.subr.mxu0 %v1933
  %2049 = vmatpush2.msra.mxu0 %v1932
  %2050 = vmatprep.subr.mxu0 %v1931
  %2051 = vmatpush2.msra.mxu0 %v1930
  %2052 = vmatprep.subr.mxu0 %v1929
  %2053 = vmatpush2.msra.mxu0 %v1928
  %2054 = vmatprep.subr.mxu0 %v1927
  %2055 = vmatpush2.msra.mxu0 %v1926
  %2056 = vmatprep.mubr.f32.mxu0 %v1960
  %2057 = vmatmul.mubr.f32.gmra.mxu0 %v1936
  %v2058 = vpop.f32.mrf.mxu0
  %v2059 = vadd.f32 0.0, %v2058
  %v2060 = vpop.f32.mrf.mxu0
  %v2061 = vadd.f32 0.0, %v2060
  %2062 = vmatprep.mubr.f32.mxu0 %v1963
  %2063 = vmatmul.mubr.f32.gmra.mxu0 %v1938
  %v2064 = vpop.f32.mrf.mxu0
  %v2065 = vadd.f32 0.0, %v2064
  %v2066 = vpop.f32.mrf.mxu0
  %v2067 = vadd.f32 0.0, %v2066
  %2068 = vmatprep.mubr.f32.mxu0 %v1966
  %2069 = vmatmul.mubr.f32.gmra.mxu0 %v1940
  %v2070 = vpop.f32.mrf.mxu0
  %v2071 = vadd.f32 0.0, %v2070
  %v2072 = vpop.f32.mrf.mxu0
  %v2073 = vadd.f32 0.0, %v2072
  %2074 = vmatprep.mubr.f32.mxu0 %v1969
  %2075 = vmatmul.mubr.f32.gmra.mxu0 %v1942
  %v2076 = vpop.f32.mrf.mxu0
  %v2077 = vadd.f32 0.0, %v2076
  %v2078 = vpop.f32.mrf.mxu0
  %v2079 = vadd.f32 0.0, %v2078
  %2080 = vmatprep.mubr.f32.mxu0 %v1972
  %2081 = vmatmul.mubr.f32.gmra.mxu0 %v1944
  %v2082 = vpop.f32.mrf.mxu0
  %v2083 = vadd.f32 0.0, %v2082
  %v2084 = vpop.f32.mrf.mxu0
  %v2085 = vadd.f32 0.0, %v2084
  %2086 = vmatprep.mubr.f32.mxu0 %v1975
  %2087 = vmatmul.mubr.f32.gmra.mxu0 %v1946
  %v2088 = vpop.f32.mrf.mxu0
  %v2089 = vadd.f32 0.0, %v2088
  %v2090 = vpop.f32.mrf.mxu0
  %v2091 = vadd.f32 0.0, %v2090
  %2092 = vmatprep.mubr.f32.mxu0 %v1978
  %2093 = vmatmul.mubr.f32.gmra.mxu0 %v1948
  %v2094 = vpop.f32.mrf.mxu0
  %v2095 = vadd.f32 0.0, %v2094
  %v2096 = vpop.f32.mrf.mxu0
  %v2097 = vadd.f32 0.0, %v2096
  %2098 = vmatprep.mubr.f32.mxu0 %v1981
  %2099 = vmatmul.mubr.f32.gmra.mxu0 %v1950
  %v2100 = vpop.f32.mrf.mxu0
  %v2101 = vadd.f32 0.0, %v2100
  %v2102 = vpop.f32.mrf.mxu0
  %v2103 = vadd.f32 0.0, %v2102
  %2104 = vmatprep.mubr.f32.mxu0 %v1984
  %2105 = vmatmul.mubr.f32.gmra.mxu0 %v1952
  %v2106 = vpop.f32.mrf.mxu0
  %v2107 = vadd.f32 0.0, %v2106
  %v2108 = vpop.f32.mrf.mxu0
  %v2109 = vadd.f32 0.0, %v2108
  %2110 = vmatprep.mubr.f32.mxu0 %v1987
  %2111 = vmatmul.mubr.f32.gmra.mxu0 %v1954
  %v2112 = vpop.f32.mrf.mxu0
  %v2113 = vadd.f32 0.0, %v2112
  %v2114 = vpop.f32.mrf.mxu0
  %v2115 = vadd.f32 0.0, %v2114
  %2116 = vmatprep.mubr.f32.mxu0 %v1990
  %2117 = vmatmul.mubr.f32.gmra.mxu0 %v1956
  %v2118 = vpop.f32.mrf.mxu0
  %v2119 = vadd.f32 0.0, %v2118
  %v2120 = vpop.f32.mrf.mxu0
  %v2121 = vadd.f32 0.0, %v2120
  %2122 = vdwg.mxu0
  %v2123 = vld [vmem:[%s4] sm:$0xff]
  %v2124 = vld [vmem:[%s4 + $0x8] sm:$0xff]
  %v2125 = vld [vmem:[%s4 + $0x10] sm:$0xff]
  %v2126 = vld [vmem:[%s4 + $0x18] sm:$0xff]
  %v2127 = vld [vmem:[%s4 + $0x20] sm:$0xff]
  %v2128 = vld [vmem:[%s4 + $0x28] sm:$0xff]
  %v2129 = vld [vmem:[%s4 + $0x30] sm:$0xff]
  %v2130 = vld [vmem:[%s4 + $0x38] sm:$0xff]
  %v2131 = vld [vmem:[%s4 + $0x40] sm:$0xff]
  %v2132 = vld [vmem:[%s4 + $0x48] sm:$0xff]
  %v2133 = vld [vmem:[%s4 + $0x50] sm:$0xff]
  %v2134 = vld [vmem:[%s4 + $0x58] sm:$0xff]
  %v2135 = vld [vmem:[%s4 + $0x60] sm:$0xff]
  %v2136 = vld [vmem:[%s4 + $0x68] sm:$0xff]
  %v2137 = vld [vmem:[%s4 + $0x70] sm:$0xff]
  %v2138 = vld [vmem:[%s4 + $0x78] sm:$0xff]
  %v2139 = vld [vmem:[%s4 + $0x80] sm:$0xff]
  %v2140 = vld [vmem:[%s4 + $0x88] sm:$0xff]
  %v2141 = vld [vmem:[%s4 + $0x90] sm:$0xff]
  %v2142 = vld [vmem:[%s4 + $0x98] sm:$0xff]
  %v2143 = vld [vmem:[%s4 + $0xa0] sm:$0xff]
  %v2144 = vld [vmem:[%s4 + $0xa8] sm:$0xff]
  %v2145 = vld [vmem:[%s4 + $0xb0] sm:$0xff]
  %v2146 = vld [vmem:[%s4 + $0xb8] sm:$0xff]
  %v2147 = vld [vmem:[%s4 + $0xc0] sm:$0xff]
  %v2148 = vld [vmem:[%s4 + $0xc8] sm:$0xff]
  %v2149 = vld [vmem:[%s4 + $0xd0] sm:$0xff]
  %v2150 = vld [vmem:[%s4 + $0xd8] sm:$0xff]
  %v2151 = vld [vmem:[%s4 + $0xe0] sm:$0xff]
  %v2152 = vld [vmem:[%s4 + $0xe8] sm:$0xff]
  %v2153 = vld [vmem:[%s4 + $0xf0] sm:$0xff]
  %v2154 = vld [vmem:[%s4 + $0xf8] sm:$0xff]
  %2155 = vmatprep.subr.mxu0 0.0
  %2156 = vmatpush1.msra.mxu0 %v2138
  %2157 = vmatprep.subr.mxu0 0.0
  %2158 = vmatpush1.msra.mxu0 %v2137
  %2159 = vmatprep.subr.mxu0 0.0
  %2160 = vmatpush1.msra.mxu0 %v2136
  %2161 = vmatprep.subr.mxu0 0.0
  %2162 = vmatpush1.msra.mxu0 %v2135
  %2163 = vmatprep.subr.mxu0 0.0
  %2164 = vmatpush1.msra.mxu0 %v2134
  %2165 = vmatprep.subr.mxu0 0.0
  %2166 = vmatpush1.msra.mxu0 %v2133
  %2167 = vmatprep.subr.mxu0 0.0
  %2168 = vmatpush1.msra.mxu0 %v2132
  %2169 = vmatprep.subr.mxu0 0.0
  %2170 = vmatpush1.msra.mxu0 %v2131
  %2171 = vmatprep.subr.mxu0 0.0
  %2172 = vmatpush1.msra.mxu0 %v2130
  %2173 = vmatprep.subr.mxu0 0.0
  %2174 = vmatpush1.msra.mxu0 %v2129
  %2175 = vmatprep.subr.mxu0 0.0
  %2176 = vmatpush1.msra.mxu0 %v2128
  %2177 = vmatprep.subr.mxu0 0.0
  %2178 = vmatpush1.msra.mxu0 %v2127
  %2179 = vmatprep.subr.mxu0 0.0
  %2180 = vmatpush1.msra.mxu0 %v2126
  %2181 = vmatprep.subr.mxu0 0.0
  %2182 = vmatpush1.msra.mxu0 %v2125
  %2183 = vmatprep.subr.mxu0 0.0
  %2184 = vmatpush1.msra.mxu0 %v2124
  %2185 = vmatprep.subr.mxu0 0.0
  %2186 = vmatpush1.msra.mxu0 %v2123
  %2187 = vmatprep.subr.mxu0 0.0
  %2188 = vmatpush2.msra.mxu0 %v2154
  %2189 = vmatprep.subr.mxu0 0.0
  %2190 = vmatpush2.msra.mxu0 %v2153
  %2191 = vmatprep.subr.mxu0 0.0
  %2192 = vmatpush2.msra.mxu0 %v2152
  %2193 = vmatprep.subr.mxu0 0.0
  %2194 = vmatpush2.msra.mxu0 %v2151
  %2195 = vmatprep.subr.mxu0 0.0
  %2196 = vmatpush2.msra.mxu0 %v2150
  %2197 = vmatprep.subr.mxu0 0.0
  %2198 = vmatpush2.msra.mxu0 %v2149
  %2199 = vmatprep.subr.mxu0 0.0
  %2200 = vmatpush2.msra.mxu0 %v2148
  %2201 = vmatprep.subr.mxu0 0.0
  %2202 = vmatpush2.msra.mxu0 %v2147
  %2203 = vmatprep.subr.mxu0 0.0
  %2204 = vmatpush2.msra.mxu0 %v2146
  %2205 = vmatprep.subr.mxu0 0.0
  %2206 = vmatpush2.msra.mxu0 %v2145
  %2207 = vmatprep.subr.mxu0 0.0
  %2208 = vmatpush2.msra.mxu0 %v2144
  %2209 = vmatprep.subr.mxu0 0.0
  %2210 = vmatpush2.msra.mxu0 %v2143
  %2211 = vmatprep.subr.mxu0 0.0
  %2212 = vmatpush2.msra.mxu0 %v2142
  %2213 = vmatprep.subr.mxu0 0.0
  %2214 = vmatpush2.msra.mxu0 %v2141
  %2215 = vmatprep.subr.mxu0 0.0
  %2216 = vmatpush2.msra.mxu0 %v2140
  %2217 = vmatprep.subr.mxu0 0.0
  %2218 = vmatpush2.msra.mxu0 %v2139
  %2219 = vmatprep.mubr.f32.mxu0 %v2061
  %2220 = vmatmul.mubr.f32.gmra.mxu0 %v2059
  %v2221 = vpop.f32.mrf.mxu0
  %v2222 = vadd.f32 0.0, %v2221
  %v2223 = vpop.f32.mrf.mxu0
  %2224 = vmatprep.mubr.f32.mxu0 %v2067
  %2225 = vmatmul.mubr.f32.gmra.mxu0 %v2065
  %v2226 = vpop.f32.mrf.mxu0
  %v2227 = vadd.f32 0.0, %v2226
  %v2228 = vpop.f32.mrf.mxu0
  %2229 = vmatprep.mubr.f32.mxu0 %v2073
  %2230 = vmatmul.mubr.f32.gmra.mxu0 %v2071
  %v2231 = vpop.f32.mrf.mxu0
  %v2232 = vadd.f32 0.0, %v2231
  %v2233 = vpop.f32.mrf.mxu0
  %2234 = vmatprep.mubr.f32.mxu0 %v2079
  %2235 = vmatmul.mubr.f32.gmra.mxu0 %v2077
  %v2236 = vpop.f32.mrf.mxu0
  %v2237 = vadd.f32 0.0, %v2236
  %v2238 = vpop.f32.mrf.mxu0
  %2239 = vmatprep.mubr.f32.mxu0 %v2085
  %2240 = vmatmul.mubr.f32.gmra.mxu0 %v2083
  %v2241 = vpop.f32.mrf.mxu0
  %v2242 = vadd.f32 0.0, %v2241
  %v2243 = vpop.f32.mrf.mxu0
  %2244 = vmatprep.mubr.f32.mxu0 %v2091
  %2245 = vmatmul.mubr.f32.gmra.mxu0 %v2089
  %v2246 = vpop.f32.mrf.mxu0
  %v2247 = vadd.f32 0.0, %v2246
  %v2248 = vpop.f32.mrf.mxu0
  %2249 = vmatprep.mubr.f32.mxu0 %v2097
  %2250 = vmatmul.mubr.f32.gmra.mxu0 %v2095
  %v2251 = vpop.f32.mrf.mxu0
  %v2252 = vadd.f32 0.0, %v2251
  %v2253 = vpop.f32.mrf.mxu0
  %2254 = vmatprep.mubr.f32.mxu0 %v2103
  %2255 = vmatmul.mubr.f32.gmra.mxu0 %v2101
  %v2256 = vpop.f32.mrf.mxu0
  %v2257 = vadd.f32 0.0, %v2256
  %v2258 = vpop.f32.mrf.mxu0
  %2259 = vmatprep.mubr.f32.mxu0 %v2109
  %2260 = vmatmul.mubr.f32.gmra.mxu0 %v2107
  %v2261 = vpop.f32.mrf.mxu0
  %v2262 = vadd.f32 0.0, %v2261
  %v2263 = vpop.f32.mrf.mxu0
  %2264 = vmatprep.mubr.f32.mxu0 %v2115
  %2265 = vmatmul.mubr.f32.gmra.mxu0 %v2113
  %v2266 = vpop.f32.mrf.mxu0
  %v2267 = vadd.f32 0.0, %v2266
  %v2268 = vpop.f32.mrf.mxu0
  %2269 = vmatprep.mubr.f32.mxu0 %v2121
  %2270 = vmatmul.mubr.f32.gmra.mxu0 %v2119
  %v2271 = vpop.f32.mrf.mxu0
  %v2272 = vadd.f32 0.0, %v2271
  %v2273 = vpop.f32.mrf.mxu0
  %2274 = vdwg.mxu0
  %v2275 = vld [vmem:[%s5] sm:$0xff]
  %v2276 = vld [vmem:[%s5 + $0x8] sm:$0xff]
  %v2277 = vld [vmem:[%s5 + $0x10] sm:$0xff]
  %v2278 = vld [vmem:[%s5 + $0x18] sm:$0xff]
  %v2279 = vld [vmem:[%s5 + $0x20] sm:$0xff]
  %v2280 = vld [vmem:[%s5 + $0x28] sm:$0xff]
  %v2281 = vld [vmem:[%s5 + $0x30] sm:$0xff]
  %v2282 = vld [vmem:[%s5 + $0x38] sm:$0xff]
  %v2283 = vld [vmem:[%s5 + $0x40] sm:$0xff]
  %v2284 = vld [vmem:[%s5 + $0x48] sm:$0xff]
  %v2285 = vld [vmem:[%s5 + $0x50] sm:$0xff]
  %v2286 = vld [vmem:[%s5 + $0x58] sm:$0xff]
  %v2287 = vld [vmem:[%s5 + $0x60] sm:$0xff]
  %v2288 = vld [vmem:[%s5 + $0x68] sm:$0xff]
  %v2289 = vld [vmem:[%s5 + $0x70] sm:$0xff]
  %v2290 = vld [vmem:[%s5 + $0x78] sm:$0xff]
  %v2291 = vld [vmem:[%s5 + $0x80] sm:$0xff]
  %v2292 = vld [vmem:[%s5 + $0x88] sm:$0xff]
  %v2293 = vld [vmem:[%s5 + $0x90] sm:$0xff]
  %v2294 = vld [vmem:[%s5 + $0x98] sm:$0xff]
  %s2295 = scalar_lea.vmem %s4, 256
  %v2296 = vld [vmem:[%s2295] sm:$0xff]
  %v2297 = vld [vmem:[%s2295 + $0x8] sm:$0xff]
  %v2298 = vld [vmem:[%s2295 + $0x10] sm:$0xff]
  %v2299 = vld [vmem:[%s2295 + $0x18] sm:$0xff]
  %v2300 = vld [vmem:[%s2295 + $0x20] sm:$0xff]
  %v2301 = vld [vmem:[%s2295 + $0x28] sm:$0xff]
  %v2302 = vld [vmem:[%s2295 + $0x30] sm:$0xff]
  %v2303 = vld [vmem:[%s2295 + $0x38] sm:$0xff]
  %v2304 = vld [vmem:[%s2295 + $0x40] sm:$0xff]
  %v2305 = vld [vmem:[%s2295 + $0x48] sm:$0xff]
  %v2306 = vld [vmem:[%s2295 + $0x50] sm:$0xff]
  %v2307 = vld [vmem:[%s2295 + $0x58] sm:$0xff]
  %v2308 = vld [vmem:[%s2295 + $0x60] sm:$0xff]
  %v2309 = vld [vmem:[%s2295 + $0x68] sm:$0xff]
  %v2310 = vld [vmem:[%s2295 + $0x70] sm:$0xff]
  %v2311 = vld [vmem:[%s2295 + $0x78] sm:$0xff]
  %v2312 = vld [vmem:[%s2295 + $0x80] sm:$0xff]
  %v2313 = vld [vmem:[%s2295 + $0x88] sm:$0xff]
  %v2314 = vld [vmem:[%s2295 + $0x90] sm:$0xff]
  %v2315 = vld [vmem:[%s2295 + $0x98] sm:$0xff]
  %v2316 = vld [vmem:[%s2295 + $0xa0] sm:$0xff]
  %v2317 = vld [vmem:[%s2295 + $0xa8] sm:$0xff]
  %v2318 = vld [vmem:[%s2295 + $0xb0] sm:$0xff]
  %v2319 = vld [vmem:[%s2295 + $0xb8] sm:$0xff]
  %v2320 = vld [vmem:[%s2295 + $0xc0] sm:$0xff]
  %v2321 = vld [vmem:[%s2295 + $0xc8] sm:$0xff]
  %v2322 = vld [vmem:[%s2295 + $0xd0] sm:$0xff]
  %v2323 = vld [vmem:[%s2295 + $0xd8] sm:$0xff]
  %v2324 = vld [vmem:[%s2295 + $0xe0] sm:$0xff]
  %v2325 = vld [vmem:[%s2295 + $0xe8] sm:$0xff]
  %v2326 = vld [vmem:[%s2295 + $0xf0] sm:$0xff]
  %v2327 = vld [vmem:[%s2295 + $0xf8] sm:$0xff]
  %2328 = vmatprep.subr.mxu0 0.0
  %2329 = vmatpush1.msra.mxu0 %v2311
  %2330 = vmatprep.subr.mxu0 0.0
  %2331 = vmatpush1.msra.mxu0 %v2310
  %2332 = vmatprep.subr.mxu0 0.0
  %2333 = vmatpush1.msra.mxu0 %v2309
  %2334 = vmatprep.subr.mxu0 0.0
  %2335 = vmatpush1.msra.mxu0 %v2308
  %2336 = vmatprep.subr.mxu0 0.0
  %2337 = vmatpush1.msra.mxu0 %v2307
  %2338 = vmatprep.subr.mxu0 0.0
  %2339 = vmatpush1.msra.mxu0 %v2306
  %2340 = vmatprep.subr.mxu0 0.0
  %2341 = vmatpush1.msra.mxu0 %v2305
  %2342 = vmatprep.subr.mxu0 0.0
  %2343 = vmatpush1.msra.mxu0 %v2304
  %2344 = vmatprep.subr.mxu0 0.0
  %2345 = vmatpush1.msra.mxu0 %v2303
  %2346 = vmatprep.subr.mxu0 0.0
  %2347 = vmatpush1.msra.mxu0 %v2302
  %2348 = vmatprep.subr.mxu0 0.0
  %2349 = vmatpush1.msra.mxu0 %v2301
  %2350 = vmatprep.subr.mxu0 0.0
  %2351 = vmatpush1.msra.mxu0 %v2300
  %2352 = vmatprep.subr.mxu0 0.0
  %2353 = vmatpush1.msra.mxu0 %v2299
  %2354 = vmatprep.subr.mxu0 0.0
  %2355 = vmatpush1.msra.mxu0 %v2298
  %2356 = vmatprep.subr.mxu0 0.0
  %2357 = vmatpush1.msra.mxu0 %v2297
  %2358 = vmatprep.subr.mxu0 0.0
  %2359 = vmatpush1.msra.mxu0 %v2296
  %2360 = vmatprep.subr.mxu0 0.0
  %2361 = vmatpush2.msra.mxu0 %v2327
  %2362 = vmatprep.subr.mxu0 0.0
  %2363 = vmatpush2.msra.mxu0 %v2326
  %2364 = vmatprep.subr.mxu0 0.0
  %2365 = vmatpush2.msra.mxu0 %v2325
  %2366 = vmatprep.subr.mxu0 0.0
  %2367 = vmatpush2.msra.mxu0 %v2324
  %2368 = vmatprep.subr.mxu0 0.0
  %2369 = vmatpush2.msra.mxu0 %v2323
  %2370 = vmatprep.subr.mxu0 0.0
  %2371 = vmatpush2.msra.mxu0 %v2322
  %2372 = vmatprep.subr.mxu0 0.0
  %2373 = vmatpush2.msra.mxu0 %v2321
  %2374 = vmatprep.subr.mxu0 0.0
  %2375 = vmatpush2.msra.mxu0 %v2320
  %2376 = vmatprep.subr.mxu0 0.0
  %2377 = vmatpush2.msra.mxu0 %v2319
  %2378 = vmatprep.subr.mxu0 0.0
  %2379 = vmatpush2.msra.mxu0 %v2318
  %2380 = vmatprep.subr.mxu0 0.0
  %2381 = vmatpush2.msra.mxu0 %v2317
  %2382 = vmatprep.subr.mxu0 0.0
  %2383 = vmatpush2.msra.mxu0 %v2316
  %2384 = vmatprep.subr.mxu0 0.0
  %2385 = vmatpush2.msra.mxu0 %v2315
  %2386 = vmatprep.subr.mxu0 0.0
  %2387 = vmatpush2.msra.mxu0 %v2314
  %2388 = vmatprep.subr.mxu0 0.0
  %2389 = vmatpush2.msra.mxu0 %v2313
  %2390 = vmatprep.subr.mxu0 0.0
  %2391 = vmatpush2.msra.mxu0 %v2312
  %2392 = vmatprep.mubr.f32.mxu0 %v2061
  %2393 = vmatmul.mubr.f32.gmra.mxu0 %v2059
  %v2394 = vpop.f32.mrf.mxu0
  %v2395 = vadd.f32 0.0, %v2394
  %v2396 = vpop.f32.mrf.mxu0
  %2397 = vmatprep.mubr.f32.mxu0 %v2067
  %2398 = vmatmul.mubr.f32.gmra.mxu0 %v2065
  %v2399 = vpop.f32.mrf.mxu0
  %v2400 = vadd.f32 0.0, %v2399
  %v2401 = vpop.f32.mrf.mxu0
  %2402 = vmatprep.mubr.f32.mxu0 %v2073
  %2403 = vmatmul.mubr.f32.gmra.mxu0 %v2071
  %v2404 = vpop.f32.mrf.mxu0
  %v2405 = vadd.f32 0.0, %v2404
  %v2406 = vpop.f32.mrf.mxu0
  %2407 = vmatprep.mubr.f32.mxu0 %v2079
  %2408 = vmatmul.mubr.f32.gmra.mxu0 %v2077
  %v2409 = vpop.f32.mrf.mxu0
  %v2410 = vadd.f32 0.0, %v2409
  %v2411 = vpop.f32.mrf.mxu0
  %2412 = vmatprep.mubr.f32.mxu0 %v2085
  %2413 = vmatmul.mubr.f32.gmra.mxu0 %v2083
  %v2414 = vpop.f32.mrf.mxu0
  %v2415 = vadd.f32 0.0, %v2414
  %v2416 = vpop.f32.mrf.mxu0
  %2417 = vmatprep.mubr.f32.mxu0 %v2091
  %2418 = vmatmul.mubr.f32.gmra.mxu0 %v2089
  %v2419 = vpop.f32.mrf.mxu0
  %v2420 = vadd.f32 0.0, %v2419
  %v2421 = vpop.f32.mrf.mxu0
  %2422 = vmatprep.mubr.f32.mxu0 %v2097
  %2423 = vmatmul.mubr.f32.gmra.mxu0 %v2095
  %v2424 = vpop.f32.mrf.mxu0
  %v2425 = vadd.f32 0.0, %v2424
  %v2426 = vpop.f32.mrf.mxu0
  %2427 = vmatprep.mubr.f32.mxu0 %v2103
  %2428 = vmatmul.mubr.f32.gmra.mxu0 %v2101
  %v2429 = vpop.f32.mrf.mxu0
  %v2430 = vadd.f32 0.0, %v2429
  %v2431 = vpop.f32.mrf.mxu0
  %2432 = vmatprep.mubr.f32.mxu0 %v2109
  %2433 = vmatmul.mubr.f32.gmra.mxu0 %v2107
  %v2434 = vpop.f32.mrf.mxu0
  %v2435 = vadd.f32 0.0, %v2434
  %v2436 = vpop.f32.mrf.mxu0
  %2437 = vmatprep.mubr.f32.mxu0 %v2115
  %2438 = vmatmul.mubr.f32.gmra.mxu0 %v2113
  %v2439 = vpop.f32.mrf.mxu0
  %v2440 = vadd.f32 0.0, %v2439
  %v2441 = vpop.f32.mrf.mxu0
  %2442 = vmatprep.mubr.f32.mxu0 %v2121
  %2443 = vmatmul.mubr.f32.gmra.mxu0 %v2119
  %v2444 = vpop.f32.mrf.mxu0
  %v2445 = vadd.f32 0.0, %v2444
  %v2446 = vpop.f32.mrf.mxu0
  %2447 = vdwg.mxu0
  %s2448 = scalar_lea.vmem %s5, 160
  %v2449 = vld [vmem:[%s2448] sm:$0xff]
  %v2450 = vld [vmem:[%s2448 + $0x8] sm:$0xff]
  %v2451 = vld [vmem:[%s2448 + $0x10] sm:$0xff]
  %v2452 = vld [vmem:[%s2448 + $0x18] sm:$0xff]
  %v2453 = vld [vmem:[%s2448 + $0x20] sm:$0xff]
  %v2454 = vld [vmem:[%s2448 + $0x28] sm:$0xff]
  %v2455 = vld [vmem:[%s2448 + $0x30] sm:$0xff]
  %v2456 = vld [vmem:[%s2448 + $0x38] sm:$0xff]
  %v2457 = vld [vmem:[%s2448 + $0x40] sm:$0xff]
  %v2458 = vld [vmem:[%s2448 + $0x48] sm:$0xff]
  %v2459 = vld [vmem:[%s2448 + $0x50] sm:$0xff]
  %v2460 = vld [vmem:[%s2448 + $0x58] sm:$0xff]
  %v2461 = vld [vmem:[%s2448 + $0x60] sm:$0xff]
  %v2462 = vld [vmem:[%s2448 + $0x68] sm:$0xff]
  %v2463 = vld [vmem:[%s2448 + $0x70] sm:$0xff]
  %v2464 = vld [vmem:[%s2448 + $0x78] sm:$0xff]
  %v2465 = vld [vmem:[%s2448 + $0x80] sm:$0xff]
  %v2466 = vld [vmem:[%s2448 + $0x88] sm:$0xff]
  %v2467 = vld [vmem:[%s2448 + $0x90] sm:$0xff]
  %v2468 = vld [vmem:[%s2448 + $0x98] sm:$0xff]
  %vm2469 = vcmask 687104
  %v2471 = vsel %vm2469, %v2449, 0
  %v2474 = vsel %vm2469, %v2450, 0
  %v2477 = vsel %vm2469, %v2451, 0
  %v2480 = vsel %vm2469, %v2452, 0
  %v2483 = vsel %vm2469, %v2453, 0
  %v2486 = vsel %vm2469, %v2454, 0
  %v2489 = vsel %vm2469, %v2455, 0
  %v2492 = vsel %vm2469, %v2456, 0
  %v2495 = vsel %vm2469, %v2457, 0
  %v2498 = vsel %vm2469, %v2458, 0
  %v2501 = vsel %vm2469, %v2459, 0
  %v2504 = vsel %vm2469, %v2460, 0
  %v2507 = vsel %vm2469, %v2461, 0
  %v2510 = vsel %vm2469, %v2462, 0
  %v2513 = vsel %vm2469, %v2463, 0
  %v2516 = vsel %vm2469, %v2464, 0
  %v2519 = vsel %vm2469, %v2465, 0
  %v2522 = vsel %vm2469, %v2466, 0
  %v2525 = vsel %vm2469, %v2467, 0
  %v2528 = vsel %vm2469, %v2468, 0
  %vm2530 = vcmask 1043456
  %v2532 = vsel %vm2530, %v2445, 0
  %2534 = vmatprep.subr.mxu0 0.0
  %2535 = vmatpush1.msra.mxu0 0.0
  %2536 = vmatprep.subr.mxu0 0.0
  %2537 = vmatpush1.msra.mxu0 0.0
  %2538 = vmatprep.subr.mxu0 0.0
  %2539 = vmatpush1.msra.mxu0 0.0
  %2540 = vmatprep.subr.mxu0 0.0
  %2541 = vmatpush1.msra.mxu0 0.0
  %2542 = vmatprep.subr.mxu0 0.0
  %2543 = vmatpush1.msra.mxu0 0.0
  %2544 = vmatprep.subr.mxu0 0.0
  %2545 = vmatpush1.msra.mxu0 %v2532
  %2546 = vmatprep.subr.mxu0 0.0
  %2547 = vmatpush1.msra.mxu0 %v2440
  %2548 = vmatprep.subr.mxu0 0.0
  %2549 = vmatpush1.msra.mxu0 %v2435
  %2550 = vmatprep.subr.mxu0 0.0
  %2551 = vmatpush1.msra.mxu0 %v2430
  %2552 = vmatprep.subr.mxu0 0.0
  %2553 = vmatpush1.msra.mxu0 %v2425
  %2554 = vmatprep.subr.mxu0 0.0
  %2555 = vmatpush1.msra.mxu0 %v2420
  %2556 = vmatprep.subr.mxu0 0.0
  %2557 = vmatpush1.msra.mxu0 %v2415
  %2558 = vmatprep.subr.mxu0 0.0
  %2559 = vmatpush1.msra.mxu0 %v2410
  %2560 = vmatprep.subr.mxu0 0.0
  %2561 = vmatpush1.msra.mxu0 %v2405
  %2562 = vmatprep.subr.mxu0 0.0
  %2563 = vmatpush1.msra.mxu0 %v2400
  %2564 = vmatprep.subr.mxu0 0.0
  %2565 = vmatpush1.msra.mxu0 %v2395
  %2566 = vmatprep.subr.mxu0 0.0
  %2567 = vmatpush2.msra.mxu0 0.0
  %2568 = vmatprep.subr.mxu0 0.0
  %2569 = vmatpush2.msra.mxu0 0.0
  %2570 = vmatprep.subr.mxu0 0.0
  %2571 = vmatpush2.msra.mxu0 0.0
  %2572 = vmatprep.subr.mxu0 0.0
  %2573 = vmatpush2.msra.mxu0 0.0
  %2574 = vmatprep.subr.mxu0 0.0
  %2575 = vmatpush2.msra.mxu0 0.0
  %2576 = vmatprep.subr.mxu0 0.0
  %2577 = vmatpush2.msra.mxu0 0.0
  %2578 = vmatprep.subr.mxu0 0.0
  %2579 = vmatpush2.msra.mxu0 0.0
  %2580 = vmatprep.subr.mxu0 0.0
  %2581 = vmatpush2.msra.mxu0 0.0
  %2582 = vmatprep.subr.mxu0 0.0
  %2583 = vmatpush2.msra.mxu0 0.0
  %2584 = vmatprep.subr.mxu0 0.0
  %2585 = vmatpush2.msra.mxu0 0.0
  %2586 = vmatprep.subr.mxu0 0.0
  %2587 = vmatpush2.msra.mxu0 0.0
  %2588 = vmatprep.subr.mxu0 0.0
  %2589 = vmatpush2.msra.mxu0 0.0
  %2590 = vmatprep.subr.mxu0 0.0
  %2591 = vmatpush2.msra.mxu0 0.0
  %2592 = vmatprep.subr.mxu0 0.0
  %2593 = vmatpush2.msra.mxu0 0.0
  %2594 = vmatprep.subr.mxu0 0.0
  %2595 = vmatpush2.msra.mxu0 0.0
  %2596 = vmatprep.subr.mxu0 0.0
  %2597 = vmatpush2.msra.mxu0 0.0
  %2598 = vmatprep.mubr.f32.mxu0 0.0
  %2599 = vmatmul.mubr.f32.gmra.mxu0 %v2471
  %v2600 = vpop.f32.mrf.mxu0
  %v2601 = vadd.f32 0.0, %v2600
  %v2602 = vpop.f32.mrf.mxu0
  %2603 = vmatprep.mubr.f32.mxu0 0.0
  %2604 = vmatmul.mubr.f32.gmra.mxu0 %v2474
  %v2605 = vpop.f32.mrf.mxu0
  %v2606 = vadd.f32 0.0, %v2605
  %v2607 = vpop.f32.mrf.mxu0
  %2608 = vmatprep.mubr.f32.mxu0 0.0
  %2609 = vmatmul.mubr.f32.gmra.mxu0 %v2477
  %v2610 = vpop.f32.mrf.mxu0
  %v2611 = vadd.f32 0.0, %v2610
  %v2612 = vpop.f32.mrf.mxu0
  %2613 = vmatprep.mubr.f32.mxu0 0.0
  %2614 = vmatmul.mubr.f32.gmra.mxu0 %v2480
  %v2615 = vpop.f32.mrf.mxu0
  %v2616 = vadd.f32 0.0, %v2615
  %v2617 = vpop.f32.mrf.mxu0
  %2618 = vmatprep.mubr.f32.mxu0 0.0
  %2619 = vmatmul.mubr.f32.gmra.mxu0 %v2483
  %v2620 = vpop.f32.mrf.mxu0
  %v2621 = vadd.f32 0.0, %v2620
  %v2622 = vpop.f32.mrf.mxu0
  %2623 = vmatprep.mubr.f32.mxu0 0.0
  %2624 = vmatmul.mubr.f32.gmra.mxu0 %v2486
  %v2625 = vpop.f32.mrf.mxu0
  %v2626 = vadd.f32 0.0, %v2625
  %v2627 = vpop.f32.mrf.mxu0
  %2628 = vmatprep.mubr.f32.mxu0 0.0
  %2629 = vmatmul.mubr.f32.gmra.mxu0 %v2489
  %v2630 = vpop.f32.mrf.mxu0
  %v2631 = vadd.f32 0.0, %v2630
  %v2632 = vpop.f32.mrf.mxu0
  %2633 = vmatprep.mubr.f32.mxu0 0.0
  %2634 = vmatmul.mubr.f32.gmra.mxu0 %v2492
  %v2635 = vpop.f32.mrf.mxu0
  %v2636 = vadd.f32 0.0, %v2635
  %v2637 = vpop.f32.mrf.mxu0
  %2638 = vmatprep.mubr.f32.mxu0 0.0
  %2639 = vmatmul.mubr.f32.gmra.mxu0 %v2495
  %v2640 = vpop.f32.mrf.mxu0
  %v2641 = vadd.f32 0.0, %v2640
  %v2642 = vpop.f32.mrf.mxu0
  %2643 = vmatprep.mubr.f32.mxu0 0.0
  %2644 = vmatmul.mubr.f32.gmra.mxu0 %v2498
  %v2645 = vpop.f32.mrf.mxu0
  %v2646 = vadd.f32 0.0, %v2645
  %v2647 = vpop.f32.mrf.mxu0
  %2648 = vmatprep.mubr.f32.mxu0 0.0
  %2649 = vmatmul.mubr.f32.gmra.mxu0 %v2501
  %v2650 = vpop.f32.mrf.mxu0
  %v2651 = vadd.f32 0.0, %v2650
  %v2652 = vpop.f32.mrf.mxu0
  %2653 = vmatprep.mubr.f32.mxu0 0.0
  %2654 = vmatmul.mubr.f32.gmra.mxu0 %v2504
  %v2655 = vpop.f32.mrf.mxu0
  %v2656 = vadd.f32 0.0, %v2655
  %v2657 = vpop.f32.mrf.mxu0
  %2658 = vmatprep.mubr.f32.mxu0 0.0
  %2659 = vmatmul.mubr.f32.gmra.mxu0 %v2507
  %v2660 = vpop.f32.mrf.mxu0
  %v2661 = vadd.f32 0.0, %v2660
  %v2662 = vpop.f32.mrf.mxu0
  %2663 = vmatprep.mubr.f32.mxu0 0.0
  %2664 = vmatmul.mubr.f32.gmra.mxu0 %v2510
  %v2665 = vpop.f32.mrf.mxu0
  %v2666 = vadd.f32 0.0, %v2665
  %v2667 = vpop.f32.mrf.mxu0
  %2668 = vmatprep.mubr.f32.mxu0 0.0
  %2669 = vmatmul.mubr.f32.gmra.mxu0 %v2513
  %v2670 = vpop.f32.mrf.mxu0
  %v2671 = vadd.f32 0.0, %v2670
  %v2672 = vpop.f32.mrf.mxu0
  %2673 = vmatprep.mubr.f32.mxu0 0.0
  %2674 = vmatmul.mubr.f32.gmra.mxu0 %v2516
  %v2675 = vpop.f32.mrf.mxu0
  %v2676 = vadd.f32 0.0, %v2675
  %v2677 = vpop.f32.mrf.mxu0
  %2678 = vmatprep.mubr.f32.mxu0 0.0
  %2679 = vmatmul.mubr.f32.gmra.mxu0 %v2519
  %v2680 = vpop.f32.mrf.mxu0
  %v2681 = vadd.f32 0.0, %v2680
  %v2682 = vpop.f32.mrf.mxu0
  %2683 = vmatprep.mubr.f32.mxu0 0.0
  %2684 = vmatmul.mubr.f32.gmra.mxu0 %v2522
  %v2685 = vpop.f32.mrf.mxu0
  %v2686 = vadd.f32 0.0, %v2685
  %v2687 = vpop.f32.mrf.mxu0
  %2688 = vmatprep.mubr.f32.mxu0 0.0
  %2689 = vmatmul.mubr.f32.gmra.mxu0 %v2525
  %v2690 = vpop.f32.mrf.mxu0
  %v2691 = vadd.f32 0.0, %v2690
  %v2692 = vpop.f32.mrf.mxu0
  %2693 = vmatprep.mubr.f32.mxu0 0.0
  %2694 = vmatmul.mubr.f32.gmra.mxu0 %v2528
  %v2695 = vpop.f32.mrf.mxu0
  %v2696 = vadd.f32 0.0, %v2695
  %v2697 = vpop.f32.mrf.mxu0
  %2698 = vdwg.mxu0
  %v2700 = vsel %vm2469, %v2275, 0
  %v2703 = vsel %vm2469, %v2276, 0
  %v2706 = vsel %vm2469, %v2277, 0
  %v2709 = vsel %vm2469, %v2278, 0
  %v2712 = vsel %vm2469, %v2279, 0
  %v2715 = vsel %vm2469, %v2280, 0
  %v2718 = vsel %vm2469, %v2281, 0
  %v2721 = vsel %vm2469, %v2282, 0
  %v2724 = vsel %vm2469, %v2283, 0
  %v2727 = vsel %vm2469, %v2284, 0
  %v2730 = vsel %vm2469, %v2285, 0
  %v2733 = vsel %vm2469, %v2286, 0
  %v2736 = vsel %vm2469, %v2287, 0
  %v2739 = vsel %vm2469, %v2288, 0
  %v2742 = vsel %vm2469, %v2289, 0
  %v2745 = vsel %vm2469, %v2290, 0
  %v2748 = vsel %vm2469, %v2291, 0
  %v2751 = vsel %vm2469, %v2292, 0
  %v2754 = vsel %vm2469, %v2293, 0
  %v2757 = vsel %vm2469, %v2294, 0
  %v2760 = vsel %vm2530, %v2272, 0
  %2762 = vmatprep.subr.mxu0 0.0
  %2763 = vmatpush1.msra.mxu0 0.0
  %2764 = vmatprep.subr.mxu0 0.0
  %2765 = vmatpush1.msra.mxu0 0.0
  %2766 = vmatprep.subr.mxu0 0.0
  %2767 = vmatpush1.msra.mxu0 0.0
  %2768 = vmatprep.subr.mxu0 0.0
  %2769 = vmatpush1.msra.mxu0 0.0
  %2770 = vmatprep.subr.mxu0 0.0
  %2771 = vmatpush1.msra.mxu0 0.0
  %2772 = vmatprep.subr.mxu0 0.0
  %2773 = vmatpush1.msra.mxu0 %v2760
  %2774 = vmatprep.subr.mxu0 0.0
  %2775 = vmatpush1.msra.mxu0 %v2267
  %2776 = vmatprep.subr.mxu0 0.0
  %2777 = vmatpush1.msra.mxu0 %v2262
  %2778 = vmatprep.subr.mxu0 0.0
  %2779 = vmatpush1.msra.mxu0 %v2257
  %2780 = vmatprep.subr.mxu0 0.0
  %2781 = vmatpush1.msra.mxu0 %v2252
  %2782 = vmatprep.subr.mxu0 0.0
  %2783 = vmatpush1.msra.mxu0 %v2247
  %2784 = vmatprep.subr.mxu0 0.0
  %2785 = vmatpush1.msra.mxu0 %v2242
  %2786 = vmatprep.subr.mxu0 0.0
  %2787 = vmatpush1.msra.mxu0 %v2237
  %2788 = vmatprep.subr.mxu0 0.0
  %2789 = vmatpush1.msra.mxu0 %v2232
  %2790 = vmatprep.subr.mxu0 0.0
  %2791 = vmatpush1.msra.mxu0 %v2227
  %2792 = vmatprep.subr.mxu0 0.0
  %2793 = vmatpush1.msra.mxu0 %v2222
  %2794 = vmatprep.subr.mxu0 0.0
  %2795 = vmatpush2.msra.mxu0 0.0
  %2796 = vmatprep.subr.mxu0 0.0
  %2797 = vmatpush2.msra.mxu0 0.0
  %2798 = vmatprep.subr.mxu0 0.0
  %2799 = vmatpush2.msra.mxu0 0.0
  %2800 = vmatprep.subr.mxu0 0.0
  %2801 = vmatpush2.msra.mxu0 0.0
  %2802 = vmatprep.subr.mxu0 0.0
  %2803 = vmatpush2.msra.mxu0 0.0
  %2804 = vmatprep.subr.mxu0 0.0
  %2805 = vmatpush2.msra.mxu0 0.0
  %2806 = vmatprep.subr.mxu0 0.0
  %2807 = vmatpush2.msra.mxu0 0.0
  %2808 = vmatprep.subr.mxu0 0.0
  %2809 = vmatpush2.msra.mxu0 0.0
  %2810 = vmatprep.subr.mxu0 0.0
  %2811 = vmatpush2.msra.mxu0 0.0
  %2812 = vmatprep.subr.mxu0 0.0
  %2813 = vmatpush2.msra.mxu0 0.0
  %2814 = vmatprep.subr.mxu0 0.0
  %2815 = vmatpush2.msra.mxu0 0.0
  %2816 = vmatprep.subr.mxu0 0.0
  %2817 = vmatpush2.msra.mxu0 0.0
  %2818 = vmatprep.subr.mxu0 0.0
  %2819 = vmatpush2.msra.mxu0 0.0
  %2820 = vmatprep.subr.mxu0 0.0
  %2821 = vmatpush2.msra.mxu0 0.0
  %2822 = vmatprep.subr.mxu0 0.0
  %2823 = vmatpush2.msra.mxu0 0.0
  %2824 = vmatprep.subr.mxu0 0.0
  %2825 = vmatpush2.msra.mxu0 0.0
  %2826 = vmatprep.mubr.f32.mxu0 0.0
  %2827 = vmatmul.mubr.f32.gmra.mxu0 %v2700
  %v2828 = vpop.f32.mrf.mxu0
  %v2829 = vadd.f32 %v2601, %v2828
  %v2830 = vpop.f32.mrf.mxu0
  %2831 = vmatprep.mubr.f32.mxu0 0.0
  %2832 = vmatmul.mubr.f32.gmra.mxu0 %v2703
  %v2833 = vpop.f32.mrf.mxu0
  %v2834 = vadd.f32 %v2606, %v2833
  %v2835 = vpop.f32.mrf.mxu0
  %2836 = vmatprep.mubr.f32.mxu0 0.0
  %2837 = vmatmul.mubr.f32.gmra.mxu0 %v2706
  %v2838 = vpop.f32.mrf.mxu0
  %v2839 = vadd.f32 %v2611, %v2838
  %v2840 = vpop.f32.mrf.mxu0
  %2841 = vmatprep.mubr.f32.mxu0 0.0
  %2842 = vmatmul.mubr.f32.gmra.mxu0 %v2709
  %v2843 = vpop.f32.mrf.mxu0
  %v2844 = vadd.f32 %v2616, %v2843
  %v2845 = vpop.f32.mrf.mxu0
  %2846 = vmatprep.mubr.f32.mxu0 0.0
  %2847 = vmatmul.mubr.f32.gmra.mxu0 %v2712
  %v2848 = vpop.f32.mrf.mxu0
  %v2849 = vadd.f32 %v2621, %v2848
  %v2850 = vpop.f32.mrf.mxu0
  %2851 = vmatprep.mubr.f32.mxu0 0.0
  %2852 = vmatmul.mubr.f32.gmra.mxu0 %v2715
  %v2853 = vpop.f32.mrf.mxu0
  %v2854 = vadd.f32 %v2626, %v2853
  %v2855 = vpop.f32.mrf.mxu0
  %2856 = vmatprep.mubr.f32.mxu0 0.0
  %2857 = vmatmul.mubr.f32.gmra.mxu0 %v2718
  %v2858 = vpop.f32.mrf.mxu0
  %v2859 = vadd.f32 %v2631, %v2858
  %v2860 = vpop.f32.mrf.mxu0
  %2861 = vmatprep.mubr.f32.mxu0 0.0
  %2862 = vmatmul.mubr.f32.gmra.mxu0 %v2721
  %v2863 = vpop.f32.mrf.mxu0
  %v2864 = vadd.f32 %v2636, %v2863
  %v2865 = vpop.f32.mrf.mxu0
  %2866 = vmatprep.mubr.f32.mxu0 0.0
  %2867 = vmatmul.mubr.f32.gmra.mxu0 %v2724
  %v2868 = vpop.f32.mrf.mxu0
  %v2869 = vadd.f32 %v2641, %v2868
  %v2870 = vpop.f32.mrf.mxu0
  %2871 = vmatprep.mubr.f32.mxu0 0.0
  %2872 = vmatmul.mubr.f32.gmra.mxu0 %v2727
  %v2873 = vpop.f32.mrf.mxu0
  %v2874 = vadd.f32 %v2646, %v2873
  %v2875 = vpop.f32.mrf.mxu0
  %2876 = vmatprep.mubr.f32.mxu0 0.0
  %2877 = vmatmul.mubr.f32.gmra.mxu0 %v2730
  %v2878 = vpop.f32.mrf.mxu0
  %v2879 = vadd.f32 %v2651, %v2878
  %v2880 = vpop.f32.mrf.mxu0
  %2881 = vmatprep.mubr.f32.mxu0 0.0
  %2882 = vmatmul.mubr.f32.gmra.mxu0 %v2733
  %v2883 = vpop.f32.mrf.mxu0
  %v2884 = vadd.f32 %v2656, %v2883
  %v2885 = vpop.f32.mrf.mxu0
  %2886 = vmatprep.mubr.f32.mxu0 0.0
  %2887 = vmatmul.mubr.f32.gmra.mxu0 %v2736
  %v2888 = vpop.f32.mrf.mxu0
  %v2889 = vadd.f32 %v2661, %v2888
  %v2890 = vpop.f32.mrf.mxu0
  %2891 = vmatprep.mubr.f32.mxu0 0.0
  %2892 = vmatmul.mubr.f32.gmra.mxu0 %v2739
  %v2893 = vpop.f32.mrf.mxu0
  %v2894 = vadd.f32 %v2666, %v2893
  %v2895 = vpop.f32.mrf.mxu0
  %2896 = vmatprep.mubr.f32.mxu0 0.0
  %2897 = vmatmul.mubr.f32.gmra.mxu0 %v2742
  %v2898 = vpop.f32.mrf.mxu0
  %v2899 = vadd.f32 %v2671, %v2898
  %v2900 = vpop.f32.mrf.mxu0
  %2901 = vmatprep.mubr.f32.mxu0 0.0
  %2902 = vmatmul.mubr.f32.gmra.mxu0 %v2745
  %v2903 = vpop.f32.mrf.mxu0
  %v2904 = vadd.f32 %v2676, %v2903
  %v2905 = vpop.f32.mrf.mxu0
  %2906 = vmatprep.mubr.f32.mxu0 0.0
  %2907 = vmatmul.mubr.f32.gmra.mxu0 %v2748
  %v2908 = vpop.f32.mrf.mxu0
  %v2909 = vadd.f32 %v2681, %v2908
  %v2910 = vpop.f32.mrf.mxu0
  %2911 = vmatprep.mubr.f32.mxu0 0.0
  %2912 = vmatmul.mubr.f32.gmra.mxu0 %v2751
  %v2913 = vpop.f32.mrf.mxu0
  %v2914 = vadd.f32 %v2686, %v2913
  %v2915 = vpop.f32.mrf.mxu0
  %2916 = vmatprep.mubr.f32.mxu0 0.0
  %2917 = vmatmul.mubr.f32.gmra.mxu0 %v2754
  %v2918 = vpop.f32.mrf.mxu0
  %v2919 = vadd.f32 %v2691, %v2918
  %v2920 = vpop.f32.mrf.mxu0
  %2921 = vmatprep.mubr.f32.mxu0 0.0
  %2922 = vmatmul.mubr.f32.gmra.mxu0 %v2757
  %v2923 = vpop.f32.mrf.mxu0
  %v2924 = vadd.f32 %v2696, %v2923
  %v2925 = vpop.f32.mrf.mxu0
  %2926 = vdwg.mxu0
  %s2927 = scalar_lea.vmem %s4, 512
  %v2928 = vld [vmem:[%s2927] sm:$0xff]
  %v2929 = vld [vmem:[%s2927 + $0x8] sm:$0xff]
  %v2930 = vld [vmem:[%s2927 + $0x10] sm:$0xff]
  %v2931 = vld [vmem:[%s2927 + $0x18] sm:$0xff]
  %v2932 = vld [vmem:[%s2927 + $0x20] sm:$0xff]
  %v2933 = vld [vmem:[%s2927 + $0x28] sm:$0xff]
  %v2934 = vld [vmem:[%s2927 + $0x30] sm:$0xff]
  %v2935 = vld [vmem:[%s2927 + $0x38] sm:$0xff]
  %v2936 = vld [vmem:[%s2927 + $0x40] sm:$0xff]
  %v2937 = vld [vmem:[%s2927 + $0x48] sm:$0xff]
  %v2938 = vld [vmem:[%s2927 + $0x50] sm:$0xff]
  %v2939 = vld [vmem:[%s2927 + $0x58] sm:$0xff]
  %v2940 = vld [vmem:[%s2927 + $0x60] sm:$0xff]
  %v2941 = vld [vmem:[%s2927 + $0x68] sm:$0xff]
  %v2942 = vld [vmem:[%s2927 + $0x70] sm:$0xff]
  %v2943 = vld [vmem:[%s2927 + $0x78] sm:$0xff]
  %v2944 = vld [vmem:[%s2927 + $0x80] sm:$0xff]
  %v2945 = vld [vmem:[%s2927 + $0x88] sm:$0xff]
  %v2946 = vld [vmem:[%s2927 + $0x90] sm:$0xff]
  %v2947 = vld [vmem:[%s2927 + $0x98] sm:$0xff]
  %v2948 = vld [vmem:[%s2927 + $0xa0] sm:$0xff]
  %v2949 = vld [vmem:[%s2927 + $0xa8] sm:$0xff]
  %v2950 = vld [vmem:[%s2927 + $0xb0] sm:$0xff]
  %v2951 = vld [vmem:[%s2927 + $0xb8] sm:$0xff]
  %v2952 = vld [vmem:[%s2927 + $0xc0] sm:$0xff]
  %v2953 = vld [vmem:[%s2927 + $0xc8] sm:$0xff]
  %v2954 = vld [vmem:[%s2927 + $0xd0] sm:$0xff]
  %v2955 = vld [vmem:[%s2927 + $0xd8] sm:$0xff]
  %v2956 = vld [vmem:[%s2927 + $0xe0] sm:$0xff]
  %v2957 = vld [vmem:[%s2927 + $0xe8] sm:$0xff]
  %v2958 = vld [vmem:[%s2927 + $0xf0] sm:$0xff]
  %v2959 = vld [vmem:[%s2927 + $0xf8] sm:$0xff]
  %2960 = vmatprep.subr.mxu0 0.0
  %2961 = vmatpush1.msra.mxu0 %v2943
  %2962 = vmatprep.subr.mxu0 0.0
  %2963 = vmatpush1.msra.mxu0 %v2942
  %2964 = vmatprep.subr.mxu0 0.0
  %2965 = vmatpush1.msra.mxu0 %v2941
  %2966 = vmatprep.subr.mxu0 0.0
  %2967 = vmatpush1.msra.mxu0 %v2940
  %2968 = vmatprep.subr.mxu0 0.0
  %2969 = vmatpush1.msra.mxu0 %v2939
  %2970 = vmatprep.subr.mxu0 0.0
  %2971 = vmatpush1.msra.mxu0 %v2938
  %2972 = vmatprep.subr.mxu0 0.0
  %2973 = vmatpush1.msra.mxu0 %v2937
  %2974 = vmatprep.subr.mxu0 0.0
  %2975 = vmatpush1.msra.mxu0 %v2936
  %2976 = vmatprep.subr.mxu0 0.0
  %2977 = vmatpush1.msra.mxu0 %v2935
  %2978 = vmatprep.subr.mxu0 0.0
  %2979 = vmatpush1.msra.mxu0 %v2934
  %2980 = vmatprep.subr.mxu0 0.0
  %2981 = vmatpush1.msra.mxu0 %v2933
  %2982 = vmatprep.subr.mxu0 0.0
  %2983 = vmatpush1.msra.mxu0 %v2932
  %2984 = vmatprep.subr.mxu0 0.0
  %2985 = vmatpush1.msra.mxu0 %v2931
  %2986 = vmatprep.subr.mxu0 0.0
  %2987 = vmatpush1.msra.mxu0 %v2930
  %2988 = vmatprep.subr.mxu0 0.0
  %2989 = vmatpush1.msra.mxu0 %v2929
  %2990 = vmatprep.subr.mxu0 0.0
  %2991 = vmatpush1.msra.mxu0 %v2928
  %2992 = vmatprep.subr.mxu0 0.0
  %2993 = vmatpush2.msra.mxu0 %v2959
  %2994 = vmatprep.subr.mxu0 0.0
  %2995 = vmatpush2.msra.mxu0 %v2958
  %2996 = vmatprep.subr.mxu0 0.0
  %2997 = vmatpush2.msra.mxu0 %v2957
  %2998 = vmatprep.subr.mxu0 0.0
  %2999 = vmatpush2.msra.mxu0 %v2956
  %3000 = vmatprep.subr.mxu0 0.0
  %3001 = vmatpush2.msra.mxu0 %v2955
  %3002 = vmatprep.subr.mxu0 0.0
  %3003 = vmatpush2.msra.mxu0 %v2954
  %3004 = vmatprep.subr.mxu0 0.0
  %3005 = vmatpush2.msra.mxu0 %v2953
  %3006 = vmatprep.subr.mxu0 0.0
  %3007 = vmatpush2.msra.mxu0 %v2952
  %3008 = vmatprep.subr.mxu0 0.0
  %3009 = vmatpush2.msra.mxu0 %v2951
  %3010 = vmatprep.subr.mxu0 0.0
  %3011 = vmatpush2.msra.mxu0 %v2950
  %3012 = vmatprep.subr.mxu0 0.0
  %3013 = vmatpush2.msra.mxu0 %v2949
  %3014 = vmatprep.subr.mxu0 0.0
  %3015 = vmatpush2.msra.mxu0 %v2948
  %3016 = vmatprep.subr.mxu0 0.0
  %3017 = vmatpush2.msra.mxu0 %v2947
  %3018 = vmatprep.subr.mxu0 0.0
  %3019 = vmatpush2.msra.mxu0 %v2946
  %3020 = vmatprep.subr.mxu0 0.0
  %3021 = vmatpush2.msra.mxu0 %v2945
  %3022 = vmatprep.subr.mxu0 0.0
  %3023 = vmatpush2.msra.mxu0 %v2944
  %3024 = vmatprep.mubr.f32.mxu0 %v2061
  %3025 = vmatmul.mubr.f32.gmra.mxu0 %v2059
  %v3026 = vpop.f32.mrf.mxu0
  %v3027 = vadd.f32 0.0, %v3026
  %v3028 = vpop.f32.mrf.mxu0
  %3029 = vmatprep.mubr.f32.mxu0 %v2067
  %3030 = vmatmul.mubr.f32.gmra.mxu0 %v2065
  %v3031 = vpop.f32.mrf.mxu0
  %v3032 = vadd.f32 0.0, %v3031
  %v3033 = vpop.f32.mrf.mxu0
  %3034 = vmatprep.mubr.f32.mxu0 %v2073
  %3035 = vmatmul.mubr.f32.gmra.mxu0 %v2071
  %v3036 = vpop.f32.mrf.mxu0
  %v3037 = vadd.f32 0.0, %v3036
  %v3038 = vpop.f32.mrf.mxu0
  %3039 = vmatprep.mubr.f32.mxu0 %v2079
  %3040 = vmatmul.mubr.f32.gmra.mxu0 %v2077
  %v3041 = vpop.f32.mrf.mxu0
  %v3042 = vadd.f32 0.0, %v3041
  %v3043 = vpop.f32.mrf.mxu0
  %3044 = vmatprep.mubr.f32.mxu0 %v2085
  %3045 = vmatmul.mubr.f32.gmra.mxu0 %v2083
  %v3046 = vpop.f32.mrf.mxu0
  %v3047 = vadd.f32 0.0, %v3046
  %v3048 = vpop.f32.mrf.mxu0
  %3049 = vmatprep.mubr.f32.mxu0 %v2091
  %3050 = vmatmul.mubr.f32.gmra.mxu0 %v2089
  %v3051 = vpop.f32.mrf.mxu0
  %v3052 = vadd.f32 0.0, %v3051
  %v3053 = vpop.f32.mrf.mxu0
  %3054 = vmatprep.mubr.f32.mxu0 %v2097
  %3055 = vmatmul.mubr.f32.gmra.mxu0 %v2095
  %v3056 = vpop.f32.mrf.mxu0
  %v3057 = vadd.f32 0.0, %v3056
  %v3058 = vpop.f32.mrf.mxu0
  %3059 = vmatprep.mubr.f32.mxu0 %v2103
  %3060 = vmatmul.mubr.f32.gmra.mxu0 %v2101
  %v3061 = vpop.f32.mrf.mxu0
  %v3062 = vadd.f32 0.0, %v3061
  %v3063 = vpop.f32.mrf.mxu0
  %3064 = vmatprep.mubr.f32.mxu0 %v2109
  %3065 = vmatmul.mubr.f32.gmra.mxu0 %v2107
  %v3066 = vpop.f32.mrf.mxu0
  %v3067 = vadd.f32 0.0, %v3066
  %v3068 = vpop.f32.mrf.mxu0
  %3069 = vmatprep.mubr.f32.mxu0 %v2115
  %3070 = vmatmul.mubr.f32.gmra.mxu0 %v2113
  %v3071 = vpop.f32.mrf.mxu0
  %v3072 = vadd.f32 0.0, %v3071
  %v3073 = vpop.f32.mrf.mxu0
  %3074 = vmatprep.mubr.f32.mxu0 %v2121
  %3075 = vmatmul.mubr.f32.gmra.mxu0 %v2119
  %v3076 = vpop.f32.mrf.mxu0
  %v3077 = vadd.f32 0.0, %v3076
  %v3078 = vpop.f32.mrf.mxu0
  %3079 = vdwg.mxu0
  %s3080 = scalar_lea.vmem %s5, 320
  %v3081 = vld [vmem:[%s3080] sm:$0xff]
  %v3082 = vld [vmem:[%s3080 + $0x8] sm:$0xff]
  %v3083 = vld [vmem:[%s3080 + $0x10] sm:$0xff]
  %v3084 = vld [vmem:[%s3080 + $0x18] sm:$0xff]
  %v3085 = vld [vmem:[%s3080 + $0x20] sm:$0xff]
  %v3086 = vld [vmem:[%s3080 + $0x28] sm:$0xff]
  %v3087 = vld [vmem:[%s3080 + $0x30] sm:$0xff]
  %v3088 = vld [vmem:[%s3080 + $0x38] sm:$0xff]
  %v3089 = vld [vmem:[%s3080 + $0x40] sm:$0xff]
  %v3090 = vld [vmem:[%s3080 + $0x48] sm:$0xff]
  %v3091 = vld [vmem:[%s3080 + $0x50] sm:$0xff]
  %v3092 = vld [vmem:[%s3080 + $0x58] sm:$0xff]
  %v3093 = vld [vmem:[%s3080 + $0x60] sm:$0xff]
  %v3094 = vld [vmem:[%s3080 + $0x68] sm:$0xff]
  %v3095 = vld [vmem:[%s3080 + $0x70] sm:$0xff]
  %v3096 = vld [vmem:[%s3080 + $0x78] sm:$0xff]
  %v3097 = vld [vmem:[%s3080 + $0x80] sm:$0xff]
  %v3098 = vld [vmem:[%s3080 + $0x88] sm:$0xff]
  %v3099 = vld [vmem:[%s3080 + $0x90] sm:$0xff]
  %v3100 = vld [vmem:[%s3080 + $0x98] sm:$0xff]
  %v3102 = vsel %vm2469, %v3081, 0
  %v3105 = vsel %vm2469, %v3082, 0
  %v3108 = vsel %vm2469, %v3083, 0
  %v3111 = vsel %vm2469, %v3084, 0
  %v3114 = vsel %vm2469, %v3085, 0
  %v3117 = vsel %vm2469, %v3086, 0
  %v3120 = vsel %vm2469, %v3087, 0
  %v3123 = vsel %vm2469, %v3088, 0
  %v3126 = vsel %vm2469, %v3089, 0
  %v3129 = vsel %vm2469, %v3090, 0
  %v3132 = vsel %vm2469, %v3091, 0
  %v3135 = vsel %vm2469, %v3092, 0
  %v3138 = vsel %vm2469, %v3093, 0
  %v3141 = vsel %vm2469, %v3094, 0
  %v3144 = vsel %vm2469, %v3095, 0
  %v3147 = vsel %vm2469, %v3096, 0
  %v3150 = vsel %vm2469, %v3097, 0
  %v3153 = vsel %vm2469, %v3098, 0
  %v3156 = vsel %vm2469, %v3099, 0
  %v3159 = vsel %vm2469, %v3100, 0
  %v3162 = vsel %vm2530, %v3077, 0
  %3164 = vmatprep.subr.mxu0 0.0
  %3165 = vmatpush1.msra.mxu0 0.0
  %3166 = vmatprep.subr.mxu0 0.0
  %3167 = vmatpush1.msra.mxu0 0.0
  %3168 = vmatprep.subr.mxu0 0.0
  %3169 = vmatpush1.msra.mxu0 0.0
  %3170 = vmatprep.subr.mxu0 0.0
  %3171 = vmatpush1.msra.mxu0 0.0
  %3172 = vmatprep.subr.mxu0 0.0
  %3173 = vmatpush1.msra.mxu0 0.0
  %3174 = vmatprep.subr.mxu0 0.0
  %3175 = vmatpush1.msra.mxu0 %v3162
  %3176 = vmatprep.subr.mxu0 0.0
  %3177 = vmatpush1.msra.mxu0 %v3072
  %3178 = vmatprep.subr.mxu0 0.0
  %3179 = vmatpush1.msra.mxu0 %v3067
  %3180 = vmatprep.subr.mxu0 0.0
  %3181 = vmatpush1.msra.mxu0 %v3062
  %3182 = vmatprep.subr.mxu0 0.0
  %3183 = vmatpush1.msra.mxu0 %v3057
  %3184 = vmatprep.subr.mxu0 0.0
  %3185 = vmatpush1.msra.mxu0 %v3052
  %3186 = vmatprep.subr.mxu0 0.0
  %3187 = vmatpush1.msra.mxu0 %v3047
  %3188 = vmatprep.subr.mxu0 0.0
  %3189 = vmatpush1.msra.mxu0 %v3042
  %3190 = vmatprep.subr.mxu0 0.0
  %3191 = vmatpush1.msra.mxu0 %v3037
  %3192 = vmatprep.subr.mxu0 0.0
  %3193 = vmatpush1.msra.mxu0 %v3032
  %3194 = vmatprep.subr.mxu0 0.0
  %3195 = vmatpush1.msra.mxu0 %v3027
  %3196 = vmatprep.subr.mxu0 0.0
  %3197 = vmatpush2.msra.mxu0 0.0
  %3198 = vmatprep.subr.mxu0 0.0
  %3199 = vmatpush2.msra.mxu0 0.0
  %3200 = vmatprep.subr.mxu0 0.0
  %3201 = vmatpush2.msra.mxu0 0.0
  %3202 = vmatprep.subr.mxu0 0.0
  %3203 = vmatpush2.msra.mxu0 0.0
  %3204 = vmatprep.subr.mxu0 0.0
  %3205 = vmatpush2.msra.mxu0 0.0
  %3206 = vmatprep.subr.mxu0 0.0
  %3207 = vmatpush2.msra.mxu0 0.0
  %3208 = vmatprep.subr.mxu0 0.0
  %3209 = vmatpush2.msra.mxu0 0.0
  %3210 = vmatprep.subr.mxu0 0.0
  %3211 = vmatpush2.msra.mxu0 0.0
  %3212 = vmatprep.subr.mxu0 0.0
  %3213 = vmatpush2.msra.mxu0 0.0
  %3214 = vmatprep.subr.mxu0 0.0
  %3215 = vmatpush2.msra.mxu0 0.0
  %3216 = vmatprep.subr.mxu0 0.0
  %3217 = vmatpush2.msra.mxu0 0.0
  %3218 = vmatprep.subr.mxu0 0.0
  %3219 = vmatpush2.msra.mxu0 0.0
  %3220 = vmatprep.subr.mxu0 0.0
  %3221 = vmatpush2.msra.mxu0 0.0
  %3222 = vmatprep.subr.mxu0 0.0
  %3223 = vmatpush2.msra.mxu0 0.0
  %3224 = vmatprep.subr.mxu0 0.0
  %3225 = vmatpush2.msra.mxu0 0.0
  %3226 = vmatprep.subr.mxu0 0.0
  %3227 = vmatpush2.msra.mxu0 0.0
  %3228 = vmatprep.mubr.f32.mxu0 0.0
  %3229 = vmatmul.mubr.f32.gmra.mxu0 %v3102
  %v3230 = vpop.f32.mrf.mxu0
  %v3231 = vadd.f32 0.0, %v3230
  %v3232 = vpop.f32.mrf.mxu0
  %3233 = vmatprep.mubr.f32.mxu0 0.0
  %3234 = vmatmul.mubr.f32.gmra.mxu0 %v3105
  %v3235 = vpop.f32.mrf.mxu0
  %v3236 = vadd.f32 0.0, %v3235
  %v3237 = vpop.f32.mrf.mxu0
  %3238 = vmatprep.mubr.f32.mxu0 0.0
  %3239 = vmatmul.mubr.f32.gmra.mxu0 %v3108
  %v3240 = vpop.f32.mrf.mxu0
  %v3241 = vadd.f32 0.0, %v3240
  %v3242 = vpop.f32.mrf.mxu0
  %3243 = vmatprep.mubr.f32.mxu0 0.0
  %3244 = vmatmul.mubr.f32.gmra.mxu0 %v3111
  %v3245 = vpop.f32.mrf.mxu0
  %v3246 = vadd.f32 0.0, %v3245
  %v3247 = vpop.f32.mrf.mxu0
  %3248 = vmatprep.mubr.f32.mxu0 0.0
  %3249 = vmatmul.mubr.f32.gmra.mxu0 %v3114
  %v3250 = vpop.f32.mrf.mxu0
  %v3251 = vadd.f32 0.0, %v3250
  %v3252 = vpop.f32.mrf.mxu0
  %3253 = vmatprep.mubr.f32.mxu0 0.0
  %3254 = vmatmul.mubr.f32.gmra.mxu0 %v3117
  %v3255 = vpop.f32.mrf.mxu0
  %v3256 = vadd.f32 0.0, %v3255
  %v3257 = vpop.f32.mrf.mxu0
  %3258 = vmatprep.mubr.f32.mxu0 0.0
  %3259 = vmatmul.mubr.f32.gmra.mxu0 %v3120
  %v3260 = vpop.f32.mrf.mxu0
  %v3261 = vadd.f32 0.0, %v3260
  %v3262 = vpop.f32.mrf.mxu0
  %3263 = vmatprep.mubr.f32.mxu0 0.0
  %3264 = vmatmul.mubr.f32.gmra.mxu0 %v3123
  %v3265 = vpop.f32.mrf.mxu0
  %v3266 = vadd.f32 0.0, %v3265
  %v3267 = vpop.f32.mrf.mxu0
  %3268 = vmatprep.mubr.f32.mxu0 0.0
  %3269 = vmatmul.mubr.f32.gmra.mxu0 %v3126
  %v3270 = vpop.f32.mrf.mxu0
  %v3271 = vadd.f32 0.0, %v3270
  %v3272 = vpop.f32.mrf.mxu0
  %3273 = vmatprep.mubr.f32.mxu0 0.0
  %3274 = vmatmul.mubr.f32.gmra.mxu0 %v3129
  %v3275 = vpop.f32.mrf.mxu0
  %v3276 = vadd.f32 0.0, %v3275
  %v3277 = vpop.f32.mrf.mxu0
  %3278 = vmatprep.mubr.f32.mxu0 0.0
  %3279 = vmatmul.mubr.f32.gmra.mxu0 %v3132
  %v3280 = vpop.f32.mrf.mxu0
  %v3281 = vadd.f32 0.0, %v3280
  %v3282 = vpop.f32.mrf.mxu0
  %3283 = vmatprep.mubr.f32.mxu0 0.0
  %3284 = vmatmul.mubr.f32.gmra.mxu0 %v3135
  %v3285 = vpop.f32.mrf.mxu0
  %v3286 = vadd.f32 0.0, %v3285
  %v3287 = vpop.f32.mrf.mxu0
  %3288 = vmatprep.mubr.f32.mxu0 0.0
  %3289 = vmatmul.mubr.f32.gmra.mxu0 %v3138
  %v3290 = vpop.f32.mrf.mxu0
  %v3291 = vadd.f32 0.0, %v3290
  %v3292 = vpop.f32.mrf.mxu0
  %3293 = vmatprep.mubr.f32.mxu0 0.0
  %3294 = vmatmul.mubr.f32.gmra.mxu0 %v3141
  %v3295 = vpop.f32.mrf.mxu0
  %v3296 = vadd.f32 0.0, %v3295
  %v3297 = vpop.f32.mrf.mxu0
  %3298 = vmatprep.mubr.f32.mxu0 0.0
  %3299 = vmatmul.mubr.f32.gmra.mxu0 %v3144
  %v3300 = vpop.f32.mrf.mxu0
  %v3301 = vadd.f32 0.0, %v3300
  %v3302 = vpop.f32.mrf.mxu0
  %3303 = vmatprep.mubr.f32.mxu0 0.0
  %3304 = vmatmul.mubr.f32.gmra.mxu0 %v3147
  %v3305 = vpop.f32.mrf.mxu0
  %v3306 = vadd.f32 0.0, %v3305
  %v3307 = vpop.f32.mrf.mxu0
  %3308 = vmatprep.mubr.f32.mxu0 0.0
  %3309 = vmatmul.mubr.f32.gmra.mxu0 %v3150
  %v3310 = vpop.f32.mrf.mxu0
  %v3311 = vadd.f32 0.0, %v3310
  %v3312 = vpop.f32.mrf.mxu0
  %3313 = vmatprep.mubr.f32.mxu0 0.0
  %3314 = vmatmul.mubr.f32.gmra.mxu0 %v3153
  %v3315 = vpop.f32.mrf.mxu0
  %v3316 = vadd.f32 0.0, %v3315
  %v3317 = vpop.f32.mrf.mxu0
  %3318 = vmatprep.mubr.f32.mxu0 0.0
  %3319 = vmatmul.mubr.f32.gmra.mxu0 %v3156
  %v3320 = vpop.f32.mrf.mxu0
  %v3321 = vadd.f32 0.0, %v3320
  %v3322 = vpop.f32.mrf.mxu0
  %3323 = vmatprep.mubr.f32.mxu0 0.0
  %3324 = vmatmul.mubr.f32.gmra.mxu0 %v3159
  %v3325 = vpop.f32.mrf.mxu0
  %v3326 = vadd.f32 0.0, %v3325
  %v3327 = vpop.f32.mrf.mxu0
  %3328 = vdwg.mxu0
  %v3329 = vadd.f32 %v2829, %v3231
  %v3330 = vadd.f32 %v2834, %v3236
  %v3331 = vadd.f32 %v2839, %v3241
  %v3332 = vadd.f32 %v2844, %v3246
  %v3333 = vadd.f32 %v2849, %v3251
  %v3334 = vadd.f32 %v2854, %v3256
  %v3335 = vadd.f32 %v2859, %v3261
  %v3336 = vadd.f32 %v2864, %v3266
  %v3337 = vadd.f32 %v2869, %v3271
  %v3338 = vadd.f32 %v2874, %v3276
  %v3339 = vadd.f32 %v2879, %v3281
  %v3340 = vadd.f32 %v2884, %v3286
  %v3341 = vadd.f32 %v2889, %v3291
  %v3342 = vadd.f32 %v2894, %v3296
  %v3343 = vadd.f32 %v2899, %v3301
  %v3344 = vadd.f32 %v2904, %v3306
  %v3345 = vadd.f32 %v2909, %v3311
  %v3346 = vadd.f32 %v2914, %v3316
  %v3347 = vadd.f32 %v2919, %v3321
  %v3348 = vadd.f32 %v2924, %v3326
  %s3349 = scalar_lea.vmem %s4, 768
  %v3350 = vld [vmem:[%s3349] sm:$0xff]
  %v3351 = vld [vmem:[%s3349 + $0x8] sm:$0xff]
  %v3352 = vld [vmem:[%s3349 + $0x10] sm:$0xff]
  %v3353 = vld [vmem:[%s3349 + $0x18] sm:$0xff]
  %v3354 = vld [vmem:[%s3349 + $0x20] sm:$0xff]
  %v3355 = vld [vmem:[%s3349 + $0x28] sm:$0xff]
  %v3356 = vld [vmem:[%s3349 + $0x30] sm:$0xff]
  %v3357 = vld [vmem:[%s3349 + $0x38] sm:$0xff]
  %v3358 = vld [vmem:[%s3349 + $0x40] sm:$0xff]
  %v3359 = vld [vmem:[%s3349 + $0x48] sm:$0xff]
  %v3360 = vld [vmem:[%s3349 + $0x50] sm:$0xff]
  %v3361 = vld [vmem:[%s3349 + $0x58] sm:$0xff]
  %v3362 = vld [vmem:[%s3349 + $0x60] sm:$0xff]
  %v3363 = vld [vmem:[%s3349 + $0x68] sm:$0xff]
  %v3364 = vld [vmem:[%s3349 + $0x70] sm:$0xff]
  %v3365 = vld [vmem:[%s3349 + $0x78] sm:$0xff]
  %v3366 = vld [vmem:[%s3349 + $0x80] sm:$0xff]
  %v3367 = vld [vmem:[%s3349 + $0x88] sm:$0xff]
  %v3368 = vld [vmem:[%s3349 + $0x90] sm:$0xff]
  %v3369 = vld [vmem:[%s3349 + $0x98] sm:$0xff]
  %v3370 = vld [vmem:[%s3349 + $0xa0] sm:$0xff]
  %v3371 = vld [vmem:[%s3349 + $0xa8] sm:$0xff]
  %v3372 = vld [vmem:[%s3349 + $0xb0] sm:$0xff]
  %v3373 = vld [vmem:[%s3349 + $0xb8] sm:$0xff]
  %v3374 = vld [vmem:[%s3349 + $0xc0] sm:$0xff]
  %v3375 = vld [vmem:[%s3349 + $0xc8] sm:$0xff]
  %v3376 = vld [vmem:[%s3349 + $0xd0] sm:$0xff]
  %v3377 = vld [vmem:[%s3349 + $0xd8] sm:$0xff]
  %v3378 = vld [vmem:[%s3349 + $0xe0] sm:$0xff]
  %v3379 = vld [vmem:[%s3349 + $0xe8] sm:$0xff]
  %v3380 = vld [vmem:[%s3349 + $0xf0] sm:$0xff]
  %v3381 = vld [vmem:[%s3349 + $0xf8] sm:$0xff]
  %3382 = vmatprep.subr.mxu0 0.0
  %3383 = vmatpush1.msra.mxu0 %v3365
  %3384 = vmatprep.subr.mxu0 0.0
  %3385 = vmatpush1.msra.mxu0 %v3364
  %3386 = vmatprep.subr.mxu0 0.0
  %3387 = vmatpush1.msra.mxu0 %v3363
  %3388 = vmatprep.subr.mxu0 0.0
  %3389 = vmatpush1.msra.mxu0 %v3362
  %3390 = vmatprep.subr.mxu0 0.0
  %3391 = vmatpush1.msra.mxu0 %v3361
  %3392 = vmatprep.subr.mxu0 0.0
  %3393 = vmatpush1.msra.mxu0 %v3360
  %3394 = vmatprep.subr.mxu0 0.0
  %3395 = vmatpush1.msra.mxu0 %v3359
  %3396 = vmatprep.subr.mxu0 0.0
  %3397 = vmatpush1.msra.mxu0 %v3358
  %3398 = vmatprep.subr.mxu0 0.0
  %3399 = vmatpush1.msra.mxu0 %v3357
  %3400 = vmatprep.subr.mxu0 0.0
  %3401 = vmatpush1.msra.mxu0 %v3356
  %3402 = vmatprep.subr.mxu0 0.0
  %3403 = vmatpush1.msra.mxu0 %v3355
  %3404 = vmatprep.subr.mxu0 0.0
  %3405 = vmatpush1.msra.mxu0 %v3354
  %3406 = vmatprep.subr.mxu0 0.0
  %3407 = vmatpush1.msra.mxu0 %v3353
  %3408 = vmatprep.subr.mxu0 0.0
  %3409 = vmatpush1.msra.mxu0 %v3352
  %3410 = vmatprep.subr.mxu0 0.0
  %3411 = vmatpush1.msra.mxu0 %v3351
  %3412 = vmatprep.subr.mxu0 0.0
  %3413 = vmatpush1.msra.mxu0 %v3350
  %3414 = vmatprep.subr.mxu0 0.0
  %3415 = vmatpush2.msra.mxu0 %v3381
  %3416 = vmatprep.subr.mxu0 0.0
  %3417 = vmatpush2.msra.mxu0 %v3380
  %3418 = vmatprep.subr.mxu0 0.0
  %3419 = vmatpush2.msra.mxu0 %v3379
  %3420 = vmatprep.subr.mxu0 0.0
  %3421 = vmatpush2.msra.mxu0 %v3378
  %3422 = vmatprep.subr.mxu0 0.0
  %3423 = vmatpush2.msra.mxu0 %v3377
  %3424 = vmatprep.subr.mxu0 0.0
  %3425 = vmatpush2.msra.mxu0 %v3376
  %3426 = vmatprep.subr.mxu0 0.0
  %3427 = vmatpush2.msra.mxu0 %v3375
  %3428 = vmatprep.subr.mxu0 0.0
  %3429 = vmatpush2.msra.mxu0 %v3374
  %3430 = vmatprep.subr.mxu0 0.0
  %3431 = vmatpush2.msra.mxu0 %v3373
  %3432 = vmatprep.subr.mxu0 0.0
  %3433 = vmatpush2.msra.mxu0 %v3372
  %3434 = vmatprep.subr.mxu0 0.0
  %3435 = vmatpush2.msra.mxu0 %v3371
  %3436 = vmatprep.subr.mxu0 0.0
  %3437 = vmatpush2.msra.mxu0 %v3370
  %3438 = vmatprep.subr.mxu0 0.0
  %3439 = vmatpush2.msra.mxu0 %v3369
  %3440 = vmatprep.subr.mxu0 0.0
  %3441 = vmatpush2.msra.mxu0 %v3368
  %3442 = vmatprep.subr.mxu0 0.0
  %3443 = vmatpush2.msra.mxu0 %v3367
  %3444 = vmatprep.subr.mxu0 0.0
  %3445 = vmatpush2.msra.mxu0 %v3366
  %3446 = vmatprep.mubr.f32.mxu0 %v2061
  %3447 = vmatmul.mubr.f32.gmra.mxu0 %v2059
  %v3448 = vpop.f32.mrf.mxu0
  %v3449 = vadd.f32 0.0, %v3448
  %v3450 = vpop.f32.mrf.mxu0
  %3451 = vmatprep.mubr.f32.mxu0 %v2067
  %3452 = vmatmul.mubr.f32.gmra.mxu0 %v2065
  %v3453 = vpop.f32.mrf.mxu0
  %v3454 = vadd.f32 0.0, %v3453
  %v3455 = vpop.f32.mrf.mxu0
  %3456 = vmatprep.mubr.f32.mxu0 %v2073
  %3457 = vmatmul.mubr.f32.gmra.mxu0 %v2071
  %v3458 = vpop.f32.mrf.mxu0
  %v3459 = vadd.f32 0.0, %v3458
  %v3460 = vpop.f32.mrf.mxu0
  %3461 = vmatprep.mubr.f32.mxu0 %v2079
  %3462 = vmatmul.mubr.f32.gmra.mxu0 %v2077
  %v3463 = vpop.f32.mrf.mxu0
  %v3464 = vadd.f32 0.0, %v3463
  %v3465 = vpop.f32.mrf.mxu0
  %3466 = vmatprep.mubr.f32.mxu0 %v2085
  %3467 = vmatmul.mubr.f32.gmra.mxu0 %v2083
  %v3468 = vpop.f32.mrf.mxu0
  %v3469 = vadd.f32 0.0, %v3468
  %v3470 = vpop.f32.mrf.mxu0
  %3471 = vmatprep.mubr.f32.mxu0 %v2091
  %3472 = vmatmul.mubr.f32.gmra.mxu0 %v2089
  %v3473 = vpop.f32.mrf.mxu0
  %v3474 = vadd.f32 0.0, %v3473
  %v3475 = vpop.f32.mrf.mxu0
  %3476 = vmatprep.mubr.f32.mxu0 %v2097
  %3477 = vmatmul.mubr.f32.gmra.mxu0 %v2095
  %v3478 = vpop.f32.mrf.mxu0
  %v3479 = vadd.f32 0.0, %v3478
  %v3480 = vpop.f32.mrf.mxu0
  %3481 = vmatprep.mubr.f32.mxu0 %v2103
  %3482 = vmatmul.mubr.f32.gmra.mxu0 %v2101
  %v3483 = vpop.f32.mrf.mxu0
  %v3484 = vadd.f32 0.0, %v3483
  %v3485 = vpop.f32.mrf.mxu0
  %3486 = vmatprep.mubr.f32.mxu0 %v2109
  %3487 = vmatmul.mubr.f32.gmra.mxu0 %v2107
  %v3488 = vpop.f32.mrf.mxu0
  %v3489 = vadd.f32 0.0, %v3488
  %v3490 = vpop.f32.mrf.mxu0
  %3491 = vmatprep.mubr.f32.mxu0 %v2115
  %3492 = vmatmul.mubr.f32.gmra.mxu0 %v2113
  %v3493 = vpop.f32.mrf.mxu0
  %v3494 = vadd.f32 0.0, %v3493
  %v3495 = vpop.f32.mrf.mxu0
  %3496 = vmatprep.mubr.f32.mxu0 %v2121
  %3497 = vmatmul.mubr.f32.gmra.mxu0 %v2119
  %v3498 = vpop.f32.mrf.mxu0
  %v3499 = vadd.f32 0.0, %v3498
  %v3500 = vpop.f32.mrf.mxu0
  %3501 = vdwg.mxu0
  %s3502 = scalar_lea.vmem %s5, 480
  %v3503 = vld [vmem:[%s3502] sm:$0xff]
  %v3504 = vld [vmem:[%s3502 + $0x8] sm:$0xff]
  %v3505 = vld [vmem:[%s3502 + $0x10] sm:$0xff]
  %v3506 = vld [vmem:[%s3502 + $0x18] sm:$0xff]
  %v3507 = vld [vmem:[%s3502 + $0x20] sm:$0xff]
  %v3508 = vld [vmem:[%s3502 + $0x28] sm:$0xff]
  %v3509 = vld [vmem:[%s3502 + $0x30] sm:$0xff]
  %v3510 = vld [vmem:[%s3502 + $0x38] sm:$0xff]
  %v3511 = vld [vmem:[%s3502 + $0x40] sm:$0xff]
  %v3512 = vld [vmem:[%s3502 + $0x48] sm:$0xff]
  %v3513 = vld [vmem:[%s3502 + $0x50] sm:$0xff]
  %v3514 = vld [vmem:[%s3502 + $0x58] sm:$0xff]
  %v3515 = vld [vmem:[%s3502 + $0x60] sm:$0xff]
  %v3516 = vld [vmem:[%s3502 + $0x68] sm:$0xff]
  %v3517 = vld [vmem:[%s3502 + $0x70] sm:$0xff]
  %v3518 = vld [vmem:[%s3502 + $0x78] sm:$0xff]
  %v3519 = vld [vmem:[%s3502 + $0x80] sm:$0xff]
  %v3520 = vld [vmem:[%s3502 + $0x88] sm:$0xff]
  %v3521 = vld [vmem:[%s3502 + $0x90] sm:$0xff]
  %v3522 = vld [vmem:[%s3502 + $0x98] sm:$0xff]
  %v3524 = vsel %vm2469, %v3503, 0
  %v3527 = vsel %vm2469, %v3504, 0
  %v3530 = vsel %vm2469, %v3505, 0
  %v3533 = vsel %vm2469, %v3506, 0
  %v3536 = vsel %vm2469, %v3507, 0
  %v3539 = vsel %vm2469, %v3508, 0
  %v3542 = vsel %vm2469, %v3509, 0
  %v3545 = vsel %vm2469, %v3510, 0
  %v3548 = vsel %vm2469, %v3511, 0
  %v3551 = vsel %vm2469, %v3512, 0
  %v3554 = vsel %vm2469, %v3513, 0
  %v3557 = vsel %vm2469, %v3514, 0
  %v3560 = vsel %vm2469, %v3515, 0
  %v3563 = vsel %vm2469, %v3516, 0
  %v3566 = vsel %vm2469, %v3517, 0
  %v3569 = vsel %vm2469, %v3518, 0
  %v3572 = vsel %vm2469, %v3519, 0
  %v3575 = vsel %vm2469, %v3520, 0
  %v3578 = vsel %vm2469, %v3521, 0
  %v3581 = vsel %vm2469, %v3522, 0
  %v3584 = vsel %vm2530, %v3499, 0
  %3586 = vmatprep.subr.mxu0 0.0
  %3587 = vmatpush1.msra.mxu0 0.0
  %3588 = vmatprep.subr.mxu0 0.0
  %3589 = vmatpush1.msra.mxu0 0.0
  %3590 = vmatprep.subr.mxu0 0.0
  %3591 = vmatpush1.msra.mxu0 0.0
  %3592 = vmatprep.subr.mxu0 0.0
  %3593 = vmatpush1.msra.mxu0 0.0
  %3594 = vmatprep.subr.mxu0 0.0
  %3595 = vmatpush1.msra.mxu0 0.0
  %3596 = vmatprep.subr.mxu0 0.0
  %3597 = vmatpush1.msra.mxu0 %v3584
  %3598 = vmatprep.subr.mxu0 0.0
  %3599 = vmatpush1.msra.mxu0 %v3494
  %3600 = vmatprep.subr.mxu0 0.0
  %3601 = vmatpush1.msra.mxu0 %v3489
  %3602 = vmatprep.subr.mxu0 0.0
  %3603 = vmatpush1.msra.mxu0 %v3484
  %3604 = vmatprep.subr.mxu0 0.0
  %3605 = vmatpush1.msra.mxu0 %v3479
  %3606 = vmatprep.subr.mxu0 0.0
  %3607 = vmatpush1.msra.mxu0 %v3474
  %3608 = vmatprep.subr.mxu0 0.0
  %3609 = vmatpush1.msra.mxu0 %v3469
  %3610 = vmatprep.subr.mxu0 0.0
  %3611 = vmatpush1.msra.mxu0 %v3464
  %3612 = vmatprep.subr.mxu0 0.0
  %3613 = vmatpush1.msra.mxu0 %v3459
  %3614 = vmatprep.subr.mxu0 0.0
  %3615 = vmatpush1.msra.mxu0 %v3454
  %3616 = vmatprep.subr.mxu0 0.0
  %3617 = vmatpush1.msra.mxu0 %v3449
  %3618 = vmatprep.subr.mxu0 0.0
  %3619 = vmatpush2.msra.mxu0 0.0
  %3620 = vmatprep.subr.mxu0 0.0
  %3621 = vmatpush2.msra.mxu0 0.0
  %3622 = vmatprep.subr.mxu0 0.0
  %3623 = vmatpush2.msra.mxu0 0.0
  %3624 = vmatprep.subr.mxu0 0.0
  %3625 = vmatpush2.msra.mxu0 0.0
  %3626 = vmatprep.subr.mxu0 0.0
  %3627 = vmatpush2.msra.mxu0 0.0
  %3628 = vmatprep.subr.mxu0 0.0
  %3629 = vmatpush2.msra.mxu0 0.0
  %3630 = vmatprep.subr.mxu0 0.0
  %3631 = vmatpush2.msra.mxu0 0.0
  %3632 = vmatprep.subr.mxu0 0.0
  %3633 = vmatpush2.msra.mxu0 0.0
  %3634 = vmatprep.subr.mxu0 0.0
  %3635 = vmatpush2.msra.mxu0 0.0
  %3636 = vmatprep.subr.mxu0 0.0
  %3637 = vmatpush2.msra.mxu0 0.0
  %3638 = vmatprep.subr.mxu0 0.0
  %3639 = vmatpush2.msra.mxu0 0.0
  %3640 = vmatprep.subr.mxu0 0.0
  %3641 = vmatpush2.msra.mxu0 0.0
  %3642 = vmatprep.subr.mxu0 0.0
  %3643 = vmatpush2.msra.mxu0 0.0
  %3644 = vmatprep.subr.mxu0 0.0
  %3645 = vmatpush2.msra.mxu0 0.0
  %3646 = vmatprep.subr.mxu0 0.0
  %3647 = vmatpush2.msra.mxu0 0.0
  %3648 = vmatprep.subr.mxu0 0.0
  %3649 = vmatpush2.msra.mxu0 0.0
  %3650 = vmatprep.mubr.f32.mxu0 0.0
  %3651 = vmatmul.mubr.f32.gmra.mxu0 %v3524
  %v3652 = vpop.f32.mrf.mxu0
  %v3653 = vadd.f32 0.0, %v3652
  %v3654 = vpop.f32.mrf.mxu0
  %3655 = vmatprep.mubr.f32.mxu0 0.0
  %3656 = vmatmul.mubr.f32.gmra.mxu0 %v3527
  %v3657 = vpop.f32.mrf.mxu0
  %v3658 = vadd.f32 0.0, %v3657
  %v3659 = vpop.f32.mrf.mxu0
  %3660 = vmatprep.mubr.f32.mxu0 0.0
  %3661 = vmatmul.mubr.f32.gmra.mxu0 %v3530
  %v3662 = vpop.f32.mrf.mxu0
  %v3663 = vadd.f32 0.0, %v3662
  %v3664 = vpop.f32.mrf.mxu0
  %3665 = vmatprep.mubr.f32.mxu0 0.0
  %3666 = vmatmul.mubr.f32.gmra.mxu0 %v3533
  %v3667 = vpop.f32.mrf.mxu0
  %v3668 = vadd.f32 0.0, %v3667
  %v3669 = vpop.f32.mrf.mxu0
  %3670 = vmatprep.mubr.f32.mxu0 0.0
  %3671 = vmatmul.mubr.f32.gmra.mxu0 %v3536
  %v3672 = vpop.f32.mrf.mxu0
  %v3673 = vadd.f32 0.0, %v3672
  %v3674 = vpop.f32.mrf.mxu0
  %3675 = vmatprep.mubr.f32.mxu0 0.0
  %3676 = vmatmul.mubr.f32.gmra.mxu0 %v3539
  %v3677 = vpop.f32.mrf.mxu0
  %v3678 = vadd.f32 0.0, %v3677
  %v3679 = vpop.f32.mrf.mxu0
  %3680 = vmatprep.mubr.f32.mxu0 0.0
  %3681 = vmatmul.mubr.f32.gmra.mxu0 %v3542
  %v3682 = vpop.f32.mrf.mxu0
  %v3683 = vadd.f32 0.0, %v3682
  %v3684 = vpop.f32.mrf.mxu0
  %3685 = vmatprep.mubr.f32.mxu0 0.0
  %3686 = vmatmul.mubr.f32.gmra.mxu0 %v3545
  %v3687 = vpop.f32.mrf.mxu0
  %v3688 = vadd.f32 0.0, %v3687
  %v3689 = vpop.f32.mrf.mxu0
  %3690 = vmatprep.mubr.f32.mxu0 0.0
  %3691 = vmatmul.mubr.f32.gmra.mxu0 %v3548
  %v3692 = vpop.f32.mrf.mxu0
  %v3693 = vadd.f32 0.0, %v3692
  %v3694 = vpop.f32.mrf.mxu0
  %3695 = vmatprep.mubr.f32.mxu0 0.0
  %3696 = vmatmul.mubr.f32.gmra.mxu0 %v3551
  %v3697 = vpop.f32.mrf.mxu0
  %v3698 = vadd.f32 0.0, %v3697
  %v3699 = vpop.f32.mrf.mxu0
  %3700 = vmatprep.mubr.f32.mxu0 0.0
  %3701 = vmatmul.mubr.f32.gmra.mxu0 %v3554
  %v3702 = vpop.f32.mrf.mxu0
  %v3703 = vadd.f32 0.0, %v3702
  %v3704 = vpop.f32.mrf.mxu0
  %3705 = vmatprep.mubr.f32.mxu0 0.0
  %3706 = vmatmul.mubr.f32.gmra.mxu0 %v3557
  %v3707 = vpop.f32.mrf.mxu0
  %v3708 = vadd.f32 0.0, %v3707
  %v3709 = vpop.f32.mrf.mxu0
  %3710 = vmatprep.mubr.f32.mxu0 0.0
  %3711 = vmatmul.mubr.f32.gmra.mxu0 %v3560
  %v3712 = vpop.f32.mrf.mxu0
  %v3713 = vadd.f32 0.0, %v3712
  %v3714 = vpop.f32.mrf.mxu0
  %3715 = vmatprep.mubr.f32.mxu0 0.0
  %3716 = vmatmul.mubr.f32.gmra.mxu0 %v3563
  %v3717 = vpop.f32.mrf.mxu0
  %v3718 = vadd.f32 0.0, %v3717
  %v3719 = vpop.f32.mrf.mxu0
  %3720 = vmatprep.mubr.f32.mxu0 0.0
  %3721 = vmatmul.mubr.f32.gmra.mxu0 %v3566
  %v3722 = vpop.f32.mrf.mxu0
  %v3723 = vadd.f32 0.0, %v3722
  %v3724 = vpop.f32.mrf.mxu0
  %3725 = vmatprep.mubr.f32.mxu0 0.0
  %3726 = vmatmul.mubr.f32.gmra.mxu0 %v3569
  %v3727 = vpop.f32.mrf.mxu0
  %v3728 = vadd.f32 0.0, %v3727
  %v3729 = vpop.f32.mrf.mxu0
  %3730 = vmatprep.mubr.f32.mxu0 0.0
  %3731 = vmatmul.mubr.f32.gmra.mxu0 %v3572
  %v3732 = vpop.f32.mrf.mxu0
  %v3733 = vadd.f32 0.0, %v3732
  %v3734 = vpop.f32.mrf.mxu0
  %3735 = vmatprep.mubr.f32.mxu0 0.0
  %3736 = vmatmul.mubr.f32.gmra.mxu0 %v3575
  %v3737 = vpop.f32.mrf.mxu0
  %v3738 = vadd.f32 0.0, %v3737
  %v3739 = vpop.f32.mrf.mxu0
  %3740 = vmatprep.mubr.f32.mxu0 0.0
  %3741 = vmatmul.mubr.f32.gmra.mxu0 %v3578
  %v3742 = vpop.f32.mrf.mxu0
  %v3743 = vadd.f32 0.0, %v3742
  %v3744 = vpop.f32.mrf.mxu0
  %3745 = vmatprep.mubr.f32.mxu0 0.0
  %3746 = vmatmul.mubr.f32.gmra.mxu0 %v3581
  %v3747 = vpop.f32.mrf.mxu0
  %v3748 = vadd.f32 0.0, %v3747
  %v3749 = vpop.f32.mrf.mxu0
  %3750 = vdwg.mxu0
  %v3751 = vadd.f32 %v3329, %v3653
  %v3752 = vadd.f32 %v3330, %v3658
  %v3753 = vadd.f32 %v3331, %v3663
  %v3754 = vadd.f32 %v3332, %v3668
  %v3755 = vadd.f32 %v3333, %v3673
  %v3756 = vadd.f32 %v3334, %v3678
  %v3757 = vadd.f32 %v3335, %v3683
  %v3758 = vadd.f32 %v3336, %v3688
  %v3759 = vadd.f32 %v3337, %v3693
  %v3760 = vadd.f32 %v3338, %v3698
  %v3761 = vadd.f32 %v3339, %v3703
  %v3762 = vadd.f32 %v3340, %v3708
  %v3763 = vadd.f32 %v3341, %v3713
  %v3764 = vadd.f32 %v3342, %v3718
  %v3765 = vadd.f32 %v3343, %v3723
  %v3766 = vadd.f32 %v3344, %v3728
  %v3767 = vadd.f32 %v3345, %v3733
  %v3768 = vadd.f32 %v3346, %v3738
  %v3769 = vadd.f32 %v3347, %v3743
  %v3770 = vadd.f32 %v3348, %v3748
  %s3771 = scalar_lea.vmem %s4, 1024
  %v3772 = vld [vmem:[%s3771] sm:$0xff]
  %v3773 = vld [vmem:[%s3771 + $0x8] sm:$0xff]
  %v3774 = vld [vmem:[%s3771 + $0x10] sm:$0xff]
  %v3775 = vld [vmem:[%s3771 + $0x18] sm:$0xff]
  %v3776 = vld [vmem:[%s3771 + $0x20] sm:$0xff]
  %v3777 = vld [vmem:[%s3771 + $0x28] sm:$0xff]
  %v3778 = vld [vmem:[%s3771 + $0x30] sm:$0xff]
  %v3779 = vld [vmem:[%s3771 + $0x38] sm:$0xff]
  %v3780 = vld [vmem:[%s3771 + $0x40] sm:$0xff]
  %v3781 = vld [vmem:[%s3771 + $0x48] sm:$0xff]
  %v3782 = vld [vmem:[%s3771 + $0x50] sm:$0xff]
  %v3783 = vld [vmem:[%s3771 + $0x58] sm:$0xff]
  %v3784 = vld [vmem:[%s3771 + $0x60] sm:$0xff]
  %v3785 = vld [vmem:[%s3771 + $0x68] sm:$0xff]
  %v3786 = vld [vmem:[%s3771 + $0x70] sm:$0xff]
  %v3787 = vld [vmem:[%s3771 + $0x78] sm:$0xff]
  %v3788 = vld [vmem:[%s3771 + $0x80] sm:$0xff]
  %v3789 = vld [vmem:[%s3771 + $0x88] sm:$0xff]
  %v3790 = vld [vmem:[%s3771 + $0x90] sm:$0xff]
  %v3791 = vld [vmem:[%s3771 + $0x98] sm:$0xff]
  %v3792 = vld [vmem:[%s3771 + $0xa0] sm:$0xff]
  %v3793 = vld [vmem:[%s3771 + $0xa8] sm:$0xff]
  %v3794 = vld [vmem:[%s3771 + $0xb0] sm:$0xff]
  %v3795 = vld [vmem:[%s3771 + $0xb8] sm:$0xff]
  %v3796 = vld [vmem:[%s3771 + $0xc0] sm:$0xff]
  %v3797 = vld [vmem:[%s3771 + $0xc8] sm:$0xff]
  %v3798 = vld [vmem:[%s3771 + $0xd0] sm:$0xff]
  %v3799 = vld [vmem:[%s3771 + $0xd8] sm:$0xff]
  %v3800 = vld [vmem:[%s3771 + $0xe0] sm:$0xff]
  %v3801 = vld [vmem:[%s3771 + $0xe8] sm:$0xff]
  %v3802 = vld [vmem:[%s3771 + $0xf0] sm:$0xff]
  %v3803 = vld [vmem:[%s3771 + $0xf8] sm:$0xff]
  %3804 = vmatprep.subr.mxu0 0.0
  %3805 = vmatpush1.msra.mxu0 %v3787
  %3806 = vmatprep.subr.mxu0 0.0
  %3807 = vmatpush1.msra.mxu0 %v3786
  %3808 = vmatprep.subr.mxu0 0.0
  %3809 = vmatpush1.msra.mxu0 %v3785
  %3810 = vmatprep.subr.mxu0 0.0
  %3811 = vmatpush1.msra.mxu0 %v3784
  %3812 = vmatprep.subr.mxu0 0.0
  %3813 = vmatpush1.msra.mxu0 %v3783
  %3814 = vmatprep.subr.mxu0 0.0
  %3815 = vmatpush1.msra.mxu0 %v3782
  %3816 = vmatprep.subr.mxu0 0.0
  %3817 = vmatpush1.msra.mxu0 %v3781
  %3818 = vmatprep.subr.mxu0 0.0
  %3819 = vmatpush1.msra.mxu0 %v3780
  %3820 = vmatprep.subr.mxu0 0.0
  %3821 = vmatpush1.msra.mxu0 %v3779
  %3822 = vmatprep.subr.mxu0 0.0
  %3823 = vmatpush1.msra.mxu0 %v3778
  %3824 = vmatprep.subr.mxu0 0.0
  %3825 = vmatpush1.msra.mxu0 %v3777
  %3826 = vmatprep.subr.mxu0 0.0
  %3827 = vmatpush1.msra.mxu0 %v3776
  %3828 = vmatprep.subr.mxu0 0.0
  %3829 = vmatpush1.msra.mxu0 %v3775
  %3830 = vmatprep.subr.mxu0 0.0
  %3831 = vmatpush1.msra.mxu0 %v3774
  %3832 = vmatprep.subr.mxu0 0.0
  %3833 = vmatpush1.msra.mxu0 %v3773
  %3834 = vmatprep.subr.mxu0 0.0
  %3835 = vmatpush1.msra.mxu0 %v3772
  %3836 = vmatprep.subr.mxu0 0.0
  %3837 = vmatpush2.msra.mxu0 %v3803
  %3838 = vmatprep.subr.mxu0 0.0
  %3839 = vmatpush2.msra.mxu0 %v3802
  %3840 = vmatprep.subr.mxu0 0.0
  %3841 = vmatpush2.msra.mxu0 %v3801
  %3842 = vmatprep.subr.mxu0 0.0
  %3843 = vmatpush2.msra.mxu0 %v3800
  %3844 = vmatprep.subr.mxu0 0.0
  %3845 = vmatpush2.msra.mxu0 %v3799
  %3846 = vmatprep.subr.mxu0 0.0
  %3847 = vmatpush2.msra.mxu0 %v3798
  %3848 = vmatprep.subr.mxu0 0.0
  %3849 = vmatpush2.msra.mxu0 %v3797
  %3850 = vmatprep.subr.mxu0 0.0
  %3851 = vmatpush2.msra.mxu0 %v3796
  %3852 = vmatprep.subr.mxu0 0.0
  %3853 = vmatpush2.msra.mxu0 %v3795
  %3854 = vmatprep.subr.mxu0 0.0
  %3855 = vmatpush2.msra.mxu0 %v3794
  %3856 = vmatprep.subr.mxu0 0.0
  %3857 = vmatpush2.msra.mxu0 %v3793
  %3858 = vmatprep.subr.mxu0 0.0
  %3859 = vmatpush2.msra.mxu0 %v3792
  %3860 = vmatprep.subr.mxu0 0.0
  %3861 = vmatpush2.msra.mxu0 %v3791
  %3862 = vmatprep.subr.mxu0 0.0
  %3863 = vmatpush2.msra.mxu0 %v3790
  %3864 = vmatprep.subr.mxu0 0.0
  %3865 = vmatpush2.msra.mxu0 %v3789
  %3866 = vmatprep.subr.mxu0 0.0
  %3867 = vmatpush2.msra.mxu0 %v3788
  %3868 = vmatprep.mubr.f32.mxu0 %v2061
  %3869 = vmatmul.mubr.f32.gmra.mxu0 %v2059
  %v3870 = vpop.f32.mrf.mxu0
  %v3871 = vadd.f32 0.0, %v3870
  %v3872 = vpop.f32.mrf.mxu0
  %3873 = vmatprep.mubr.f32.mxu0 %v2067
  %3874 = vmatmul.mubr.f32.gmra.mxu0 %v2065
  %v3875 = vpop.f32.mrf.mxu0
  %v3876 = vadd.f32 0.0, %v3875
  %v3877 = vpop.f32.mrf.mxu0
  %3878 = vmatprep.mubr.f32.mxu0 %v2073
  %3879 = vmatmul.mubr.f32.gmra.mxu0 %v2071
  %v3880 = vpop.f32.mrf.mxu0
  %v3881 = vadd.f32 0.0, %v3880
  %v3882 = vpop.f32.mrf.mxu0
  %3883 = vmatprep.mubr.f32.mxu0 %v2079
  %3884 = vmatmul.mubr.f32.gmra.mxu0 %v2077
  %v3885 = vpop.f32.mrf.mxu0
  %v3886 = vadd.f32 0.0, %v3885
  %v3887 = vpop.f32.mrf.mxu0
  %3888 = vmatprep.mubr.f32.mxu0 %v2085
  %3889 = vmatmul.mubr.f32.gmra.mxu0 %v2083
  %v3890 = vpop.f32.mrf.mxu0
  %v3891 = vadd.f32 0.0, %v3890
  %v3892 = vpop.f32.mrf.mxu0
  %3893 = vmatprep.mubr.f32.mxu0 %v2091
  %3894 = vmatmul.mubr.f32.gmra.mxu0 %v2089
  %v3895 = vpop.f32.mrf.mxu0
  %v3896 = vadd.f32 0.0, %v3895
  %v3897 = vpop.f32.mrf.mxu0
  %3898 = vmatprep.mubr.f32.mxu0 %v2097
  %3899 = vmatmul.mubr.f32.gmra.mxu0 %v2095
  %v3900 = vpop.f32.mrf.mxu0
  %v3901 = vadd.f32 0.0, %v3900
  %v3902 = vpop.f32.mrf.mxu0
  %3903 = vmatprep.mubr.f32.mxu0 %v2103
  %3904 = vmatmul.mubr.f32.gmra.mxu0 %v2101
  %v3905 = vpop.f32.mrf.mxu0
  %v3906 = vadd.f32 0.0, %v3905
  %v3907 = vpop.f32.mrf.mxu0
  %3908 = vmatprep.mubr.f32.mxu0 %v2109
  %3909 = vmatmul.mubr.f32.gmra.mxu0 %v2107
  %v3910 = vpop.f32.mrf.mxu0
  %v3911 = vadd.f32 0.0, %v3910
  %v3912 = vpop.f32.mrf.mxu0
  %3913 = vmatprep.mubr.f32.mxu0 %v2115
  %3914 = vmatmul.mubr.f32.gmra.mxu0 %v2113
  %v3915 = vpop.f32.mrf.mxu0
  %v3916 = vadd.f32 0.0, %v3915
  %v3917 = vpop.f32.mrf.mxu0
  %3918 = vmatprep.mubr.f32.mxu0 %v2121
  %3919 = vmatmul.mubr.f32.gmra.mxu0 %v2119
  %v3920 = vpop.f32.mrf.mxu0
  %v3921 = vadd.f32 0.0, %v3920
  %v3922 = vpop.f32.mrf.mxu0
  %3923 = vdwg.mxu0
  %s3924 = scalar_lea.vmem %s5, 640
  %v3925 = vld [vmem:[%s3924] sm:$0xff]
  %v3926 = vld [vmem:[%s3924 + $0x8] sm:$0xff]
  %v3927 = vld [vmem:[%s3924 + $0x10] sm:$0xff]
  %v3928 = vld [vmem:[%s3924 + $0x18] sm:$0xff]
  %v3929 = vld [vmem:[%s3924 + $0x20] sm:$0xff]
  %v3930 = vld [vmem:[%s3924 + $0x28] sm:$0xff]
  %v3931 = vld [vmem:[%s3924 + $0x30] sm:$0xff]
  %v3932 = vld [vmem:[%s3924 + $0x38] sm:$0xff]
  %v3933 = vld [vmem:[%s3924 + $0x40] sm:$0xff]
  %v3934 = vld [vmem:[%s3924 + $0x48] sm:$0xff]
  %v3935 = vld [vmem:[%s3924 + $0x50] sm:$0xff]
  %v3936 = vld [vmem:[%s3924 + $0x58] sm:$0xff]
  %v3937 = vld [vmem:[%s3924 + $0x60] sm:$0xff]
  %v3938 = vld [vmem:[%s3924 + $0x68] sm:$0xff]
  %v3939 = vld [vmem:[%s3924 + $0x70] sm:$0xff]
  %v3940 = vld [vmem:[%s3924 + $0x78] sm:$0xff]
  %v3941 = vld [vmem:[%s3924 + $0x80] sm:$0xff]
  %v3942 = vld [vmem:[%s3924 + $0x88] sm:$0xff]
  %v3943 = vld [vmem:[%s3924 + $0x90] sm:$0xff]
  %v3944 = vld [vmem:[%s3924 + $0x98] sm:$0xff]
  %v3946 = vsel %vm2469, %v3925, 0
  %v3949 = vsel %vm2469, %v3926, 0
  %v3952 = vsel %vm2469, %v3927, 0
  %v3955 = vsel %vm2469, %v3928, 0
  %v3958 = vsel %vm2469, %v3929, 0
  %v3961 = vsel %vm2469, %v3930, 0
  %v3964 = vsel %vm2469, %v3931, 0
  %v3967 = vsel %vm2469, %v3932, 0
  %v3970 = vsel %vm2469, %v3933, 0
  %v3973 = vsel %vm2469, %v3934, 0
  %v3976 = vsel %vm2469, %v3935, 0
  %v3979 = vsel %vm2469, %v3936, 0
  %v3982 = vsel %vm2469, %v3937, 0
  %v3985 = vsel %vm2469, %v3938, 0
  %v3988 = vsel %vm2469, %v3939, 0
  %v3991 = vsel %vm2469, %v3940, 0
  %v3994 = vsel %vm2469, %v3941, 0
  %v3997 = vsel %vm2469, %v3942, 0
  %v4000 = vsel %vm2469, %v3943, 0
  %v4003 = vsel %vm2469, %v3944, 0
  %v4006 = vsel %vm2530, %v3921, 0
  %4008 = vmatprep.subr.mxu0 0.0
  %4009 = vmatpush1.msra.mxu0 0.0
  %4010 = vmatprep.subr.mxu0 0.0
  %4011 = vmatpush1.msra.mxu0 0.0
  %4012 = vmatprep.subr.mxu0 0.0
  %4013 = vmatpush1.msra.mxu0 0.0
  %4014 = vmatprep.subr.mxu0 0.0
  %4015 = vmatpush1.msra.mxu0 0.0
  %4016 = vmatprep.subr.mxu0 0.0
  %4017 = vmatpush1.msra.mxu0 0.0
  %4018 = vmatprep.subr.mxu0 0.0
  %4019 = vmatpush1.msra.mxu0 %v4006
  %4020 = vmatprep.subr.mxu0 0.0
  %4021 = vmatpush1.msra.mxu0 %v3916
  %4022 = vmatprep.subr.mxu0 0.0
  %4023 = vmatpush1.msra.mxu0 %v3911
  %4024 = vmatprep.subr.mxu0 0.0
  %4025 = vmatpush1.msra.mxu0 %v3906
  %4026 = vmatprep.subr.mxu0 0.0
  %4027 = vmatpush1.msra.mxu0 %v3901
  %4028 = vmatprep.subr.mxu0 0.0
  %4029 = vmatpush1.msra.mxu0 %v3896
  %4030 = vmatprep.subr.mxu0 0.0
  %4031 = vmatpush1.msra.mxu0 %v3891
  %4032 = vmatprep.subr.mxu0 0.0
  %4033 = vmatpush1.msra.mxu0 %v3886
  %4034 = vmatprep.subr.mxu0 0.0
  %4035 = vmatpush1.msra.mxu0 %v3881
  %4036 = vmatprep.subr.mxu0 0.0
  %4037 = vmatpush1.msra.mxu0 %v3876
  %4038 = vmatprep.subr.mxu0 0.0
  %4039 = vmatpush1.msra.mxu0 %v3871
  %4040 = vmatprep.subr.mxu0 0.0
  %4041 = vmatpush2.msra.mxu0 0.0
  %4042 = vmatprep.subr.mxu0 0.0
  %4043 = vmatpush2.msra.mxu0 0.0
  %4044 = vmatprep.subr.mxu0 0.0
  %4045 = vmatpush2.msra.mxu0 0.0
  %4046 = vmatprep.subr.mxu0 0.0
  %4047 = vmatpush2.msra.mxu0 0.0
  %4048 = vmatprep.subr.mxu0 0.0
  %4049 = vmatpush2.msra.mxu0 0.0
  %4050 = vmatprep.subr.mxu0 0.0
  %4051 = vmatpush2.msra.mxu0 0.0
  %4052 = vmatprep.subr.mxu0 0.0
  %4053 = vmatpush2.msra.mxu0 0.0
  %4054 = vmatprep.subr.mxu0 0.0
  %4055 = vmatpush2.msra.mxu0 0.0
  %4056 = vmatprep.subr.mxu0 0.0
  %4057 = vmatpush2.msra.mxu0 0.0
  %4058 = vmatprep.subr.mxu0 0.0
  %4059 = vmatpush2.msra.mxu0 0.0
  %4060 = vmatprep.subr.mxu0 0.0
  %4061 = vmatpush2.msra.mxu0 0.0
  %4062 = vmatprep.subr.mxu0 0.0
  %4063 = vmatpush2.msra.mxu0 0.0
  %4064 = vmatprep.subr.mxu0 0.0
  %4065 = vmatpush2.msra.mxu0 0.0
  %4066 = vmatprep.subr.mxu0 0.0
  %4067 = vmatpush2.msra.mxu0 0.0
  %4068 = vmatprep.subr.mxu0 0.0
  %4069 = vmatpush2.msra.mxu0 0.0
  %4070 = vmatprep.subr.mxu0 0.0
  %4071 = vmatpush2.msra.mxu0 0.0
  %4072 = vmatprep.mubr.f32.mxu0 0.0
  %4073 = vmatmul.mubr.f32.gmra.mxu0 %v3946
  %v4074 = vpop.f32.mrf.mxu0
  %v4075 = vadd.f32 0.0, %v4074
  %v4076 = vpop.f32.mrf.mxu0
  %4077 = vmatprep.mubr.f32.mxu0 0.0
  %4078 = vmatmul.mubr.f32.gmra.mxu0 %v3949
  %v4079 = vpop.f32.mrf.mxu0
  %v4080 = vadd.f32 0.0, %v4079
  %v4081 = vpop.f32.mrf.mxu0
  %4082 = vmatprep.mubr.f32.mxu0 0.0
  %4083 = vmatmul.mubr.f32.gmra.mxu0 %v3952
  %v4084 = vpop.f32.mrf.mxu0
  %v4085 = vadd.f32 0.0, %v4084
  %v4086 = vpop.f32.mrf.mxu0
  %4087 = vmatprep.mubr.f32.mxu0 0.0
  %4088 = vmatmul.mubr.f32.gmra.mxu0 %v3955
  %v4089 = vpop.f32.mrf.mxu0
  %v4090 = vadd.f32 0.0, %v4089
  %v4091 = vpop.f32.mrf.mxu0
  %4092 = vmatprep.mubr.f32.mxu0 0.0
  %4093 = vmatmul.mubr.f32.gmra.mxu0 %v3958
  %v4094 = vpop.f32.mrf.mxu0
  %v4095 = vadd.f32 0.0, %v4094
  %v4096 = vpop.f32.mrf.mxu0
  %4097 = vmatprep.mubr.f32.mxu0 0.0
  %4098 = vmatmul.mubr.f32.gmra.mxu0 %v3961
  %v4099 = vpop.f32.mrf.mxu0
  %v4100 = vadd.f32 0.0, %v4099
  %v4101 = vpop.f32.mrf.mxu0
  %4102 = vmatprep.mubr.f32.mxu0 0.0
  %4103 = vmatmul.mubr.f32.gmra.mxu0 %v3964
  %v4104 = vpop.f32.mrf.mxu0
  %v4105 = vadd.f32 0.0, %v4104
  %v4106 = vpop.f32.mrf.mxu0
  %4107 = vmatprep.mubr.f32.mxu0 0.0
  %4108 = vmatmul.mubr.f32.gmra.mxu0 %v3967
  %v4109 = vpop.f32.mrf.mxu0
  %v4110 = vadd.f32 0.0, %v4109
  %v4111 = vpop.f32.mrf.mxu0
  %4112 = vmatprep.mubr.f32.mxu0 0.0
  %4113 = vmatmul.mubr.f32.gmra.mxu0 %v3970
  %v4114 = vpop.f32.mrf.mxu0
  %v4115 = vadd.f32 0.0, %v4114
  %v4116 = vpop.f32.mrf.mxu0
  %4117 = vmatprep.mubr.f32.mxu0 0.0
  %4118 = vmatmul.mubr.f32.gmra.mxu0 %v3973
  %v4119 = vpop.f32.mrf.mxu0
  %v4120 = vadd.f32 0.0, %v4119
  %v4121 = vpop.f32.mrf.mxu0
  %4122 = vmatprep.mubr.f32.mxu0 0.0
  %4123 = vmatmul.mubr.f32.gmra.mxu0 %v3976
  %v4124 = vpop.f32.mrf.mxu0
  %v4125 = vadd.f32 0.0, %v4124
  %v4126 = vpop.f32.mrf.mxu0
  %4127 = vmatprep.mubr.f32.mxu0 0.0
  %4128 = vmatmul.mubr.f32.gmra.mxu0 %v3979
  %v4129 = vpop.f32.mrf.mxu0
  %v4130 = vadd.f32 0.0, %v4129
  %v4131 = vpop.f32.mrf.mxu0
  %4132 = vmatprep.mubr.f32.mxu0 0.0
  %4133 = vmatmul.mubr.f32.gmra.mxu0 %v3982
  %v4134 = vpop.f32.mrf.mxu0
  %v4135 = vadd.f32 0.0, %v4134
  %v4136 = vpop.f32.mrf.mxu0
  %4137 = vmatprep.mubr.f32.mxu0 0.0
  %4138 = vmatmul.mubr.f32.gmra.mxu0 %v3985
  %v4139 = vpop.f32.mrf.mxu0
  %v4140 = vadd.f32 0.0, %v4139
  %v4141 = vpop.f32.mrf.mxu0
  %4142 = vmatprep.mubr.f32.mxu0 0.0
  %4143 = vmatmul.mubr.f32.gmra.mxu0 %v3988
  %v4144 = vpop.f32.mrf.mxu0
  %v4145 = vadd.f32 0.0, %v4144
  %v4146 = vpop.f32.mrf.mxu0
  %4147 = vmatprep.mubr.f32.mxu0 0.0
  %4148 = vmatmul.mubr.f32.gmra.mxu0 %v3991
  %v4149 = vpop.f32.mrf.mxu0
  %v4150 = vadd.f32 0.0, %v4149
  %v4151 = vpop.f32.mrf.mxu0
  %4152 = vmatprep.mubr.f32.mxu0 0.0
  %4153 = vmatmul.mubr.f32.gmra.mxu0 %v3994
  %v4154 = vpop.f32.mrf.mxu0
  %v4155 = vadd.f32 0.0, %v4154
  %v4156 = vpop.f32.mrf.mxu0
  %4157 = vmatprep.mubr.f32.mxu0 0.0
  %4158 = vmatmul.mubr.f32.gmra.mxu0 %v3997
  %v4159 = vpop.f32.mrf.mxu0
  %v4160 = vadd.f32 0.0, %v4159
  %v4161 = vpop.f32.mrf.mxu0
  %4162 = vmatprep.mubr.f32.mxu0 0.0
  %4163 = vmatmul.mubr.f32.gmra.mxu0 %v4000
  %v4164 = vpop.f32.mrf.mxu0
  %v4165 = vadd.f32 0.0, %v4164
  %v4166 = vpop.f32.mrf.mxu0
  %4167 = vmatprep.mubr.f32.mxu0 0.0
  %4168 = vmatmul.mubr.f32.gmra.mxu0 %v4003
  %v4169 = vpop.f32.mrf.mxu0
  %v4170 = vadd.f32 0.0, %v4169
  %v4171 = vpop.f32.mrf.mxu0
  %4172 = vdwg.mxu0
  %v4173 = vadd.f32 %v3751, %v4075
  %v4174 = vadd.f32 %v3752, %v4080
  %v4175 = vadd.f32 %v3753, %v4085
  %v4176 = vadd.f32 %v3754, %v4090
  %v4177 = vadd.f32 %v3755, %v4095
  %v4178 = vadd.f32 %v3756, %v4100
  %v4179 = vadd.f32 %v3757, %v4105
  %v4180 = vadd.f32 %v3758, %v4110
  %v4181 = vadd.f32 %v3759, %v4115
  %v4182 = vadd.f32 %v3760, %v4120
  %v4183 = vadd.f32 %v3761, %v4125
  %v4184 = vadd.f32 %v3762, %v4130
  %v4185 = vadd.f32 %v3763, %v4135
  %v4186 = vadd.f32 %v3764, %v4140
  %v4187 = vadd.f32 %v3765, %v4145
  %v4188 = vadd.f32 %v3766, %v4150
  %v4189 = vadd.f32 %v3767, %v4155
  %v4190 = vadd.f32 %v3768, %v4160
  %v4191 = vadd.f32 %v3769, %v4165
  %v4192 = vadd.f32 %v3770, %v4170
  %v4193 = vld [vmem:[%s6] sm:$0xff]
  %v4194 = vld [vmem:[%s6 + $0x8] sm:$0xff]
  %v4195 = vld [vmem:[%s6 + $0x10] sm:$0xff]
  %v4196 = vld [vmem:[%s6 + $0x18] sm:$0xff]
  %v4197 = vld [vmem:[%s6 + $0x20] sm:$0xff]
  %v4198 = vld [vmem:[%s6 + $0x28] sm:$0xff]
  %v4199 = vld [vmem:[%s6 + $0x30] sm:$0xff]
  %v4200 = vld [vmem:[%s6 + $0x38] sm:$0xff]
  %v4201 = vld [vmem:[%s6 + $0x40] sm:$0xff]
  %v4202 = vld [vmem:[%s6 + $0x48] sm:$0xff]
  %v4203 = vld [vmem:[%s6 + $0x50] sm:$0xff]
  %v4204 = vld [vmem:[%s6 + $0x58] sm:$0xff]
  %v4205 = vld [vmem:[%s6 + $0x60] sm:$0xff]
  %v4206 = vld [vmem:[%s6 + $0x68] sm:$0xff]
  %v4207 = vld [vmem:[%s6 + $0x70] sm:$0xff]
  %v4208 = vld [vmem:[%s6 + $0x78] sm:$0xff]
  %v4209 = vld [vmem:[%s6 + $0x80] sm:$0xff]
  %v4210 = vld [vmem:[%s6 + $0x88] sm:$0xff]
  %v4211 = vld [vmem:[%s6 + $0x90] sm:$0xff]
  %v4212 = vld [vmem:[%s6 + $0x98] sm:$0xff]
  %4214 = vset.pattern.permute.xlu0 0
  %4215 = vperm.xlu0 %4214, %v4193
  %v4216 = vpop.permute.xlu0 %4215
  %4219 = vset.pattern.permute.xlu0 0
  %4220 = vperm.xlu0 %4219, %v4194
  %v4221 = vpop.permute.xlu0 %4220
  %4224 = vset.pattern.permute.xlu0 0
  %4225 = vperm.xlu0 %4224, %v4195
  %v4226 = vpop.permute.xlu0 %4225
  %4229 = vset.pattern.permute.xlu0 0
  %4230 = vperm.xlu0 %4229, %v4196
  %v4231 = vpop.permute.xlu0 %4230
  %4234 = vset.pattern.permute.xlu0 0
  %4235 = vperm.xlu0 %4234, %v4197
  %v4236 = vpop.permute.xlu0 %4235
  %4239 = vset.pattern.permute.xlu0 0
  %4240 = vperm.xlu0 %4239, %v4198
  %v4241 = vpop.permute.xlu0 %4240
  %4244 = vset.pattern.permute.xlu0 0
  %4245 = vperm.xlu0 %4244, %v4199
  %v4246 = vpop.permute.xlu0 %4245
  %4249 = vset.pattern.permute.xlu0 0
  %4250 = vperm.xlu0 %4249, %v4200
  %v4251 = vpop.permute.xlu0 %4250
  %4254 = vset.pattern.permute.xlu0 0
  %4255 = vperm.xlu0 %4254, %v4201
  %v4256 = vpop.permute.xlu0 %4255
  %4259 = vset.pattern.permute.xlu0 0
  %4260 = vperm.xlu0 %4259, %v4202
  %v4261 = vpop.permute.xlu0 %4260
  %4264 = vset.pattern.permute.xlu0 0
  %4265 = vperm.xlu0 %4264, %v4203
  %v4266 = vpop.permute.xlu0 %4265
  %4269 = vset.pattern.permute.xlu0 0
  %4270 = vperm.xlu0 %4269, %v4204
  %v4271 = vpop.permute.xlu0 %4270
  %4274 = vset.pattern.permute.xlu0 0
  %4275 = vperm.xlu0 %4274, %v4205
  %v4276 = vpop.permute.xlu0 %4275
  %4279 = vset.pattern.permute.xlu0 0
  %4280 = vperm.xlu0 %4279, %v4206
  %v4281 = vpop.permute.xlu0 %4280
  %4284 = vset.pattern.permute.xlu0 0
  %4285 = vperm.xlu0 %4284, %v4207
  %v4286 = vpop.permute.xlu0 %4285
  %4289 = vset.pattern.permute.xlu0 0
  %4290 = vperm.xlu0 %4289, %v4208
  %v4291 = vpop.permute.xlu0 %4290
  %4294 = vset.pattern.permute.xlu0 0
  %4295 = vperm.xlu0 %4294, %v4209
  %v4296 = vpop.permute.xlu0 %4295
  %4299 = vset.pattern.permute.xlu0 0
  %4300 = vperm.xlu0 %4299, %v4210
  %v4301 = vpop.permute.xlu0 %4300
  %4304 = vset.pattern.permute.xlu0 0
  %4305 = vperm.xlu0 %4304, %v4211
  %v4306 = vpop.permute.xlu0 %4305
  %4309 = vset.pattern.permute.xlu0 0
  %4310 = vperm.xlu0 %4309, %v4212
  %v4311 = vpop.permute.xlu0 %4310
  %v4313 = vadd.f32 %v4173, %v4216
  %v4314 = vadd.f32 %v4174, %v4221
  %v4315 = vadd.f32 %v4175, %v4226
  %v4316 = vadd.f32 %v4176, %v4231
  %v4317 = vadd.f32 %v4177, %v4236
  %v4318 = vadd.f32 %v4178, %v4241
  %v4319 = vadd.f32 %v4179, %v4246
  %v4320 = vadd.f32 %v4180, %v4251
  %v4321 = vadd.f32 %v4181, %v4256
  %v4322 = vadd.f32 %v4182, %v4261
  %v4323 = vadd.f32 %v4183, %v4266
  %v4324 = vadd.f32 %v4184, %v4271
  %v4325 = vadd.f32 %v4185, %v4276
  %v4326 = vadd.f32 %v4186, %v4281
  %v4327 = vadd.f32 %v4187, %v4286
  %v4328 = vadd.f32 %v4188, %v4291
  %v4329 = vadd.f32 %v4189, %v4296
  %v4330 = vadd.f32 %v4190, %v4301
  %v4331 = vadd.f32 %v4191, %v4306
  %v4332 = vadd.f32 %v4192, %v4311
  %v4333 = vmul.f32 %v4313, 0.5
  %v4334 = vmul.f32 %v4314, 0.5
  %v4335 = vmul.f32 %v4315, 0.5
  %v4336 = vmul.f32 %v4316, 0.5
  %v4337 = vmul.f32 %v4317, 0.5
  %v4338 = vmul.f32 %v4318, 0.5
  %v4339 = vmul.f32 %v4319, 0.5
  %v4340 = vmul.f32 %v4320, 0.5
  %v4341 = vmul.f32 %v4321, 0.5
  %v4342 = vmul.f32 %v4322, 0.5
  %v4343 = vmul.f32 %v4323, 0.5
  %v4344 = vmul.f32 %v4324, 0.5
  %v4345 = vmul.f32 %v4325, 0.5
  %v4346 = vmul.f32 %v4326, 0.5
  %v4347 = vmul.f32 %v4327, 0.5
  %v4348 = vmul.f32 %v4328, 0.5
  %v4349 = vmul.f32 %v4329, 0.5
  %v4350 = vmul.f32 %v4330, 0.5
  %v4351 = vmul.f32 %v4331, 0.5
  %v4352 = vmul.f32 %v4332, 0.5
  %v4353 = vtanh.pop %v4333
  %v4354 = vtanh.pop %v4334
  %v4355 = vtanh.pop %v4335
  %v4356 = vtanh.pop %v4336
  %v4357 = vtanh.pop %v4337
  %v4358 = vtanh.pop %v4338
  %v4359 = vtanh.pop %v4339
  %v4360 = vtanh.pop %v4340
  %v4361 = vtanh.pop %v4341
  %v4362 = vtanh.pop %v4342
  %v4363 = vtanh.pop %v4343
  %v4364 = vtanh.pop %v4344
  %v4365 = vtanh.pop %v4345
  %v4366 = vtanh.pop %v4346
  %v4367 = vtanh.pop %v4347
  %v4368 = vtanh.pop %v4348
  %v4369 = vtanh.pop %v4349
  %v4370 = vtanh.pop %v4350
  %v4371 = vtanh.pop %v4351
  %v4372 = vtanh.pop %v4352
  %v4373 = vmul.f32 %v4353, 0.5
  %v4374 = vmul.f32 %v4354, 0.5
  %v4375 = vmul.f32 %v4355, 0.5
  %v4376 = vmul.f32 %v4356, 0.5
  %v4377 = vmul.f32 %v4357, 0.5
  %v4378 = vmul.f32 %v4358, 0.5
  %v4379 = vmul.f32 %v4359, 0.5
  %v4380 = vmul.f32 %v4360, 0.5
  %v4381 = vmul.f32 %v4361, 0.5
  %v4382 = vmul.f32 %v4362, 0.5
  %v4383 = vmul.f32 %v4363, 0.5
  %v4384 = vmul.f32 %v4364, 0.5
  %v4385 = vmul.f32 %v4365, 0.5
  %v4386 = vmul.f32 %v4366, 0.5
  %v4387 = vmul.f32 %v4367, 0.5
  %v4388 = vmul.f32 %v4368, 0.5
  %v4389 = vmul.f32 %v4369, 0.5
  %v4390 = vmul.f32 %v4370, 0.5
  %v4391 = vmul.f32 %v4371, 0.5
  %v4392 = vmul.f32 %v4372, 0.5
  %v4393 = vadd.f32 %v4373, 0.5
  %v4394 = vadd.f32 %v4374, 0.5
  %v4395 = vadd.f32 %v4375, 0.5
  %v4396 = vadd.f32 %v4376, 0.5
  %v4397 = vadd.f32 %v4377, 0.5
  %v4398 = vadd.f32 %v4378, 0.5
  %v4399 = vadd.f32 %v4379, 0.5
  %v4400 = vadd.f32 %v4380, 0.5
  %v4401 = vadd.f32 %v4381, 0.5
  %v4402 = vadd.f32 %v4382, 0.5
  %v4403 = vadd.f32 %v4383, 0.5
  %v4404 = vadd.f32 %v4384, 0.5
  %v4405 = vadd.f32 %v4385, 0.5
  %v4406 = vadd.f32 %v4386, 0.5
  %v4407 = vadd.f32 %v4387, 0.5
  %v4408 = vadd.f32 %v4388, 0.5
  %v4409 = vadd.f32 %v4389, 0.5
  %v4410 = vadd.f32 %v4390, 0.5
  %v4411 = vadd.f32 %v4391, 0.5
  %v4412 = vadd.f32 %v4392, 0.5
  %v4413 = vld [vmem:[%s7] sm:$0xff]
  %v4414 = vld [vmem:[%s7 + $0x8] sm:$0xff]
  %v4415 = vld [vmem:[%s7 + $0x10] sm:$0xff]
  %v4416 = vld [vmem:[%s7 + $0x18] sm:$0xff]
  %v4417 = vld [vmem:[%s7 + $0x20] sm:$0xff]
  %v4418 = vld [vmem:[%s7 + $0x28] sm:$0xff]
  %v4419 = vld [vmem:[%s7 + $0x30] sm:$0xff]
  %v4420 = vld [vmem:[%s7 + $0x38] sm:$0xff]
  %v4421 = vld [vmem:[%s7 + $0x40] sm:$0xff]
  %v4422 = vld [vmem:[%s7 + $0x48] sm:$0xff]
  %v4423 = vld [vmem:[%s7 + $0x50] sm:$0xff]
  %v4424 = vld [vmem:[%s7 + $0x58] sm:$0xff]
  %v4425 = vld [vmem:[%s7 + $0x60] sm:$0xff]
  %v4426 = vld [vmem:[%s7 + $0x68] sm:$0xff]
  %v4427 = vld [vmem:[%s7 + $0x70] sm:$0xff]
  %v4428 = vld [vmem:[%s7 + $0x78] sm:$0xff]
  %v4429 = vld [vmem:[%s7 + $0x80] sm:$0xff]
  %v4430 = vld [vmem:[%s7 + $0x88] sm:$0xff]
  %v4431 = vld [vmem:[%s7 + $0x90] sm:$0xff]
  %v4432 = vld [vmem:[%s7 + $0x98] sm:$0xff]
  %v4434 = vsel %vm110, %v4414, 0
  %v4437 = vsel %vm110, %v4416, 0
  %v4440 = vsel %vm110, %v4418, 0
  %v4443 = vsel %vm110, %v4420, 0
  %v4446 = vsel %vm110, %v4422, 0
  %v4449 = vsel %vm110, %v4424, 0
  %v4452 = vsel %vm110, %v4426, 0
  %v4455 = vsel %vm110, %v4428, 0
  %v4458 = vsel %vm110, %v4430, 0
  %v4461 = vsel %vm110, %v4432, 0
  %4463 = vmatprep.subr.mxu0 0.0
  %4464 = vmatpush1.msra.mxu0 %v4408
  %4465 = vmatprep.subr.mxu0 0.0
  %4466 = vmatpush1.msra.mxu0 %v4407
  %4467 = vmatprep.subr.mxu0 0.0
  %4468 = vmatpush1.msra.mxu0 %v4406
  %4469 = vmatprep.subr.mxu0 0.0
  %4470 = vmatpush1.msra.mxu0 %v4405
  %4471 = vmatprep.subr.mxu0 0.0
  %4472 = vmatpush1.msra.mxu0 %v4404
  %4473 = vmatprep.subr.mxu0 0.0
  %4474 = vmatpush1.msra.mxu0 %v4403
  %4475 = vmatprep.subr.mxu0 0.0
  %4476 = vmatpush1.msra.mxu0 %v4402
  %4477 = vmatprep.subr.mxu0 0.0
  %4478 = vmatpush1.msra.mxu0 %v4401
  %4479 = vmatprep.subr.mxu0 0.0
  %4480 = vmatpush1.msra.mxu0 %v4400
  %4481 = vmatprep.subr.mxu0 0.0
  %4482 = vmatpush1.msra.mxu0 %v4399
  %4483 = vmatprep.subr.mxu0 0.0
  %4484 = vmatpush1.msra.mxu0 %v4398
  %4485 = vmatprep.subr.mxu0 0.0
  %4486 = vmatpush1.msra.mxu0 %v4397
  %4487 = vmatprep.subr.mxu0 0.0
  %4488 = vmatpush1.msra.mxu0 %v4396
  %4489 = vmatprep.subr.mxu0 0.0
  %4490 = vmatpush1.msra.mxu0 %v4395
  %4491 = vmatprep.subr.mxu0 0.0
  %4492 = vmatpush1.msra.mxu0 %v4394
  %4493 = vmatprep.subr.mxu0 0.0
  %4494 = vmatpush1.msra.mxu0 %v4393
  %4495 = vmatprep.subr.mxu0 0.0
  %4496 = vmatpush2.msra.mxu0 0.0
  %4497 = vmatprep.subr.mxu0 0.0
  %4498 = vmatpush2.msra.mxu0 0.0
  %4499 = vmatprep.subr.mxu0 0.0
  %4500 = vmatpush2.msra.mxu0 0.0
  %4501 = vmatprep.subr.mxu0 0.0
  %4502 = vmatpush2.msra.mxu0 0.0
  %4503 = vmatprep.subr.mxu0 0.0
  %4504 = vmatpush2.msra.mxu0 0.0
  %4505 = vmatprep.subr.mxu0 0.0
  %4506 = vmatpush2.msra.mxu0 0.0
  %4507 = vmatprep.subr.mxu0 0.0
  %4508 = vmatpush2.msra.mxu0 0.0
  %4509 = vmatprep.subr.mxu0 0.0
  %4510 = vmatpush2.msra.mxu0 0.0
  %4511 = vmatprep.subr.mxu0 0.0
  %4512 = vmatpush2.msra.mxu0 0.0
  %4513 = vmatprep.subr.mxu0 0.0
  %4514 = vmatpush2.msra.mxu0 0.0
  %4515 = vmatprep.subr.mxu0 0.0
  %4516 = vmatpush2.msra.mxu0 0.0
  %4517 = vmatprep.subr.mxu0 0.0
  %4518 = vmatpush2.msra.mxu0 0.0
  %4519 = vmatprep.subr.mxu0 0.0
  %4520 = vmatpush2.msra.mxu0 %v4412
  %4521 = vmatprep.subr.mxu0 0.0
  %4522 = vmatpush2.msra.mxu0 %v4411
  %4523 = vmatprep.subr.mxu0 0.0
  %4524 = vmatpush2.msra.mxu0 %v4410
  %4525 = vmatprep.subr.mxu0 0.0
  %4526 = vmatpush2.msra.mxu0 %v4409
  %4527 = vmatprep.mubr.f32.mxu0 %v4434
  %4528 = vmatmul.mubr.f32.gmra.mxu0 %v4413
  %v4529 = vpop.f32.mrf.mxu0
  %v4530 = vadd.f32 0.0, %v4529
  %v4531 = vpop.f32.mrf.mxu0
  %4532 = vmatprep.mubr.f32.mxu0 %v4437
  %4533 = vmatmul.mubr.f32.gmra.mxu0 %v4415
  %v4534 = vpop.f32.mrf.mxu0
  %v4535 = vadd.f32 0.0, %v4534
  %v4536 = vpop.f32.mrf.mxu0
  %4537 = vmatprep.mubr.f32.mxu0 %v4440
  %4538 = vmatmul.mubr.f32.gmra.mxu0 %v4417
  %v4539 = vpop.f32.mrf.mxu0
  %v4540 = vadd.f32 0.0, %v4539
  %v4541 = vpop.f32.mrf.mxu0
  %4542 = vmatprep.mubr.f32.mxu0 %v4443
  %4543 = vmatmul.mubr.f32.gmra.mxu0 %v4419
  %v4544 = vpop.f32.mrf.mxu0
  %v4545 = vadd.f32 0.0, %v4544
  %v4546 = vpop.f32.mrf.mxu0
  %4547 = vmatprep.mubr.f32.mxu0 %v4446
  %4548 = vmatmul.mubr.f32.gmra.mxu0 %v4421
  %v4549 = vpop.f32.mrf.mxu0
  %v4550 = vadd.f32 0.0, %v4549
  %v4551 = vpop.f32.mrf.mxu0
  %4552 = vmatprep.mubr.f32.mxu0 %v4449
  %4553 = vmatmul.mubr.f32.gmra.mxu0 %v4423
  %v4554 = vpop.f32.mrf.mxu0
  %v4555 = vadd.f32 0.0, %v4554
  %v4556 = vpop.f32.mrf.mxu0
  %4557 = vmatprep.mubr.f32.mxu0 %v4452
  %4558 = vmatmul.mubr.f32.gmra.mxu0 %v4425
  %v4559 = vpop.f32.mrf.mxu0
  %v4560 = vadd.f32 0.0, %v4559
  %v4561 = vpop.f32.mrf.mxu0
  %4562 = vmatprep.mubr.f32.mxu0 %v4455
  %4563 = vmatmul.mubr.f32.gmra.mxu0 %v4427
  %v4564 = vpop.f32.mrf.mxu0
  %v4565 = vadd.f32 0.0, %v4564
  %v4566 = vpop.f32.mrf.mxu0
  %4567 = vmatprep.mubr.f32.mxu0 %v4458
  %4568 = vmatmul.mubr.f32.gmra.mxu0 %v4429
  %v4569 = vpop.f32.mrf.mxu0
  %v4570 = vadd.f32 0.0, %v4569
  %v4571 = vpop.f32.mrf.mxu0
  %4572 = vmatprep.mubr.f32.mxu0 %v4461
  %4573 = vmatmul.mubr.f32.gmra.mxu0 %v4431
  %v4574 = vpop.f32.mrf.mxu0
  %v4575 = vadd.f32 0.0, %v4574
  %v4576 = vpop.f32.mrf.mxu0
  %4577 = vdwg.mxu0
  %v4578 = vld [vmem:[%s8] sm:$0xff]
  %v4579 = vld [vmem:[%s8 + $0x8] sm:$0xff]
  %v4580 = vld [vmem:[%s8 + $0x10] sm:$0xff]
  %v4581 = vld [vmem:[%s8 + $0x18] sm:$0xff]
  %v4582 = vld [vmem:[%s8 + $0x20] sm:$0xff]
  %v4583 = vld [vmem:[%s8 + $0x28] sm:$0xff]
  %v4584 = vld [vmem:[%s8 + $0x30] sm:$0xff]
  %v4585 = vld [vmem:[%s8 + $0x38] sm:$0xff]
  %v4586 = vld [vmem:[%s8 + $0x40] sm:$0xff]
  %v4587 = vld [vmem:[%s8 + $0x48] sm:$0xff]
  %v4588 = vld [vmem:[%s8 + $0x50] sm:$0xff]
  %v4589 = vld [vmem:[%s8 + $0x58] sm:$0xff]
  %v4590 = vld [vmem:[%s8 + $0x60] sm:$0xff]
  %v4591 = vld [vmem:[%s8 + $0x68] sm:$0xff]
  %vm4592 = vcmask 916480
  %v4594 = vsel %vm4592, %v4530, 0
  %v4597 = vsel %vm4592, %v4535, 0
  %v4600 = vsel %vm4592, %v4540, 0
  %v4603 = vsel %vm4592, %v4545, 0
  %v4606 = vsel %vm4592, %v4550, 0
  %v4609 = vsel %vm4592, %v4555, 0
  %v4612 = vsel %vm4592, %v4560, 0
  %v4615 = vsel %vm4592, %v4565, 0
  %v4618 = vsel %vm4592, %v4570, 0
  %v4621 = vsel %vm4592, %v4575, 0
  %4623 = vmatprep.subr.mxu0 0.0
  %4624 = vmatpush1.msra.mxu0 0.0
  %4625 = vmatprep.subr.mxu0 0.0
  %4626 = vmatpush1.msra.mxu0 0.0
  %4627 = vmatprep.subr.mxu0 0.0
  %4628 = vmatpush1.msra.mxu0 %v4591
  %4629 = vmatprep.subr.mxu0 0.0
  %4630 = vmatpush1.msra.mxu0 %v4590
  %4631 = vmatprep.subr.mxu0 0.0
  %4632 = vmatpush1.msra.mxu0 %v4589
  %4633 = vmatprep.subr.mxu0 0.0
  %4634 = vmatpush1.msra.mxu0 %v4588
  %4635 = vmatprep.subr.mxu0 0.0
  %4636 = vmatpush1.msra.mxu0 %v4587
  %4637 = vmatprep.subr.mxu0 0.0
  %4638 = vmatpush1.msra.mxu0 %v4586
  %4639 = vmatprep.subr.mxu0 0.0
  %4640 = vmatpush1.msra.mxu0 %v4585
  %4641 = vmatprep.subr.mxu0 0.0
  %4642 = vmatpush1.msra.mxu0 %v4584
  %4643 = vmatprep.subr.mxu0 0.0
  %4644 = vmatpush1.msra.mxu0 %v4583
  %4645 = vmatprep.subr.mxu0 0.0
  %4646 = vmatpush1.msra.mxu0 %v4582
  %4647 = vmatprep.subr.mxu0 0.0
  %4648 = vmatpush1.msra.mxu0 %v4581
  %4649 = vmatprep.subr.mxu0 0.0
  %4650 = vmatpush1.msra.mxu0 %v4580
  %4651 = vmatprep.subr.mxu0 0.0
  %4652 = vmatpush1.msra.mxu0 %v4579
  %4653 = vmatprep.subr.mxu0 0.0
  %4654 = vmatpush1.msra.mxu0 %v4578
  %4655 = vmatprep.subr.mxu0 0.0
  %4656 = vmatpush2.msra.mxu0 0.0
  %4657 = vmatprep.subr.mxu0 0.0
  %4658 = vmatpush2.msra.mxu0 0.0
  %4659 = vmatprep.subr.mxu0 0.0
  %4660 = vmatpush2.msra.mxu0 0.0
  %4661 = vmatprep.subr.mxu0 0.0
  %4662 = vmatpush2.msra.mxu0 0.0
  %4663 = vmatprep.subr.mxu0 0.0
  %4664 = vmatpush2.msra.mxu0 0.0
  %4665 = vmatprep.subr.mxu0 0.0
  %4666 = vmatpush2.msra.mxu0 0.0
  %4667 = vmatprep.subr.mxu0 0.0
  %4668 = vmatpush2.msra.mxu0 0.0
  %4669 = vmatprep.subr.mxu0 0.0
  %4670 = vmatpush2.msra.mxu0 0.0
  %4671 = vmatprep.subr.mxu0 0.0
  %4672 = vmatpush2.msra.mxu0 0.0
  %4673 = vmatprep.subr.mxu0 0.0
  %4674 = vmatpush2.msra.mxu0 0.0
  %4675 = vmatprep.subr.mxu0 0.0
  %4676 = vmatpush2.msra.mxu0 0.0
  %4677 = vmatprep.subr.mxu0 0.0
  %4678 = vmatpush2.msra.mxu0 0.0
  %4679 = vmatprep.subr.mxu0 0.0
  %4680 = vmatpush2.msra.mxu0 0.0
  %4681 = vmatprep.subr.mxu0 0.0
  %4682 = vmatpush2.msra.mxu0 0.0
  %4683 = vmatprep.subr.mxu0 0.0
  %4684 = vmatpush2.msra.mxu0 0.0
  %4685 = vmatprep.subr.mxu0 0.0
  %4686 = vmatpush2.msra.mxu0 0.0
  %4687 = vmatprep.mubr.f32.mxu0 0.0
  %4688 = vmatmul.mubr.f32.gmra.mxu0 %v4594
  %v4689 = vpop.f32.mrf.mxu0
  %v4690 = vadd.f32 0.0, %v4689
  %v4691 = vpop.f32.mrf.mxu0
  %4692 = vmatprep.mubr.f32.mxu0 0.0
  %4693 = vmatmul.mubr.f32.gmra.mxu0 %v4597
  %v4694 = vpop.f32.mrf.mxu0
  %v4695 = vadd.f32 0.0, %v4694
  %v4696 = vpop.f32.mrf.mxu0
  %4697 = vmatprep.mubr.f32.mxu0 0.0
  %4698 = vmatmul.mubr.f32.gmra.mxu0 %v4600
  %v4699 = vpop.f32.mrf.mxu0
  %v4700 = vadd.f32 0.0, %v4699
  %v4701 = vpop.f32.mrf.mxu0
  %4702 = vmatprep.mubr.f32.mxu0 0.0
  %4703 = vmatmul.mubr.f32.gmra.mxu0 %v4603
  %v4704 = vpop.f32.mrf.mxu0
  %v4705 = vadd.f32 0.0, %v4704
  %v4706 = vpop.f32.mrf.mxu0
  %4707 = vmatprep.mubr.f32.mxu0 0.0
  %4708 = vmatmul.mubr.f32.gmra.mxu0 %v4606
  %v4709 = vpop.f32.mrf.mxu0
  %v4710 = vadd.f32 0.0, %v4709
  %v4711 = vpop.f32.mrf.mxu0
  %4712 = vmatprep.mubr.f32.mxu0 0.0
  %4713 = vmatmul.mubr.f32.gmra.mxu0 %v4609
  %v4714 = vpop.f32.mrf.mxu0
  %v4715 = vadd.f32 0.0, %v4714
  %v4716 = vpop.f32.mrf.mxu0
  %4717 = vmatprep.mubr.f32.mxu0 0.0
  %4718 = vmatmul.mubr.f32.gmra.mxu0 %v4612
  %v4719 = vpop.f32.mrf.mxu0
  %v4720 = vadd.f32 0.0, %v4719
  %v4721 = vpop.f32.mrf.mxu0
  %4722 = vmatprep.mubr.f32.mxu0 0.0
  %4723 = vmatmul.mubr.f32.gmra.mxu0 %v4615
  %v4724 = vpop.f32.mrf.mxu0
  %v4725 = vadd.f32 0.0, %v4724
  %v4726 = vpop.f32.mrf.mxu0
  %4727 = vmatprep.mubr.f32.mxu0 0.0
  %4728 = vmatmul.mubr.f32.gmra.mxu0 %v4618
  %v4729 = vpop.f32.mrf.mxu0
  %v4730 = vadd.f32 0.0, %v4729
  %v4731 = vpop.f32.mrf.mxu0
  %4732 = vmatprep.mubr.f32.mxu0 0.0
  %4733 = vmatmul.mubr.f32.gmra.mxu0 %v4621
  %v4734 = vpop.f32.mrf.mxu0
  %v4735 = vadd.f32 0.0, %v4734
  %v4736 = vpop.f32.mrf.mxu0
  %4737 = vdwg.mxu0
  %v4738 = vld [vmem:[%s9] sm:$0xff]
  %v4739 = vld [vmem:[%s9 + $0x8] sm:$0xff]
  %v4740 = vld [vmem:[%s9 + $0x10] sm:$0xff]
  %v4741 = vld [vmem:[%s9 + $0x18] sm:$0xff]
  %v4742 = vld [vmem:[%s9 + $0x20] sm:$0xff]
  %v4743 = vld [vmem:[%s9 + $0x28] sm:$0xff]
  %v4744 = vld [vmem:[%s9 + $0x30] sm:$0xff]
  %v4745 = vld [vmem:[%s9 + $0x38] sm:$0xff]
  %v4746 = vld [vmem:[%s9 + $0x40] sm:$0xff]
  %v4747 = vld [vmem:[%s9 + $0x48] sm:$0xff]
  %s4748 = scalar_lea.vmem %s8, 112
  %v4749 = vld [vmem:[%s4748] sm:$0xff]
  %v4750 = vld [vmem:[%s4748 + $0x8] sm:$0xff]
  %v4751 = vld [vmem:[%s4748 + $0x10] sm:$0xff]
  %v4752 = vld [vmem:[%s4748 + $0x18] sm:$0xff]
  %v4753 = vld [vmem:[%s4748 + $0x20] sm:$0xff]
  %v4754 = vld [vmem:[%s4748 + $0x28] sm:$0xff]
  %v4755 = vld [vmem:[%s4748 + $0x30] sm:$0xff]
  %v4756 = vld [vmem:[%s4748 + $0x38] sm:$0xff]
  %v4757 = vld [vmem:[%s4748 + $0x40] sm:$0xff]
  %v4758 = vld [vmem:[%s4748 + $0x48] sm:$0xff]
  %v4759 = vld [vmem:[%s4748 + $0x50] sm:$0xff]
  %v4760 = vld [vmem:[%s4748 + $0x58] sm:$0xff]
  %v4761 = vld [vmem:[%s4748 + $0x60] sm:$0xff]
  %v4762 = vld [vmem:[%s4748 + $0x68] sm:$0xff]
  %4763 = vmatprep.subr.mxu0 0.0
  %4764 = vmatpush1.msra.mxu0 0.0
  %4765 = vmatprep.subr.mxu0 0.0
  %4766 = vmatpush1.msra.mxu0 0.0
  %4767 = vmatprep.subr.mxu0 0.0
  %4768 = vmatpush1.msra.mxu0 %v4762
  %4769 = vmatprep.subr.mxu0 0.0
  %4770 = vmatpush1.msra.mxu0 %v4761
  %4771 = vmatprep.subr.mxu0 0.0
  %4772 = vmatpush1.msra.mxu0 %v4760
  %4773 = vmatprep.subr.mxu0 0.0
  %4774 = vmatpush1.msra.mxu0 %v4759
  %4775 = vmatprep.subr.mxu0 0.0
  %4776 = vmatpush1.msra.mxu0 %v4758
  %4777 = vmatprep.subr.mxu0 0.0
  %4778 = vmatpush1.msra.mxu0 %v4757
  %4779 = vmatprep.subr.mxu0 0.0
  %4780 = vmatpush1.msra.mxu0 %v4756
  %4781 = vmatprep.subr.mxu0 0.0
  %4782 = vmatpush1.msra.mxu0 %v4755
  %4783 = vmatprep.subr.mxu0 0.0
  %4784 = vmatpush1.msra.mxu0 %v4754
  %4785 = vmatprep.subr.mxu0 0.0
  %4786 = vmatpush1.msra.mxu0 %v4753
  %4787 = vmatprep.subr.mxu0 0.0
  %4788 = vmatpush1.msra.mxu0 %v4752
  %4789 = vmatprep.subr.mxu0 0.0
  %4790 = vmatpush1.msra.mxu0 %v4751
  %4791 = vmatprep.subr.mxu0 0.0
  %4792 = vmatpush1.msra.mxu0 %v4750
  %4793 = vmatprep.subr.mxu0 0.0
  %4794 = vmatpush1.msra.mxu0 %v4749
  %4795 = vmatprep.subr.mxu0 0.0
  %4796 = vmatpush2.msra.mxu0 0.0
  %4797 = vmatprep.subr.mxu0 0.0
  %4798 = vmatpush2.msra.mxu0 0.0
  %4799 = vmatprep.subr.mxu0 0.0
  %4800 = vmatpush2.msra.mxu0 0.0
  %4801 = vmatprep.subr.mxu0 0.0
  %4802 = vmatpush2.msra.mxu0 0.0
  %4803 = vmatprep.subr.mxu0 0.0
  %4804 = vmatpush2.msra.mxu0 0.0
  %4805 = vmatprep.subr.mxu0 0.0
  %4806 = vmatpush2.msra.mxu0 0.0
  %4807 = vmatprep.subr.mxu0 0.0
  %4808 = vmatpush2.msra.mxu0 0.0
  %4809 = vmatprep.subr.mxu0 0.0
  %4810 = vmatpush2.msra.mxu0 0.0
  %4811 = vmatprep.subr.mxu0 0.0
  %4812 = vmatpush2.msra.mxu0 0.0
  %4813 = vmatprep.subr.mxu0 0.0
  %4814 = vmatpush2.msra.mxu0 0.0
  %4815 = vmatprep.subr.mxu0 0.0
  %4816 = vmatpush2.msra.mxu0 0.0
  %4817 = vmatprep.subr.mxu0 0.0
  %4818 = vmatpush2.msra.mxu0 0.0
  %4819 = vmatprep.subr.mxu0 0.0
  %4820 = vmatpush2.msra.mxu0 0.0
  %4821 = vmatprep.subr.mxu0 0.0
  %4822 = vmatpush2.msra.mxu0 0.0
  %4823 = vmatprep.subr.mxu0 0.0
  %4824 = vmatpush2.msra.mxu0 0.0
  %4825 = vmatprep.subr.mxu0 0.0
  %4826 = vmatpush2.msra.mxu0 0.0
  %4827 = vmatprep.mubr.f32.mxu0 0.0
  %4828 = vmatmul.mubr.f32.gmra.mxu0 %v4594
  %v4829 = vpop.f32.mrf.mxu0
  %v4830 = vadd.f32 0.0, %v4829
  %v4831 = vpop.f32.mrf.mxu0
  %4832 = vmatprep.mubr.f32.mxu0 0.0
  %4833 = vmatmul.mubr.f32.gmra.mxu0 %v4597
  %v4834 = vpop.f32.mrf.mxu0
  %v4835 = vadd.f32 0.0, %v4834
  %v4836 = vpop.f32.mrf.mxu0
  %4837 = vmatprep.mubr.f32.mxu0 0.0
  %4838 = vmatmul.mubr.f32.gmra.mxu0 %v4600
  %v4839 = vpop.f32.mrf.mxu0
  %v4840 = vadd.f32 0.0, %v4839
  %v4841 = vpop.f32.mrf.mxu0
  %4842 = vmatprep.mubr.f32.mxu0 0.0
  %4843 = vmatmul.mubr.f32.gmra.mxu0 %v4603
  %v4844 = vpop.f32.mrf.mxu0
  %v4845 = vadd.f32 0.0, %v4844
  %v4846 = vpop.f32.mrf.mxu0
  %4847 = vmatprep.mubr.f32.mxu0 0.0
  %4848 = vmatmul.mubr.f32.gmra.mxu0 %v4606
  %v4849 = vpop.f32.mrf.mxu0
  %v4850 = vadd.f32 0.0, %v4849
  %v4851 = vpop.f32.mrf.mxu0
  %4852 = vmatprep.mubr.f32.mxu0 0.0
  %4853 = vmatmul.mubr.f32.gmra.mxu0 %v4609
  %v4854 = vpop.f32.mrf.mxu0
  %v4855 = vadd.f32 0.0, %v4854
  %v4856 = vpop.f32.mrf.mxu0
  %4857 = vmatprep.mubr.f32.mxu0 0.0
  %4858 = vmatmul.mubr.f32.gmra.mxu0 %v4612
  %v4859 = vpop.f32.mrf.mxu0
  %v4860 = vadd.f32 0.0, %v4859
  %v4861 = vpop.f32.mrf.mxu0
  %4862 = vmatprep.mubr.f32.mxu0 0.0
  %4863 = vmatmul.mubr.f32.gmra.mxu0 %v4615
  %v4864 = vpop.f32.mrf.mxu0
  %v4865 = vadd.f32 0.0, %v4864
  %v4866 = vpop.f32.mrf.mxu0
  %4867 = vmatprep.mubr.f32.mxu0 0.0
  %4868 = vmatmul.mubr.f32.gmra.mxu0 %v4618
  %v4869 = vpop.f32.mrf.mxu0
  %v4870 = vadd.f32 0.0, %v4869
  %v4871 = vpop.f32.mrf.mxu0
  %4872 = vmatprep.mubr.f32.mxu0 0.0
  %4873 = vmatmul.mubr.f32.gmra.mxu0 %v4621
  %v4874 = vpop.f32.mrf.mxu0
  %v4875 = vadd.f32 0.0, %v4874
  %v4876 = vpop.f32.mrf.mxu0
  %4877 = vdwg.mxu0
  %s4878 = scalar_lea.vmem %s9, 80
  %v4879 = vld [vmem:[%s4878] sm:$0xff]
  %v4880 = vld [vmem:[%s4878 + $0x8] sm:$0xff]
  %v4881 = vld [vmem:[%s4878 + $0x10] sm:$0xff]
  %v4882 = vld [vmem:[%s4878 + $0x18] sm:$0xff]
  %v4883 = vld [vmem:[%s4878 + $0x20] sm:$0xff]
  %v4884 = vld [vmem:[%s4878 + $0x28] sm:$0xff]
  %v4885 = vld [vmem:[%s4878 + $0x30] sm:$0xff]
  %v4886 = vld [vmem:[%s4878 + $0x38] sm:$0xff]
  %v4887 = vld [vmem:[%s4878 + $0x40] sm:$0xff]
  %v4888 = vld [vmem:[%s4878 + $0x48] sm:$0xff]
  %4889 = vxpose.xlu0.b32.start [1/16] %v4830, 128
  %4890 = vxpose.xlu0.b32.cont [2/16] %v4835, 128
  %4891 = vxpose.xlu0.b32.cont [3/16] %v4840, 128
  %4892 = vxpose.xlu0.b32.cont [4/16] %v4845, 128
  %4893 = vxpose.xlu0.b32.cont [5/16] %v4850, 128
  %4894 = vxpose.xlu0.b32.cont [6/16] %v4855, 128
  %4895 = vxpose.xlu0.b32.cont [7/16] %v4860, 128
  %4896 = vxpose.xlu0.b32.cont [8/16] %v4865, 128
  %4897 = vxpose.xlu0.b32.cont [9/16] %v4870, 128
  %4898 = vxpose.xlu0.b32.cont [10/16] %v4875, 128
  %4899 = vxpose.xlu0.b32.cont [11/16] 0.0, 128
  %4900 = vxpose.xlu0.b32.cont [12/16] 0.0, 128
  %4901 = vxpose.xlu0.b32.cont [13/16] 0.0, 128
  %4902 = vxpose.xlu0.b32.cont [14/16] 0.0, 128
  %4903 = vxpose.xlu0.b32.cont [15/16] 0.0, 128
  %4904 = vxpose.xlu0.b32.end [16/16] 0.0, 128
  %v4905 = vpop.trf.xlu0
  %v4906 = vpop.trf.xlu0
  %v4907 = vpop.trf.xlu0
  %v4908 = vpop.trf.xlu0
  %v4909 = vpop.trf.xlu0
  %v4910 = vpop.trf.xlu0
  %v4911 = vpop.trf.xlu0
  %v4912 = vpop.trf.xlu0
  %v4913 = vpop.trf.xlu0
  %v4914 = vpop.trf.xlu0
  %v4915 = vpop.trf.xlu0
  %v4916 = vpop.trf.xlu0
  %v4917 = vpop.trf.xlu0
  %v4918 = vpop.trf.xlu0
  %v4919 = vpop.trf.xlu0
  %v4920 = vpop.trf.xlu0
  %vm4921 = vcmask 654336
  %v4923 = vsel %vm4921, %v4905, 0
  %4925 = vmatprep.subr.mxu0 0.0
  %4926 = vmatpush1.msra.mxu0 0.0
  %4927 = vmatprep.subr.mxu0 0.0
  %4928 = vmatpush1.msra.mxu0 0.0
  %4929 = vmatprep.subr.mxu0 0.0
  %4930 = vmatpush1.msra.mxu0 0.0
  %4931 = vmatprep.subr.mxu0 0.0
  %4932 = vmatpush1.msra.mxu0 0.0
  %4933 = vmatprep.subr.mxu0 0.0
  %4934 = vmatpush1.msra.mxu0 0.0
  %4935 = vmatprep.subr.mxu0 0.0
  %4936 = vmatpush1.msra.mxu0 0.0
  %4937 = vmatprep.subr.mxu0 0.0
  %4938 = vmatpush1.msra.mxu0 %v4888
  %4939 = vmatprep.subr.mxu0 0.0
  %4940 = vmatpush1.msra.mxu0 %v4887
  %4941 = vmatprep.subr.mxu0 0.0
  %4942 = vmatpush1.msra.mxu0 %v4886
  %4943 = vmatprep.subr.mxu0 0.0
  %4944 = vmatpush1.msra.mxu0 %v4885
  %4945 = vmatprep.subr.mxu0 0.0
  %4946 = vmatpush1.msra.mxu0 %v4884
  %4947 = vmatprep.subr.mxu0 0.0
  %4948 = vmatpush1.msra.mxu0 %v4883
  %4949 = vmatprep.subr.mxu0 0.0
  %4950 = vmatpush1.msra.mxu0 %v4882
  %4951 = vmatprep.subr.mxu0 0.0
  %4952 = vmatpush1.msra.mxu0 %v4881
  %4953 = vmatprep.subr.mxu0 0.0
  %4954 = vmatpush1.msra.mxu0 %v4880
  %4955 = vmatprep.subr.mxu0 0.0
  %4956 = vmatpush1.msra.mxu0 %v4879
  %4957 = vmatprep.subr.mxu0 0.0
  %4958 = vmatpush2.msra.mxu0 0.0
  %4959 = vmatprep.subr.mxu0 0.0
  %4960 = vmatpush2.msra.mxu0 0.0
  %4961 = vmatprep.subr.mxu0 0.0
  %4962 = vmatpush2.msra.mxu0 0.0
  %4963 = vmatprep.subr.mxu0 0.0
  %4964 = vmatpush2.msra.mxu0 0.0
  %4965 = vmatprep.subr.mxu0 0.0
  %4966 = vmatpush2.msra.mxu0 0.0
  %4967 = vmatprep.subr.mxu0 0.0
  %4968 = vmatpush2.msra.mxu0 0.0
  %4969 = vmatprep.subr.mxu0 0.0
  %4970 = vmatpush2.msra.mxu0 0.0
  %4971 = vmatprep.subr.mxu0 0.0
  %4972 = vmatpush2.msra.mxu0 0.0
  %4973 = vmatprep.subr.mxu0 0.0
  %4974 = vmatpush2.msra.mxu0 0.0
  %4975 = vmatprep.subr.mxu0 0.0
  %4976 = vmatpush2.msra.mxu0 0.0
  %4977 = vmatprep.subr.mxu0 0.0
  %4978 = vmatpush2.msra.mxu0 0.0
  %4979 = vmatprep.subr.mxu0 0.0
  %4980 = vmatpush2.msra.mxu0 0.0
  %4981 = vmatprep.subr.mxu0 0.0
  %4982 = vmatpush2.msra.mxu0 0.0
  %4983 = vmatprep.subr.mxu0 0.0
  %4984 = vmatpush2.msra.mxu0 0.0
  %4985 = vmatprep.subr.mxu0 0.0
  %4986 = vmatpush2.msra.mxu0 0.0
  %4987 = vmatprep.subr.mxu0 0.0
  %4988 = vmatpush2.msra.mxu0 0.0
  %4989 = vmatprep.mubr.f32.mxu0 0.0
  %4990 = vmatmul.mubr.f32.gmra.mxu0 %v4923
  %v4991 = vpop.f32.mrf.mxu0
  %v4992 = vadd.f32 0.0, %v4991
  %v4993 = vpop.f32.mrf.mxu0
  %4994 = vdwg.mxu0
  %4995 = vxpose.xlu0.b32.start [1/16] %v4690, 128
  %4996 = vxpose.xlu0.b32.cont [2/16] %v4695, 128
  %4997 = vxpose.xlu0.b32.cont [3/16] %v4700, 128
  %4998 = vxpose.xlu0.b32.cont [4/16] %v4705, 128
  %4999 = vxpose.xlu0.b32.cont [5/16] %v4710, 128
  %5000 = vxpose.xlu0.b32.cont [6/16] %v4715, 128
  %5001 = vxpose.xlu0.b32.cont [7/16] %v4720, 128
  %5002 = vxpose.xlu0.b32.cont [8/16] %v4725, 128
  %5003 = vxpose.xlu0.b32.cont [9/16] %v4730, 128
  %5004 = vxpose.xlu0.b32.cont [10/16] %v4735, 128
  %5005 = vxpose.xlu0.b32.cont [11/16] 0.0, 128
  %5006 = vxpose.xlu0.b32.cont [12/16] 0.0, 128
  %5007 = vxpose.xlu0.b32.cont [13/16] 0.0, 128
  %5008 = vxpose.xlu0.b32.cont [14/16] 0.0, 128
  %5009 = vxpose.xlu0.b32.cont [15/16] 0.0, 128
  %5010 = vxpose.xlu0.b32.end [16/16] 0.0, 128
  %v5011 = vpop.trf.xlu0
  %v5012 = vpop.trf.xlu0
  %v5013 = vpop.trf.xlu0
  %v5014 = vpop.trf.xlu0
  %v5015 = vpop.trf.xlu0
  %v5016 = vpop.trf.xlu0
  %v5017 = vpop.trf.xlu0
  %v5018 = vpop.trf.xlu0
  %v5019 = vpop.trf.xlu0
  %v5020 = vpop.trf.xlu0
  %v5021 = vpop.trf.xlu0
  %v5022 = vpop.trf.xlu0
  %v5023 = vpop.trf.xlu0
  %v5024 = vpop.trf.xlu0
  %v5025 = vpop.trf.xlu0
  %v5026 = vpop.trf.xlu0
  %v5028 = vsel %vm4921, %v5011, 0
  %5030 = vmatprep.subr.mxu0 0.0
  %5031 = vmatpush1.msra.mxu0 0.0
  %5032 = vmatprep.subr.mxu0 0.0
  %5033 = vmatpush1.msra.mxu0 0.0
  %5034 = vmatprep.subr.mxu0 0.0
  %5035 = vmatpush1.msra.mxu0 0.0
  %5036 = vmatprep.subr.mxu0 0.0
  %5037 = vmatpush1.msra.mxu0 0.0
  %5038 = vmatprep.subr.mxu0 0.0
  %5039 = vmatpush1.msra.mxu0 0.0
  %5040 = vmatprep.subr.mxu0 0.0
  %5041 = vmatpush1.msra.mxu0 0.0
  %5042 = vmatprep.subr.mxu0 0.0
  %5043 = vmatpush1.msra.mxu0 %v4747
  %5044 = vmatprep.subr.mxu0 0.0
  %5045 = vmatpush1.msra.mxu0 %v4746
  %5046 = vmatprep.subr.mxu0 0.0
  %5047 = vmatpush1.msra.mxu0 %v4745
  %5048 = vmatprep.subr.mxu0 0.0
  %5049 = vmatpush1.msra.mxu0 %v4744
  %5050 = vmatprep.subr.mxu0 0.0
  %5051 = vmatpush1.msra.mxu0 %v4743
  %5052 = vmatprep.subr.mxu0 0.0
  %5053 = vmatpush1.msra.mxu0 %v4742
  %5054 = vmatprep.subr.mxu0 0.0
  %5055 = vmatpush1.msra.mxu0 %v4741
  %5056 = vmatprep.subr.mxu0 0.0
  %5057 = vmatpush1.msra.mxu0 %v4740
  %5058 = vmatprep.subr.mxu0 0.0
  %5059 = vmatpush1.msra.mxu0 %v4739
  %5060 = vmatprep.subr.mxu0 0.0
  %5061 = vmatpush1.msra.mxu0 %v4738
  %5062 = vmatprep.subr.mxu0 0.0
  %5063 = vmatpush2.msra.mxu0 0.0
  %5064 = vmatprep.subr.mxu0 0.0
  %5065 = vmatpush2.msra.mxu0 0.0
  %5066 = vmatprep.subr.mxu0 0.0
  %5067 = vmatpush2.msra.mxu0 0.0
  %5068 = vmatprep.subr.mxu0 0.0
  %5069 = vmatpush2.msra.mxu0 0.0
  %5070 = vmatprep.subr.mxu0 0.0
  %5071 = vmatpush2.msra.mxu0 0.0
  %5072 = vmatprep.subr.mxu0 0.0
  %5073 = vmatpush2.msra.mxu0 0.0
  %5074 = vmatprep.subr.mxu0 0.0
  %5075 = vmatpush2.msra.mxu0 0.0
  %5076 = vmatprep.subr.mxu0 0.0
  %5077 = vmatpush2.msra.mxu0 0.0
  %5078 = vmatprep.subr.mxu0 0.0
  %5079 = vmatpush2.msra.mxu0 0.0
  %5080 = vmatprep.subr.mxu0 0.0
  %5081 = vmatpush2.msra.mxu0 0.0
  %5082 = vmatprep.subr.mxu0 0.0
  %5083 = vmatpush2.msra.mxu0 0.0
  %5084 = vmatprep.subr.mxu0 0.0
  %5085 = vmatpush2.msra.mxu0 0.0
  %5086 = vmatprep.subr.mxu0 0.0
  %5087 = vmatpush2.msra.mxu0 0.0
  %5088 = vmatprep.subr.mxu0 0.0
  %5089 = vmatpush2.msra.mxu0 0.0
  %5090 = vmatprep.subr.mxu0 0.0
  %5091 = vmatpush2.msra.mxu0 0.0
  %5092 = vmatprep.subr.mxu0 0.0
  %5093 = vmatpush2.msra.mxu0 0.0
  %5094 = vmatprep.mubr.f32.mxu0 0.0
  %5095 = vmatmul.mubr.f32.gmra.mxu0 %v5028
  %v5096 = vpop.f32.mrf.mxu0
  %v5097 = vadd.f32 %v4992, %v5096
  %v5098 = vpop.f32.mrf.mxu0
  %5099 = vdwg.mxu0
  %s5100 = scalar_lea.vmem %s8, 224
  %v5101 = vld [vmem:[%s5100] sm:$0xff]
  %v5102 = vld [vmem:[%s5100 + $0x8] sm:$0xff]
  %v5103 = vld [vmem:[%s5100 + $0x10] sm:$0xff]
  %v5104 = vld [vmem:[%s5100 + $0x18] sm:$0xff]
  %v5105 = vld [vmem:[%s5100 + $0x20] sm:$0xff]
  %v5106 = vld [vmem:[%s5100 + $0x28] sm:$0xff]
  %v5107 = vld [vmem:[%s5100 + $0x30] sm:$0xff]
  %v5108 = vld [vmem:[%s5100 + $0x38] sm:$0xff]
  %v5109 = vld [vmem:[%s5100 + $0x40] sm:$0xff]
  %v5110 = vld [vmem:[%s5100 + $0x48] sm:$0xff]
  %v5111 = vld [vmem:[%s5100 + $0x50] sm:$0xff]
  %v5112 = vld [vmem:[%s5100 + $0x58] sm:$0xff]
  %v5113 = vld [vmem:[%s5100 + $0x60] sm:$0xff]
  %v5114 = vld [vmem:[%s5100 + $0x68] sm:$0xff]
  %5115 = vmatprep.subr.mxu0 0.0
  %5116 = vmatpush1.msra.mxu0 0.0
  %5117 = vmatprep.subr.mxu0 0.0
  %5118 = vmatpush1.msra.mxu0 0.0
  %5119 = vmatprep.subr.mxu0 0.0
  %5120 = vmatpush1.msra.mxu0 %v5114
  %5121 = vmatprep.subr.mxu0 0.0
  %5122 = vmatpush1.msra.mxu0 %v5113
  %5123 = vmatprep.subr.mxu0 0.0
  %5124 = vmatpush1.msra.mxu0 %v5112
  %5125 = vmatprep.subr.mxu0 0.0
  %5126 = vmatpush1.msra.mxu0 %v5111
  %5127 = vmatprep.subr.mxu0 0.0
  %5128 = vmatpush1.msra.mxu0 %v5110
  %5129 = vmatprep.subr.mxu0 0.0
  %5130 = vmatpush1.msra.mxu0 %v5109
  %5131 = vmatprep.subr.mxu0 0.0
  %5132 = vmatpush1.msra.mxu0 %v5108
  %5133 = vmatprep.subr.mxu0 0.0
  %5134 = vmatpush1.msra.mxu0 %v5107
  %5135 = vmatprep.subr.mxu0 0.0
  %5136 = vmatpush1.msra.mxu0 %v5106
  %5137 = vmatprep.subr.mxu0 0.0
  %5138 = vmatpush1.msra.mxu0 %v5105
  %5139 = vmatprep.subr.mxu0 0.0
  %5140 = vmatpush1.msra.mxu0 %v5104
  %5141 = vmatprep.subr.mxu0 0.0
  %5142 = vmatpush1.msra.mxu0 %v5103
  %5143 = vmatprep.subr.mxu0 0.0
  %5144 = vmatpush1.msra.mxu0 %v5102
  %5145 = vmatprep.subr.mxu0 0.0
  %5146 = vmatpush1.msra.mxu0 %v5101
  %5147 = vmatprep.subr.mxu0 0.0
  %5148 = vmatpush2.msra.mxu0 0.0
  %5149 = vmatprep.subr.mxu0 0.0
  %5150 = vmatpush2.msra.mxu0 0.0
  %5151 = vmatprep.subr.mxu0 0.0
  %5152 = vmatpush2.msra.mxu0 0.0
  %5153 = vmatprep.subr.mxu0 0.0
  %5154 = vmatpush2.msra.mxu0 0.0
  %5155 = vmatprep.subr.mxu0 0.0
  %5156 = vmatpush2.msra.mxu0 0.0
  %5157 = vmatprep.subr.mxu0 0.0
  %5158 = vmatpush2.msra.mxu0 0.0
  %5159 = vmatprep.subr.mxu0 0.0
  %5160 = vmatpush2.msra.mxu0 0.0
  %5161 = vmatprep.subr.mxu0 0.0
  %5162 = vmatpush2.msra.mxu0 0.0
  %5163 = vmatprep.subr.mxu0 0.0
  %5164 = vmatpush2.msra.mxu0 0.0
  %5165 = vmatprep.subr.mxu0 0.0
  %5166 = vmatpush2.msra.mxu0 0.0
  %5167 = vmatprep.subr.mxu0 0.0
  %5168 = vmatpush2.msra.mxu0 0.0
  %5169 = vmatprep.subr.mxu0 0.0
  %5170 = vmatpush2.msra.mxu0 0.0
  %5171 = vmatprep.subr.mxu0 0.0
  %5172 = vmatpush2.msra.mxu0 0.0
  %5173 = vmatprep.subr.mxu0 0.0
  %5174 = vmatpush2.msra.mxu0 0.0
  %5175 = vmatprep.subr.mxu0 0.0
  %5176 = vmatpush2.msra.mxu0 0.0
  %5177 = vmatprep.subr.mxu0 0.0
  %5178 = vmatpush2.msra.mxu0 0.0
  %5179 = vmatprep.mubr.f32.mxu0 0.0
  %5180 = vmatmul.mubr.f32.gmra.mxu0 %v4594
  %v5181 = vpop.f32.mrf.mxu0
  %v5182 = vadd.f32 0.0, %v5181
  %v5183 = vpop.f32.mrf.mxu0
  %5184 = vmatprep.mubr.f32.mxu0 0.0
  %5185 = vmatmul.mubr.f32.gmra.mxu0 %v4597
  %v5186 = vpop.f32.mrf.mxu0
  %v5187 = vadd.f32 0.0, %v5186
  %v5188 = vpop.f32.mrf.mxu0
  %5189 = vmatprep.mubr.f32.mxu0 0.0
  %5190 = vmatmul.mubr.f32.gmra.mxu0 %v4600
  %v5191 = vpop.f32.mrf.mxu0
  %v5192 = vadd.f32 0.0, %v5191
  %v5193 = vpop.f32.mrf.mxu0
  %5194 = vmatprep.mubr.f32.mxu0 0.0
  %5195 = vmatmul.mubr.f32.gmra.mxu0 %v4603
  %v5196 = vpop.f32.mrf.mxu0
  %v5197 = vadd.f32 0.0, %v5196
  %v5198 = vpop.f32.mrf.mxu0
  %5199 = vmatprep.mubr.f32.mxu0 0.0
  %5200 = vmatmul.mubr.f32.gmra.mxu0 %v4606
  %v5201 = vpop.f32.mrf.mxu0
  %v5202 = vadd.f32 0.0, %v5201
  %v5203 = vpop.f32.mrf.mxu0
  %5204 = vmatprep.mubr.f32.mxu0 0.0
  %5205 = vmatmul.mubr.f32.gmra.mxu0 %v4609
  %v5206 = vpop.f32.mrf.mxu0
  %v5207 = vadd.f32 0.0, %v5206
  %v5208 = vpop.f32.mrf.mxu0
  %5209 = vmatprep.mubr.f32.mxu0 0.0
  %5210 = vmatmul.mubr.f32.gmra.mxu0 %v4612
  %v5211 = vpop.f32.mrf.mxu0
  %v5212 = vadd.f32 0.0, %v5211
  %v5213 = vpop.f32.mrf.mxu0
  %5214 = vmatprep.mubr.f32.mxu0 0.0
  %5215 = vmatmul.mubr.f32.gmra.mxu0 %v4615
  %v5216 = vpop.f32.mrf.mxu0
  %v5217 = vadd.f32 0.0, %v5216
  %v5218 = vpop.f32.mrf.mxu0
  %5219 = vmatprep.mubr.f32.mxu0 0.0
  %5220 = vmatmul.mubr.f32.gmra.mxu0 %v4618
  %v5221 = vpop.f32.mrf.mxu0
  %v5222 = vadd.f32 0.0, %v5221
  %v5223 = vpop.f32.mrf.mxu0
  %5224 = vmatprep.mubr.f32.mxu0 0.0
  %5225 = vmatmul.mubr.f32.gmra.mxu0 %v4621
  %v5226 = vpop.f32.mrf.mxu0
  %v5227 = vadd.f32 0.0, %v5226
  %v5228 = vpop.f32.mrf.mxu0
  %5229 = vdwg.mxu0
  %s5230 = scalar_lea.vmem %s9, 160
  %v5231 = vld [vmem:[%s5230] sm:$0xff]
  %v5232 = vld [vmem:[%s5230 + $0x8] sm:$0xff]
  %v5233 = vld [vmem:[%s5230 + $0x10] sm:$0xff]
  %v5234 = vld [vmem:[%s5230 + $0x18] sm:$0xff]
  %v5235 = vld [vmem:[%s5230 + $0x20] sm:$0xff]
  %v5236 = vld [vmem:[%s5230 + $0x28] sm:$0xff]
  %v5237 = vld [vmem:[%s5230 + $0x30] sm:$0xff]
  %v5238 = vld [vmem:[%s5230 + $0x38] sm:$0xff]
  %v5239 = vld [vmem:[%s5230 + $0x40] sm:$0xff]
  %v5240 = vld [vmem:[%s5230 + $0x48] sm:$0xff]
  %5241 = vxpose.xlu0.b32.start [1/16] %v5182, 128
  %5242 = vxpose.xlu0.b32.cont [2/16] %v5187, 128
  %5243 = vxpose.xlu0.b32.cont [3/16] %v5192, 128
  %5244 = vxpose.xlu0.b32.cont [4/16] %v5197, 128
  %5245 = vxpose.xlu0.b32.cont [5/16] %v5202, 128
  %5246 = vxpose.xlu0.b32.cont [6/16] %v5207, 128
  %5247 = vxpose.xlu0.b32.cont [7/16] %v5212, 128
  %5248 = vxpose.xlu0.b32.cont [8/16] %v5217, 128
  %5249 = vxpose.xlu0.b32.cont [9/16] %v5222, 128
  %5250 = vxpose.xlu0.b32.cont [10/16] %v5227, 128
  %5251 = vxpose.xlu0.b32.cont [11/16] 0.0, 128
  %5252 = vxpose.xlu0.b32.cont [12/16] 0.0, 128
  %5253 = vxpose.xlu0.b32.cont [13/16] 0.0, 128
  %5254 = vxpose.xlu0.b32.cont [14/16] 0.0, 128
  %5255 = vxpose.xlu0.b32.cont [15/16] 0.0, 128
  %5256 = vxpose.xlu0.b32.end [16/16] 0.0, 128
  %v5257 = vpop.trf.xlu0
  %v5258 = vpop.trf.xlu0
  %v5259 = vpop.trf.xlu0
  %v5260 = vpop.trf.xlu0
  %v5261 = vpop.trf.xlu0
  %v5262 = vpop.trf.xlu0
  %v5263 = vpop.trf.xlu0
  %v5264 = vpop.trf.xlu0
  %v5265 = vpop.trf.xlu0
  %v5266 = vpop.trf.xlu0
  %v5267 = vpop.trf.xlu0
  %v5268 = vpop.trf.xlu0
  %v5269 = vpop.trf.xlu0
  %v5270 = vpop.trf.xlu0
  %v5271 = vpop.trf.xlu0
  %v5272 = vpop.trf.xlu0
  %v5274 = vsel %vm4921, %v5257, 0
  %5276 = vmatprep.subr.mxu0 0.0
  %5277 = vmatpush1.msra.mxu0 0.0
  %5278 = vmatprep.subr.mxu0 0.0
  %5279 = vmatpush1.msra.mxu0 0.0
  %5280 = vmatprep.subr.mxu0 0.0
  %5281 = vmatpush1.msra.mxu0 0.0
  %5282 = vmatprep.subr.mxu0 0.0
  %5283 = vmatpush1.msra.mxu0 0.0
  %5284 = vmatprep.subr.mxu0 0.0
  %5285 = vmatpush1.msra.mxu0 0.0
  %5286 = vmatprep.subr.mxu0 0.0
  %5287 = vmatpush1.msra.mxu0 0.0
  %5288 = vmatprep.subr.mxu0 0.0
  %5289 = vmatpush1.msra.mxu0 %v5240
  %5290 = vmatprep.subr.mxu0 0.0
  %5291 = vmatpush1.msra.mxu0 %v5239
  %5292 = vmatprep.subr.mxu0 0.0
  %5293 = vmatpush1.msra.mxu0 %v5238
  %5294 = vmatprep.subr.mxu0 0.0
  %5295 = vmatpush1.msra.mxu0 %v5237
  %5296 = vmatprep.subr.mxu0 0.0
  %5297 = vmatpush1.msra.mxu0 %v5236
  %5298 = vmatprep.subr.mxu0 0.0
  %5299 = vmatpush1.msra.mxu0 %v5235
  %5300 = vmatprep.subr.mxu0 0.0
  %5301 = vmatpush1.msra.mxu0 %v5234
  %5302 = vmatprep.subr.mxu0 0.0
  %5303 = vmatpush1.msra.mxu0 %v5233
  %5304 = vmatprep.subr.mxu0 0.0
  %5305 = vmatpush1.msra.mxu0 %v5232
  %5306 = vmatprep.subr.mxu0 0.0
  %5307 = vmatpush1.msra.mxu0 %v5231
  %5308 = vmatprep.subr.mxu0 0.0
  %5309 = vmatpush2.msra.mxu0 0.0
  %5310 = vmatprep.subr.mxu0 0.0
  %5311 = vmatpush2.msra.mxu0 0.0
  %5312 = vmatprep.subr.mxu0 0.0
  %5313 = vmatpush2.msra.mxu0 0.0
  %5314 = vmatprep.subr.mxu0 0.0
  %5315 = vmatpush2.msra.mxu0 0.0
  %5316 = vmatprep.subr.mxu0 0.0
  %5317 = vmatpush2.msra.mxu0 0.0
  %5318 = vmatprep.subr.mxu0 0.0
  %5319 = vmatpush2.msra.mxu0 0.0
  %5320 = vmatprep.subr.mxu0 0.0
  %5321 = vmatpush2.msra.mxu0 0.0
  %5322 = vmatprep.subr.mxu0 0.0
  %5323 = vmatpush2.msra.mxu0 0.0
  %5324 = vmatprep.subr.mxu0 0.0
  %5325 = vmatpush2.msra.mxu0 0.0
  %5326 = vmatprep.subr.mxu0 0.0
  %5327 = vmatpush2.msra.mxu0 0.0
  %5328 = vmatprep.subr.mxu0 0.0
  %5329 = vmatpush2.msra.mxu0 0.0
  %5330 = vmatprep.subr.mxu0 0.0
  %5331 = vmatpush2.msra.mxu0 0.0
  %5332 = vmatprep.subr.mxu0 0.0
  %5333 = vmatpush2.msra.mxu0 0.0
  %5334 = vmatprep.subr.mxu0 0.0
  %5335 = vmatpush2.msra.mxu0 0.0
  %5336 = vmatprep.subr.mxu0 0.0
  %5337 = vmatpush2.msra.mxu0 0.0
  %5338 = vmatprep.subr.mxu0 0.0
  %5339 = vmatpush2.msra.mxu0 0.0
  %5340 = vmatprep.mubr.f32.mxu0 0.0
  %5341 = vmatmul.mubr.f32.gmra.mxu0 %v5274
  %v5342 = vpop.f32.mrf.mxu0
  %v5343 = vadd.f32 0.0, %v5342
  %v5344 = vpop.f32.mrf.mxu0
  %5345 = vdwg.mxu0
  %v5346 = vadd.f32 %v5097, %v5343
  %s5347 = scalar_lea.vmem %s8, 336
  %v5348 = vld [vmem:[%s5347] sm:$0xff]
  %v5349 = vld [vmem:[%s5347 + $0x8] sm:$0xff]
  %v5350 = vld [vmem:[%s5347 + $0x10] sm:$0xff]
  %v5351 = vld [vmem:[%s5347 + $0x18] sm:$0xff]
  %v5352 = vld [vmem:[%s5347 + $0x20] sm:$0xff]
  %v5353 = vld [vmem:[%s5347 + $0x28] sm:$0xff]
  %v5354 = vld [vmem:[%s5347 + $0x30] sm:$0xff]
  %v5355 = vld [vmem:[%s5347 + $0x38] sm:$0xff]
  %v5356 = vld [vmem:[%s5347 + $0x40] sm:$0xff]
  %v5357 = vld [vmem:[%s5347 + $0x48] sm:$0xff]
  %v5358 = vld [vmem:[%s5347 + $0x50] sm:$0xff]
  %v5359 = vld [vmem:[%s5347 + $0x58] sm:$0xff]
  %v5360 = vld [vmem:[%s5347 + $0x60] sm:$0xff]
  %v5361 = vld [vmem:[%s5347 + $0x68] sm:$0xff]
  %5362 = vmatprep.subr.mxu0 0.0
  %5363 = vmatpush1.msra.mxu0 0.0
  %5364 = vmatprep.subr.mxu0 0.0
  %5365 = vmatpush1.msra.mxu0 0.0
  %5366 = vmatprep.subr.mxu0 0.0
  %5367 = vmatpush1.msra.mxu0 %v5361
  %5368 = vmatprep.subr.mxu0 0.0
  %5369 = vmatpush1.msra.mxu0 %v5360
  %5370 = vmatprep.subr.mxu0 0.0
  %5371 = vmatpush1.msra.mxu0 %v5359
  %5372 = vmatprep.subr.mxu0 0.0
  %5373 = vmatpush1.msra.mxu0 %v5358
  %5374 = vmatprep.subr.mxu0 0.0
  %5375 = vmatpush1.msra.mxu0 %v5357
  %5376 = vmatprep.subr.mxu0 0.0
  %5377 = vmatpush1.msra.mxu0 %v5356
  %5378 = vmatprep.subr.mxu0 0.0
  %5379 = vmatpush1.msra.mxu0 %v5355
  %5380 = vmatprep.subr.mxu0 0.0
  %5381 = vmatpush1.msra.mxu0 %v5354
  %5382 = vmatprep.subr.mxu0 0.0
  %5383 = vmatpush1.msra.mxu0 %v5353
  %5384 = vmatprep.subr.mxu0 0.0
  %5385 = vmatpush1.msra.mxu0 %v5352
  %5386 = vmatprep.subr.mxu0 0.0
  %5387 = vmatpush1.msra.mxu0 %v5351
  %5388 = vmatprep.subr.mxu0 0.0
  %5389 = vmatpush1.msra.mxu0 %v5350
  %5390 = vmatprep.subr.mxu0 0.0
  %5391 = vmatpush1.msra.mxu0 %v5349
  %5392 = vmatprep.subr.mxu0 0.0
  %5393 = vmatpush1.msra.mxu0 %v5348
  %5394 = vmatprep.subr.mxu0 0.0
  %5395 = vmatpush2.msra.mxu0 0.0
  %5396 = vmatprep.subr.mxu0 0.0
  %5397 = vmatpush2.msra.mxu0 0.0
  %5398 = vmatprep.subr.mxu0 0.0
  %5399 = vmatpush2.msra.mxu0 0.0
  %5400 = vmatprep.subr.mxu0 0.0
  %5401 = vmatpush2.msra.mxu0 0.0
  %5402 = vmatprep.subr.mxu0 0.0
  %5403 = vmatpush2.msra.mxu0 0.0
  %5404 = vmatprep.subr.mxu0 0.0
  %5405 = vmatpush2.msra.mxu0 0.0
  %5406 = vmatprep.subr.mxu0 0.0
  %5407 = vmatpush2.msra.mxu0 0.0
  %5408 = vmatprep.subr.mxu0 0.0
  %5409 = vmatpush2.msra.mxu0 0.0
  %5410 = vmatprep.subr.mxu0 0.0
  %5411 = vmatpush2.msra.mxu0 0.0
  %5412 = vmatprep.subr.mxu0 0.0
  %5413 = vmatpush2.msra.mxu0 0.0
  %5414 = vmatprep.subr.mxu0 0.0
  %5415 = vmatpush2.msra.mxu0 0.0
  %5416 = vmatprep.subr.mxu0 0.0
  %5417 = vmatpush2.msra.mxu0 0.0
  %5418 = vmatprep.subr.mxu0 0.0
  %5419 = vmatpush2.msra.mxu0 0.0
  %5420 = vmatprep.subr.mxu0 0.0
  %5421 = vmatpush2.msra.mxu0 0.0
  %5422 = vmatprep.subr.mxu0 0.0
  %5423 = vmatpush2.msra.mxu0 0.0
  %5424 = vmatprep.subr.mxu0 0.0
  %5425 = vmatpush2.msra.mxu0 0.0
  %5426 = vmatprep.mubr.f32.mxu0 0.0
  %5427 = vmatmul.mubr.f32.gmra.mxu0 %v4594
  %v5428 = vpop.f32.mrf.mxu0
  %v5429 = vadd.f32 0.0, %v5428
  %v5430 = vpop.f32.mrf.mxu0
  %5431 = vmatprep.mubr.f32.mxu0 0.0
  %5432 = vmatmul.mubr.f32.gmra.mxu0 %v4597
  %v5433 = vpop.f32.mrf.mxu0
  %v5434 = vadd.f32 0.0, %v5433
  %v5435 = vpop.f32.mrf.mxu0
  %5436 = vmatprep.mubr.f32.mxu0 0.0
  %5437 = vmatmul.mubr.f32.gmra.mxu0 %v4600
  %v5438 = vpop.f32.mrf.mxu0
  %v5439 = vadd.f32 0.0, %v5438
  %v5440 = vpop.f32.mrf.mxu0
  %5441 = vmatprep.mubr.f32.mxu0 0.0
  %5442 = vmatmul.mubr.f32.gmra.mxu0 %v4603
  %v5443 = vpop.f32.mrf.mxu0
  %v5444 = vadd.f32 0.0, %v5443
  %v5445 = vpop.f32.mrf.mxu0
  %5446 = vmatprep.mubr.f32.mxu0 0.0
  %5447 = vmatmul.mubr.f32.gmra.mxu0 %v4606
  %v5448 = vpop.f32.mrf.mxu0
  %v5449 = vadd.f32 0.0, %v5448
  %v5450 = vpop.f32.mrf.mxu0
  %5451 = vmatprep.mubr.f32.mxu0 0.0
  %5452 = vmatmul.mubr.f32.gmra.mxu0 %v4609
  %v5453 = vpop.f32.mrf.mxu0
  %v5454 = vadd.f32 0.0, %v5453
  %v5455 = vpop.f32.mrf.mxu0
  %5456 = vmatprep.mubr.f32.mxu0 0.0
  %5457 = vmatmul.mubr.f32.gmra.mxu0 %v4612
  %v5458 = vpop.f32.mrf.mxu0
  %v5459 = vadd.f32 0.0, %v5458
  %v5460 = vpop.f32.mrf.mxu0
  %5461 = vmatprep.mubr.f32.mxu0 0.0
  %5462 = vmatmul.mubr.f32.gmra.mxu0 %v4615
  %v5463 = vpop.f32.mrf.mxu0
  %v5464 = vadd.f32 0.0, %v5463
  %v5465 = vpop.f32.mrf.mxu0
  %5466 = vmatprep.mubr.f32.mxu0 0.0
  %5467 = vmatmul.mubr.f32.gmra.mxu0 %v4618
  %v5468 = vpop.f32.mrf.mxu0
  %v5469 = vadd.f32 0.0, %v5468
  %v5470 = vpop.f32.mrf.mxu0
  %5471 = vmatprep.mubr.f32.mxu0 0.0
  %5472 = vmatmul.mubr.f32.gmra.mxu0 %v4621
  %v5473 = vpop.f32.mrf.mxu0
  %v5474 = vadd.f32 0.0, %v5473
  %v5475 = vpop.f32.mrf.mxu0
  %5476 = vdwg.mxu0
  %s5477 = scalar_lea.vmem %s9, 240
  %v5478 = vld [vmem:[%s5477] sm:$0xff]
  %v5479 = vld [vmem:[%s5477 + $0x8] sm:$0xff]
  %v5480 = vld [vmem:[%s5477 + $0x10] sm:$0xff]
  %v5481 = vld [vmem:[%s5477 + $0x18] sm:$0xff]
  %v5482 = vld [vmem:[%s5477 + $0x20] sm:$0xff]
  %v5483 = vld [vmem:[%s5477 + $0x28] sm:$0xff]
  %v5484 = vld [vmem:[%s5477 + $0x30] sm:$0xff]
  %v5485 = vld [vmem:[%s5477 + $0x38] sm:$0xff]
  %v5486 = vld [vmem:[%s5477 + $0x40] sm:$0xff]
  %v5487 = vld [vmem:[%s5477 + $0x48] sm:$0xff]
  %5488 = vxpose.xlu0.b32.start [1/16] %v5429, 128
  %5489 = vxpose.xlu0.b32.cont [2/16] %v5434, 128
  %5490 = vxpose.xlu0.b32.cont [3/16] %v5439, 128
  %5491 = vxpose.xlu0.b32.cont [4/16] %v5444, 128
  %5492 = vxpose.xlu0.b32.cont [5/16] %v5449, 128
  %5493 = vxpose.xlu0.b32.cont [6/16] %v5454, 128
  %5494 = vxpose.xlu0.b32.cont [7/16] %v5459, 128
  %5495 = vxpose.xlu0.b32.cont [8/16] %v5464, 128
  %5496 = vxpose.xlu0.b32.cont [9/16] %v5469, 128
  %5497 = vxpose.xlu0.b32.cont [10/16] %v5474, 128
  %5498 = vxpose.xlu0.b32.cont [11/16] 0.0, 128
  %5499 = vxpose.xlu0.b32.cont [12/16] 0.0, 128
  %5500 = vxpose.xlu0.b32.cont [13/16] 0.0, 128
  %5501 = vxpose.xlu0.b32.cont [14/16] 0.0, 128
  %5502 = vxpose.xlu0.b32.cont [15/16] 0.0, 128
  %5503 = vxpose.xlu0.b32.end [16/16] 0.0, 128
  %v5504 = vpop.trf.xlu0
  %v5505 = vpop.trf.xlu0
  %v5506 = vpop.trf.xlu0
  %v5507 = vpop.trf.xlu0
  %v5508 = vpop.trf.xlu0
  %v5509 = vpop.trf.xlu0
  %v5510 = vpop.trf.xlu0
  %v5511 = vpop.trf.xlu0
  %v5512 = vpop.trf.xlu0
  %v5513 = vpop.trf.xlu0
  %v5514 = vpop.trf.xlu0
  %v5515 = vpop.trf.xlu0
  %v5516 = vpop.trf.xlu0
  %v5517 = vpop.trf.xlu0
  %v5518 = vpop.trf.xlu0
  %v5519 = vpop.trf.xlu0
  %v5521 = vsel %vm4921, %v5504, 0
  %5523 = vmatprep.subr.mxu0 0.0
  %5524 = vmatpush1.msra.mxu0 0.0
  %5525 = vmatprep.subr.mxu0 0.0
  %5526 = vmatpush1.msra.mxu0 0.0
  %5527 = vmatprep.subr.mxu0 0.0
  %5528 = vmatpush1.msra.mxu0 0.0
  %5529 = vmatprep.subr.mxu0 0.0
  %5530 = vmatpush1.msra.mxu0 0.0
  %5531 = vmatprep.subr.mxu0 0.0
  %5532 = vmatpush1.msra.mxu0 0.0
  %5533 = vmatprep.subr.mxu0 0.0
  %5534 = vmatpush1.msra.mxu0 0.0
  %5535 = vmatprep.subr.mxu0 0.0
  %5536 = vmatpush1.msra.mxu0 %v5487
  %5537 = vmatprep.subr.mxu0 0.0
  %5538 = vmatpush1.msra.mxu0 %v5486
  %5539 = vmatprep.subr.mxu0 0.0
  %5540 = vmatpush1.msra.mxu0 %v5485
  %5541 = vmatprep.subr.mxu0 0.0
  %5542 = vmatpush1.msra.mxu0 %v5484
  %5543 = vmatprep.subr.mxu0 0.0
  %5544 = vmatpush1.msra.mxu0 %v5483
  %5545 = vmatprep.subr.mxu0 0.0
  %5546 = vmatpush1.msra.mxu0 %v5482
  %5547 = vmatprep.subr.mxu0 0.0
  %5548 = vmatpush1.msra.mxu0 %v5481
  %5549 = vmatprep.subr.mxu0 0.0
  %5550 = vmatpush1.msra.mxu0 %v5480
  %5551 = vmatprep.subr.mxu0 0.0
  %5552 = vmatpush1.msra.mxu0 %v5479
  %5553 = vmatprep.subr.mxu0 0.0
  %5554 = vmatpush1.msra.mxu0 %v5478
  %5555 = vmatprep.subr.mxu0 0.0
  %5556 = vmatpush2.msra.mxu0 0.0
  %5557 = vmatprep.subr.mxu0 0.0
  %5558 = vmatpush2.msra.mxu0 0.0
  %5559 = vmatprep.subr.mxu0 0.0
  %5560 = vmatpush2.msra.mxu0 0.0
  %5561 = vmatprep.subr.mxu0 0.0
  %5562 = vmatpush2.msra.mxu0 0.0
  %5563 = vmatprep.subr.mxu0 0.0
  %5564 = vmatpush2.msra.mxu0 0.0
  %5565 = vmatprep.subr.mxu0 0.0
  %5566 = vmatpush2.msra.mxu0 0.0
  %5567 = vmatprep.subr.mxu0 0.0
  %5568 = vmatpush2.msra.mxu0 0.0
  %5569 = vmatprep.subr.mxu0 0.0
  %5570 = vmatpush2.msra.mxu0 0.0
  %5571 = vmatprep.subr.mxu0 0.0
  %5572 = vmatpush2.msra.mxu0 0.0
  %5573 = vmatprep.subr.mxu0 0.0
  %5574 = vmatpush2.msra.mxu0 0.0
  %5575 = vmatprep.subr.mxu0 0.0
  %5576 = vmatpush2.msra.mxu0 0.0
  %5577 = vmatprep.subr.mxu0 0.0
  %5578 = vmatpush2.msra.mxu0 0.0
  %5579 = vmatprep.subr.mxu0 0.0
  %5580 = vmatpush2.msra.mxu0 0.0
  %5581 = vmatprep.subr.mxu0 0.0
  %5582 = vmatpush2.msra.mxu0 0.0
  %5583 = vmatprep.subr.mxu0 0.0
  %5584 = vmatpush2.msra.mxu0 0.0
  %5585 = vmatprep.subr.mxu0 0.0
  %5586 = vmatpush2.msra.mxu0 0.0
  %5587 = vmatprep.mubr.f32.mxu0 0.0
  %5588 = vmatmul.mubr.f32.gmra.mxu0 %v5521
  %v5589 = vpop.f32.mrf.mxu0
  %v5590 = vadd.f32 0.0, %v5589
  %v5591 = vpop.f32.mrf.mxu0
  %5592 = vdwg.mxu0
  %v5593 = vadd.f32 %v5346, %v5590
  %s5594 = scalar_lea.vmem %s8, 448
  %v5595 = vld [vmem:[%s5594] sm:$0xff]
  %v5596 = vld [vmem:[%s5594 + $0x8] sm:$0xff]
  %v5597 = vld [vmem:[%s5594 + $0x10] sm:$0xff]
  %v5598 = vld [vmem:[%s5594 + $0x18] sm:$0xff]
  %v5599 = vld [vmem:[%s5594 + $0x20] sm:$0xff]
  %v5600 = vld [vmem:[%s5594 + $0x28] sm:$0xff]
  %v5601 = vld [vmem:[%s5594 + $0x30] sm:$0xff]
  %v5602 = vld [vmem:[%s5594 + $0x38] sm:$0xff]
  %v5603 = vld [vmem:[%s5594 + $0x40] sm:$0xff]
  %v5604 = vld [vmem:[%s5594 + $0x48] sm:$0xff]
  %v5605 = vld [vmem:[%s5594 + $0x50] sm:$0xff]
  %v5606 = vld [vmem:[%s5594 + $0x58] sm:$0xff]
  %v5607 = vld [vmem:[%s5594 + $0x60] sm:$0xff]
  %v5608 = vld [vmem:[%s5594 + $0x68] sm:$0xff]
  %5609 = vmatprep.subr.mxu0 0.0
  %5610 = vmatpush1.msra.mxu0 0.0
  %5611 = vmatprep.subr.mxu0 0.0
  %5612 = vmatpush1.msra.mxu0 0.0
  %5613 = vmatprep.subr.mxu0 0.0
  %5614 = vmatpush1.msra.mxu0 %v5608
  %5615 = vmatprep.subr.mxu0 0.0
  %5616 = vmatpush1.msra.mxu0 %v5607
  %5617 = vmatprep.subr.mxu0 0.0
  %5618 = vmatpush1.msra.mxu0 %v5606
  %5619 = vmatprep.subr.mxu0 0.0
  %5620 = vmatpush1.msra.mxu0 %v5605
  %5621 = vmatprep.subr.mxu0 0.0
  %5622 = vmatpush1.msra.mxu0 %v5604
  %5623 = vmatprep.subr.mxu0 0.0
  %5624 = vmatpush1.msra.mxu0 %v5603
  %5625 = vmatprep.subr.mxu0 0.0
  %5626 = vmatpush1.msra.mxu0 %v5602
  %5627 = vmatprep.subr.mxu0 0.0
  %5628 = vmatpush1.msra.mxu0 %v5601
  %5629 = vmatprep.subr.mxu0 0.0
  %5630 = vmatpush1.msra.mxu0 %v5600
  %5631 = vmatprep.subr.mxu0 0.0
  %5632 = vmatpush1.msra.mxu0 %v5599
  %5633 = vmatprep.subr.mxu0 0.0
  %5634 = vmatpush1.msra.mxu0 %v5598
  %5635 = vmatprep.subr.mxu0 0.0
  %5636 = vmatpush1.msra.mxu0 %v5597
  %5637 = vmatprep.subr.mxu0 0.0
  %5638 = vmatpush1.msra.mxu0 %v5596
  %5639 = vmatprep.subr.mxu0 0.0
  %5640 = vmatpush1.msra.mxu0 %v5595
  %5641 = vmatprep.subr.mxu0 0.0
  %5642 = vmatpush2.msra.mxu0 0.0
  %5643 = vmatprep.subr.mxu0 0.0
  %5644 = vmatpush2.msra.mxu0 0.0
  %5645 = vmatprep.subr.mxu0 0.0
  %5646 = vmatpush2.msra.mxu0 0.0
  %5647 = vmatprep.subr.mxu0 0.0
  %5648 = vmatpush2.msra.mxu0 0.0
  %5649 = vmatprep.subr.mxu0 0.0
  %5650 = vmatpush2.msra.mxu0 0.0
  %5651 = vmatprep.subr.mxu0 0.0
  %5652 = vmatpush2.msra.mxu0 0.0
  %5653 = vmatprep.subr.mxu0 0.0
  %5654 = vmatpush2.msra.mxu0 0.0
  %5655 = vmatprep.subr.mxu0 0.0
  %5656 = vmatpush2.msra.mxu0 0.0
  %5657 = vmatprep.subr.mxu0 0.0
  %5658 = vmatpush2.msra.mxu0 0.0
  %5659 = vmatprep.subr.mxu0 0.0
  %5660 = vmatpush2.msra.mxu0 0.0
  %5661 = vmatprep.subr.mxu0 0.0
  %5662 = vmatpush2.msra.mxu0 0.0
  %5663 = vmatprep.subr.mxu0 0.0
  %5664 = vmatpush2.msra.mxu0 0.0
  %5665 = vmatprep.subr.mxu0 0.0
  %5666 = vmatpush2.msra.mxu0 0.0
  %5667 = vmatprep.subr.mxu0 0.0
  %5668 = vmatpush2.msra.mxu0 0.0
  %5669 = vmatprep.subr.mxu0 0.0
  %5670 = vmatpush2.msra.mxu0 0.0
  %5671 = vmatprep.subr.mxu0 0.0
  %5672 = vmatpush2.msra.mxu0 0.0
  %5673 = vmatprep.mubr.f32.mxu0 0.0
  %5674 = vmatmul.mubr.f32.gmra.mxu0 %v4594
  %v5675 = vpop.f32.mrf.mxu0
  %v5676 = vadd.f32 0.0, %v5675
  %v5677 = vpop.f32.mrf.mxu0
  %5678 = vmatprep.mubr.f32.mxu0 0.0
  %5679 = vmatmul.mubr.f32.gmra.mxu0 %v4597
  %v5680 = vpop.f32.mrf.mxu0
  %v5681 = vadd.f32 0.0, %v5680
  %v5682 = vpop.f32.mrf.mxu0
  %5683 = vmatprep.mubr.f32.mxu0 0.0
  %5684 = vmatmul.mubr.f32.gmra.mxu0 %v4600
  %v5685 = vpop.f32.mrf.mxu0
  %v5686 = vadd.f32 0.0, %v5685
  %v5687 = vpop.f32.mrf.mxu0
  %5688 = vmatprep.mubr.f32.mxu0 0.0
  %5689 = vmatmul.mubr.f32.gmra.mxu0 %v4603
  %v5690 = vpop.f32.mrf.mxu0
  %v5691 = vadd.f32 0.0, %v5690
  %v5692 = vpop.f32.mrf.mxu0
  %5693 = vmatprep.mubr.f32.mxu0 0.0
  %5694 = vmatmul.mubr.f32.gmra.mxu0 %v4606
  %v5695 = vpop.f32.mrf.mxu0
  %v5696 = vadd.f32 0.0, %v5695
  %v5697 = vpop.f32.mrf.mxu0
  %5698 = vmatprep.mubr.f32.mxu0 0.0
  %5699 = vmatmul.mubr.f32.gmra.mxu0 %v4609
  %v5700 = vpop.f32.mrf.mxu0
  %v5701 = vadd.f32 0.0, %v5700
  %v5702 = vpop.f32.mrf.mxu0
  %5703 = vmatprep.mubr.f32.mxu0 0.0
  %5704 = vmatmul.mubr.f32.gmra.mxu0 %v4612
  %v5705 = vpop.f32.mrf.mxu0
  %v5706 = vadd.f32 0.0, %v5705
  %v5707 = vpop.f32.mrf.mxu0
  %5708 = vmatprep.mubr.f32.mxu0 0.0
  %5709 = vmatmul.mubr.f32.gmra.mxu0 %v4615
  %v5710 = vpop.f32.mrf.mxu0
  %v5711 = vadd.f32 0.0, %v5710
  %v5712 = vpop.f32.mrf.mxu0
  %5713 = vmatprep.mubr.f32.mxu0 0.0
  %5714 = vmatmul.mubr.f32.gmra.mxu0 %v4618
  %v5715 = vpop.f32.mrf.mxu0
  %v5716 = vadd.f32 0.0, %v5715
  %v5717 = vpop.f32.mrf.mxu0
  %5718 = vmatprep.mubr.f32.mxu0 0.0
  %5719 = vmatmul.mubr.f32.gmra.mxu0 %v4621
  %v5720 = vpop.f32.mrf.mxu0
  %v5721 = vadd.f32 0.0, %v5720
  %v5722 = vpop.f32.mrf.mxu0
  %5723 = vdwg.mxu0
  %s5724 = scalar_lea.vmem %s9, 320
  %v5725 = vld [vmem:[%s5724] sm:$0xff]
  %v5726 = vld [vmem:[%s5724 + $0x8] sm:$0xff]
  %v5727 = vld [vmem:[%s5724 + $0x10] sm:$0xff]
  %v5728 = vld [vmem:[%s5724 + $0x18] sm:$0xff]
  %v5729 = vld [vmem:[%s5724 + $0x20] sm:$0xff]
  %v5730 = vld [vmem:[%s5724 + $0x28] sm:$0xff]
  %v5731 = vld [vmem:[%s5724 + $0x30] sm:$0xff]
  %v5732 = vld [vmem:[%s5724 + $0x38] sm:$0xff]
  %v5733 = vld [vmem:[%s5724 + $0x40] sm:$0xff]
  %v5734 = vld [vmem:[%s5724 + $0x48] sm:$0xff]
  %5735 = vxpose.xlu0.b32.start [1/16] %v5676, 128
  %5736 = vxpose.xlu0.b32.cont [2/16] %v5681, 128
  %5737 = vxpose.xlu0.b32.cont [3/16] %v5686, 128
  %5738 = vxpose.xlu0.b32.cont [4/16] %v5691, 128
  %5739 = vxpose.xlu0.b32.cont [5/16] %v5696, 128
  %5740 = vxpose.xlu0.b32.cont [6/16] %v5701, 128
  %5741 = vxpose.xlu0.b32.cont [7/16] %v5706, 128
  %5742 = vxpose.xlu0.b32.cont [8/16] %v5711, 128
  %5743 = vxpose.xlu0.b32.cont [9/16] %v5716, 128
  %5744 = vxpose.xlu0.b32.cont [10/16] %v5721, 128
  %5745 = vxpose.xlu0.b32.cont [11/16] 0.0, 128
  %5746 = vxpose.xlu0.b32.cont [12/16] 0.0, 128
  %5747 = vxpose.xlu0.b32.cont [13/16] 0.0, 128
  %5748 = vxpose.xlu0.b32.cont [14/16] 0.0, 128
  %5749 = vxpose.xlu0.b32.cont [15/16] 0.0, 128
  %5750 = vxpose.xlu0.b32.end [16/16] 0.0, 128
  %v5751 = vpop.trf.xlu0
  %v5752 = vpop.trf.xlu0
  %v5753 = vpop.trf.xlu0
  %v5754 = vpop.trf.xlu0
  %v5755 = vpop.trf.xlu0
  %v5756 = vpop.trf.xlu0
  %v5757 = vpop.trf.xlu0
  %v5758 = vpop.trf.xlu0
  %v5759 = vpop.trf.xlu0
  %v5760 = vpop.trf.xlu0
  %v5761 = vpop.trf.xlu0
  %v5762 = vpop.trf.xlu0
  %v5763 = vpop.trf.xlu0
  %v5764 = vpop.trf.xlu0
  %v5765 = vpop.trf.xlu0
  %v5766 = vpop.trf.xlu0
  %v5768 = vsel %vm4921, %v5751, 0
  %5770 = vmatprep.subr.mxu0 0.0
  %5771 = vmatpush1.msra.mxu0 0.0
  %5772 = vmatprep.subr.mxu0 0.0
  %5773 = vmatpush1.msra.mxu0 0.0
  %5774 = vmatprep.subr.mxu0 0.0
  %5775 = vmatpush1.msra.mxu0 0.0
  %5776 = vmatprep.subr.mxu0 0.0
  %5777 = vmatpush1.msra.mxu0 0.0
  %5778 = vmatprep.subr.mxu0 0.0
  %5779 = vmatpush1.msra.mxu0 0.0
  %5780 = vmatprep.subr.mxu0 0.0
  %5781 = vmatpush1.msra.mxu0 0.0
  %5782 = vmatprep.subr.mxu0 0.0
  %5783 = vmatpush1.msra.mxu0 %v5734
  %5784 = vmatprep.subr.mxu0 0.0
  %5785 = vmatpush1.msra.mxu0 %v5733
  %5786 = vmatprep.subr.mxu0 0.0
  %5787 = vmatpush1.msra.mxu0 %v5732
  %5788 = vmatprep.subr.mxu0 0.0
  %5789 = vmatpush1.msra.mxu0 %v5731
  %5790 = vmatprep.subr.mxu0 0.0
  %5791 = vmatpush1.msra.mxu0 %v5730
  %5792 = vmatprep.subr.mxu0 0.0
  %5793 = vmatpush1.msra.mxu0 %v5729
  %5794 = vmatprep.subr.mxu0 0.0
  %5795 = vmatpush1.msra.mxu0 %v5728
  %5796 = vmatprep.subr.mxu0 0.0
  %5797 = vmatpush1.msra.mxu0 %v5727
  %5798 = vmatprep.subr.mxu0 0.0
  %5799 = vmatpush1.msra.mxu0 %v5726
  %5800 = vmatprep.subr.mxu0 0.0
  %5801 = vmatpush1.msra.mxu0 %v5725
  %5802 = vmatprep.subr.mxu0 0.0
  %5803 = vmatpush2.msra.mxu0 0.0
  %5804 = vmatprep.subr.mxu0 0.0
  %5805 = vmatpush2.msra.mxu0 0.0
  %5806 = vmatprep.subr.mxu0 0.0
  %5807 = vmatpush2.msra.mxu0 0.0
  %5808 = vmatprep.subr.mxu0 0.0
  %5809 = vmatpush2.msra.mxu0 0.0
  %5810 = vmatprep.subr.mxu0 0.0
  %5811 = vmatpush2.msra.mxu0 0.0
  %5812 = vmatprep.subr.mxu0 0.0
  %5813 = vmatpush2.msra.mxu0 0.0
  %5814 = vmatprep.subr.mxu0 0.0
  %5815 = vmatpush2.msra.mxu0 0.0
  %5816 = vmatprep.subr.mxu0 0.0
  %5817 = vmatpush2.msra.mxu0 0.0
  %5818 = vmatprep.subr.mxu0 0.0
  %5819 = vmatpush2.msra.mxu0 0.0
  %5820 = vmatprep.subr.mxu0 0.0
  %5821 = vmatpush2.msra.mxu0 0.0
  %5822 = vmatprep.subr.mxu0 0.0
  %5823 = vmatpush2.msra.mxu0 0.0
  %5824 = vmatprep.subr.mxu0 0.0
  %5825 = vmatpush2.msra.mxu0 0.0
  %5826 = vmatprep.subr.mxu0 0.0
  %5827 = vmatpush2.msra.mxu0 0.0
  %5828 = vmatprep.subr.mxu0 0.0
  %5829 = vmatpush2.msra.mxu0 0.0
  %5830 = vmatprep.subr.mxu0 0.0
  %5831 = vmatpush2.msra.mxu0 0.0
  %5832 = vmatprep.subr.mxu0 0.0
  %5833 = vmatpush2.msra.mxu0 0.0
  %5834 = vmatprep.mubr.f32.mxu0 0.0
  %5835 = vmatmul.mubr.f32.gmra.mxu0 %v5768
  %v5836 = vpop.f32.mrf.mxu0
  %v5837 = vadd.f32 0.0, %v5836
  %v5838 = vpop.f32.mrf.mxu0
  %5839 = vdwg.mxu0
  %v5840 = vadd.f32 %v5593, %v5837
  %v5841 = vld [vmem:[%s10] sm:$0x1]
  %v5843 = vlaneseq
  %v5844 = vshrl.u32 %v5843, 7
  %v5845 = vsub.s32 0, %v5844
  %v5846 = vrot.slane %v5841, %v5845
  %v5848 = vadd.f32 %v5840, %v5846
  %v5849 = vmul.f32 %v5848, 0.5
  %v5850 = vtanh.pop %v5849
  %v5851 = vmul.f32 %v5850, 0.5
  %v5852 = vadd.f32 %v5851, 0.5
  %v5853 = vld [vmem:[%s11] sm:$0xff]
  %v5854 = vld [vmem:[%s11 + $0x8] sm:$0xff]
  %v5855 = vld [vmem:[%s11 + $0x10] sm:$0xff]
  %v5856 = vld [vmem:[%s11 + $0x18] sm:$0xff]
  %v5857 = vld [vmem:[%s11 + $0x20] sm:$0xff]
  %v5858 = vld [vmem:[%s11 + $0x28] sm:$0xff]
  %v5859 = vld [vmem:[%s11 + $0x30] sm:$0xff]
  %v5860 = vld [vmem:[%s11 + $0x38] sm:$0xff]
  %v5861 = vld [vmem:[%s11 + $0x40] sm:$0xff]
  %v5862 = vld [vmem:[%s11 + $0x48] sm:$0xff]
  %v5863 = vld [vmem:[%s11 + $0x50] sm:$0xff]
  %v5864 = vld [vmem:[%s11 + $0x58] sm:$0xff]
  %v5865 = vld [vmem:[%s11 + $0x60] sm:$0xff]
  %v5866 = vld [vmem:[%s11 + $0x68] sm:$0xff]
  %v5867 = vld [vmem:[%s11 + $0x70] sm:$0xff]
  %v5868 = vld [vmem:[%s11 + $0x78] sm:$0xff]
  %v5869 = vld [vmem:[%s12] sm:$0x1]
  %v5871 = vlaneseq
  %v5872 = vshrl.u32 %v5871, 7
  %v5873 = vsub.s32 0, %v5872
  %v5874 = vrot.slane %v5869, %v5873
  %5876 = vmatprep.subr.mxu0 0.0
  %5877 = vmatpush1.msra.mxu0 %v5868
  %5878 = vmatprep.subr.mxu0 0.0
  %5879 = vmatpush1.msra.mxu0 %v5867
  %5880 = vmatprep.subr.mxu0 0.0
  %5881 = vmatpush1.msra.mxu0 %v5866
  %5882 = vmatprep.subr.mxu0 0.0
  %5883 = vmatpush1.msra.mxu0 %v5865
  %5884 = vmatprep.subr.mxu0 0.0
  %5885 = vmatpush1.msra.mxu0 %v5864
  %5886 = vmatprep.subr.mxu0 0.0
  %5887 = vmatpush1.msra.mxu0 %v5863
  %5888 = vmatprep.subr.mxu0 0.0
  %5889 = vmatpush1.msra.mxu0 %v5862
  %5890 = vmatprep.subr.mxu0 0.0
  %5891 = vmatpush1.msra.mxu0 %v5861
  %5892 = vmatprep.subr.mxu0 0.0
  %5893 = vmatpush1.msra.mxu0 %v5860
  %5894 = vmatprep.subr.mxu0 0.0
  %5895 = vmatpush1.msra.mxu0 %v5859
  %5896 = vmatprep.subr.mxu0 0.0
  %5897 = vmatpush1.msra.mxu0 %v5858
  %5898 = vmatprep.subr.mxu0 0.0
  %5899 = vmatpush1.msra.mxu0 %v5857
  %5900 = vmatprep.subr.mxu0 0.0
  %5901 = vmatpush1.msra.mxu0 %v5856
  %5902 = vmatprep.subr.mxu0 0.0
  %5903 = vmatpush1.msra.mxu0 %v5855
  %5904 = vmatprep.subr.mxu0 0.0
  %5905 = vmatpush1.msra.mxu0 %v5854
  %5906 = vmatprep.subr.mxu0 0.0
  %5907 = vmatpush1.msra.mxu0 %v5853
  %5908 = vmatprep.subr.mxu0 0.0
  %5909 = vmatpush2.msra.mxu0 0.0
  %5910 = vmatprep.subr.mxu0 0.0
  %5911 = vmatpush2.msra.mxu0 0.0
  %5912 = vmatprep.subr.mxu0 0.0
  %5913 = vmatpush2.msra.mxu0 0.0
  %5914 = vmatprep.subr.mxu0 0.0
  %5915 = vmatpush2.msra.mxu0 0.0
  %5916 = vmatprep.subr.mxu0 0.0
  %5917 = vmatpush2.msra.mxu0 0.0
  %5918 = vmatprep.subr.mxu0 0.0
  %5919 = vmatpush2.msra.mxu0 0.0
  %5920 = vmatprep.subr.mxu0 0.0
  %5921 = vmatpush2.msra.mxu0 0.0
  %5922 = vmatprep.subr.mxu0 0.0
  %5923 = vmatpush2.msra.mxu0 0.0
  %5924 = vmatprep.subr.mxu0 0.0
  %5925 = vmatpush2.msra.mxu0 0.0
  %5926 = vmatprep.subr.mxu0 0.0
  %5927 = vmatpush2.msra.mxu0 0.0
  %5928 = vmatprep.subr.mxu0 0.0
  %5929 = vmatpush2.msra.mxu0 0.0
  %5930 = vmatprep.subr.mxu0 0.0
  %5931 = vmatpush2.msra.mxu0 0.0
  %5932 = vmatprep.subr.mxu0 0.0
  %5933 = vmatpush2.msra.mxu0 0.0
  %5934 = vmatprep.subr.mxu0 0.0
  %5935 = vmatpush2.msra.mxu0 0.0
  %5936 = vmatprep.subr.mxu0 0.0
  %5937 = vmatpush2.msra.mxu0 0.0
  %5938 = vmatprep.subr.mxu0 0.0
  %5939 = vmatpush2.msra.mxu0 0.0
  %5940 = vmatprep.mubr.f32.mxu0 0.0
  %5941 = vmatmul.mubr.f32.gmra.mxu0 %v5852
  %v5942 = vpop.f32.mrf.mxu0
  %v5943 = vadd.f32 %v5874, %v5942
  %v5944 = vpop.f32.mrf.mxu0
  %5945 = vdwg.mxu0
  %v5946 = vmul.f32 %v5943, 0.5
  %v5947 = vtanh.pop %v5946
  %v5948 = vmul.f32 %v5947, 0.5
  %v5949 = vadd.f32 %v5948, 0.5
  %v5950 = vld [vmem:[%s13] sm:$0xff]
  %v5951 = vld [vmem:[%s13 + $0x8] sm:$0xff]
  %v5952 = vld [vmem:[%s13 + $0x10] sm:$0xff]
  %v5953 = vld [vmem:[%s13 + $0x18] sm:$0xff]
  %v5954 = vld [vmem:[%s13 + $0x20] sm:$0xff]
  %v5955 = vld [vmem:[%s13 + $0x28] sm:$0xff]
  %v5956 = vld [vmem:[%s13 + $0x30] sm:$0xff]
  %v5957 = vld [vmem:[%s13 + $0x38] sm:$0xff]
  %v5958 = vld [vmem:[%s13 + $0x40] sm:$0xff]
  %v5959 = vld [vmem:[%s13 + $0x48] sm:$0xff]
  %v5960 = vld [vmem:[%s13 + $0x50] sm:$0xff]
  %v5961 = vld [vmem:[%s13 + $0x58] sm:$0xff]
  %v5962 = vld [vmem:[%s13 + $0x60] sm:$0xff]
  %v5963 = vld [vmem:[%s13 + $0x68] sm:$0xff]
  %v5964 = vld [vmem:[%s13 + $0x70] sm:$0xff]
  %v5965 = vld [vmem:[%s13 + $0x78] sm:$0xff]
  %v5966 = vld [vmem:[%s14] sm:$0x1]
  %v5968 = vlaneseq
  %v5969 = vshrl.u32 %v5968, 7
  %v5970 = vsub.s32 0, %v5969
  %v5971 = vrot.slane %v5966, %v5970
  %5973 = vmatprep.subr.mxu0 0.0
  %5974 = vmatpush1.msra.mxu0 %v5965
  %5975 = vmatprep.subr.mxu0 0.0
  %5976 = vmatpush1.msra.mxu0 %v5964
  %5977 = vmatprep.subr.mxu0 0.0
  %5978 = vmatpush1.msra.mxu0 %v5963
  %5979 = vmatprep.subr.mxu0 0.0
  %5980 = vmatpush1.msra.mxu0 %v5962
  %5981 = vmatprep.subr.mxu0 0.0
  %5982 = vmatpush1.msra.mxu0 %v5961
  %5983 = vmatprep.subr.mxu0 0.0
  %5984 = vmatpush1.msra.mxu0 %v5960
  %5985 = vmatprep.subr.mxu0 0.0
  %5986 = vmatpush1.msra.mxu0 %v5959
  %5987 = vmatprep.subr.mxu0 0.0
  %5988 = vmatpush1.msra.mxu0 %v5958
  %5989 = vmatprep.subr.mxu0 0.0
  %5990 = vmatpush1.msra.mxu0 %v5957
  %5991 = vmatprep.subr.mxu0 0.0
  %5992 = vmatpush1.msra.mxu0 %v5956
  %5993 = vmatprep.subr.mxu0 0.0
  %5994 = vmatpush1.msra.mxu0 %v5955
  %5995 = vmatprep.subr.mxu0 0.0
  %5996 = vmatpush1.msra.mxu0 %v5954
  %5997 = vmatprep.subr.mxu0 0.0
  %5998 = vmatpush1.msra.mxu0 %v5953
  %5999 = vmatprep.subr.mxu0 0.0
  %6000 = vmatpush1.msra.mxu0 %v5952
  %6001 = vmatprep.subr.mxu0 0.0
  %6002 = vmatpush1.msra.mxu0 %v5951
  %6003 = vmatprep.subr.mxu0 0.0
  %6004 = vmatpush1.msra.mxu0 %v5950
  %6005 = vmatprep.subr.mxu0 0.0
  %6006 = vmatpush2.msra.mxu0 0.0
  %6007 = vmatprep.subr.mxu0 0.0
  %6008 = vmatpush2.msra.mxu0 0.0
  %6009 = vmatprep.subr.mxu0 0.0
  %6010 = vmatpush2.msra.mxu0 0.0
  %6011 = vmatprep.subr.mxu0 0.0
  %6012 = vmatpush2.msra.mxu0 0.0
  %6013 = vmatprep.subr.mxu0 0.0
  %6014 = vmatpush2.msra.mxu0 0.0
  %6015 = vmatprep.subr.mxu0 0.0
  %6016 = vmatpush2.msra.mxu0 0.0
  %6017 = vmatprep.subr.mxu0 0.0
  %6018 = vmatpush2.msra.mxu0 0.0
  %6019 = vmatprep.subr.mxu0 0.0
  %6020 = vmatpush2.msra.mxu0 0.0
  %6021 = vmatprep.subr.mxu0 0.0
  %6022 = vmatpush2.msra.mxu0 0.0
  %6023 = vmatprep.subr.mxu0 0.0
  %6024 = vmatpush2.msra.mxu0 0.0
  %6025 = vmatprep.subr.mxu0 0.0
  %6026 = vmatpush2.msra.mxu0 0.0
  %6027 = vmatprep.subr.mxu0 0.0
  %6028 = vmatpush2.msra.mxu0 0.0
  %6029 = vmatprep.subr.mxu0 0.0
  %6030 = vmatpush2.msra.mxu0 0.0
  %6031 = vmatprep.subr.mxu0 0.0
  %6032 = vmatpush2.msra.mxu0 0.0
  %6033 = vmatprep.subr.mxu0 0.0
  %6034 = vmatpush2.msra.mxu0 0.0
  %6035 = vmatprep.subr.mxu0 0.0
  %6036 = vmatpush2.msra.mxu0 0.0
  %6037 = vmatprep.mubr.f32.mxu0 0.0
  %6038 = vmatmul.mubr.f32.gmra.mxu0 %v5949
  %v6039 = vpop.f32.mrf.mxu0
  %v6040 = vadd.f32 %v5971, %v6039
  %v6041 = vpop.f32.mrf.mxu0
  %6042 = vdwg.mxu0
  %6043 = vst [vmem:[%s15] sm:$0xff] %v6040
  // Predicated region
  $region62: #{lenet_forward.1} parent=0 // pred_check
    _
  $region63: #{lenet_forward.1} parent=0 // pred_check_branch
    %6045 = sbr.rel (0) target = $region65
  $region64: #{lenet_forward.1} parent=0 // pred_region
    _
  $region65: #{lenet_forward.1} parent=0 // pred_fallthru
    _
  // Predicated region
  $region66: #{lenet_forward.1} parent=0 // pred_check
    _
  $region67: #{lenet_forward.1} parent=0 // pred_check_branch
    %6047 = sbr.rel (0) target = $region69
  $region68: #{lenet_forward.1} parent=0 // pred_region
    _
  $region69: #{lenet_forward.1} parent=0 // pred_fallthru
    _

</llo_original>
